<compile_context>
chip_gen: v6e
topology: v6e:2x2x1
jax: 0.10.0
libtpu: 0.0.40
codegen_flags: <defaults>
</compile_context>

<pallas_src>
import jax
import jax.numpy as jnp
from jax import lax
from jax.experimental import pallas as pl
from jax.experimental.pallas import tpu as pltpu


VMEM_LIMIT_BYTES = 32 * 1024 * 1024   # above every gen's scoped default, below physical
CONV1_ROW_TILE_CAP = 512              # v5e / v7x safe cap (v6e could go 1024)
HEAD_ROW_TILE_CAP = 128


def _round_up(x, m):
    return (x + m - 1) // m * m


def _pick_row_tile(m, cap):
    """Row tile: >=2 grid steps when possible (keeps both v7x TensorCores busy
    at small batch), 16-row granule (bf16 sublane packing), capped so the
    double-buffered activation tiles stay inside every gen's scoped VMEM."""
    if m <= 16:
        return max(m, 1)                       # single full-extent block
    tm = min(cap, _round_up(pl.cdiv(m, 2), 16))
    return min(tm, m)


# ---------------------------------------------------------------------------
# Kernel 1: row-tiled GEMM + bias + ReLU  (conv1 as an im2col GEMM)
# ---------------------------------------------------------------------------
def _gemm_bias_relu_kernel(x_ref, w_ref, b_ref, o_ref):
    acc = jnp.dot(x_ref[...], w_ref[...], preferred_element_type=jnp.float32)
    o_ref[...] = jnp.maximum(acc + b_ref[...], 0.0).astype(o_ref.dtype)


def gemm_bias_relu(x, w, b, *, cap=CONV1_ROW_TILE_CAP, out_dtype=jnp.bfloat16):
    """relu(x @ w + b); x:(M,K) bf16, w:(K,N) bf16, b:(1,N) f32. Row-tiled,
    ragged last block (no wrapper pad/slice — rows are independent)."""
    M, K = x.shape
    N = w.shape[1]
    tm = _pick_row_tile(M, cap)
    cost = pl.CostEstimate(
        flops=2 * M * K * N,
        transcendentals=0,
        bytes_accessed=(M * K * x.dtype.itemsize + K * N * w.dtype.itemsize
                        + N * b.dtype.itemsize
                        + M * N * jnp.dtype(out_dtype).itemsize))
    return pl.pallas_call(
        _gemm_bias_relu_kernel,
        out_shape=jax.ShapeDtypeStruct((M, N), out_dtype),
        grid=(pl.cdiv(M, tm),),
        in_specs=[
            pl.BlockSpec((tm, K), lambda i: (i, 0)),   # activations: tiled over rows
            pl.BlockSpec((K, N), lambda i: (0, 0)),    # weights: resident
            pl.BlockSpec((1, N), lambda i: (0, 0)),    # bias: resident
        ],
        out_specs=pl.BlockSpec((tm, N), lambda i: (i, 0)),
        compiler_params=pltpu.CompilerParams(
            dimension_semantics=("parallel",),
            vmem_limit_bytes=VMEM_LIMIT_BYTES),
        cost_estimate=cost,
    )(x, w, b)


# ---------------------------------------------------------------------------
# Kernel 2: fused head = conv2 -> ReLU -> conv3(1x1 out) -> ReLU
#                        -> layer1 -> ReLU -> layer3
# conv3 is computed as a sum of 9 per-window-position (64,64) matmuls so the
# conv2 activations never need an in-kernel reshape or an HBM round trip.
# ---------------------------------------------------------------------------
def _head_kernel(p2_ref, c2w_ref, c2b_ref, c3w_ref, c3b_ref,
                 l1w_ref, l1b_ref, l3w_ref, l3b_ref, o_ref):
    tm = o_ref.shape[0]
    acc3 = jnp.zeros((tm, c3w_ref.shape[-1]), jnp.float32)
    for p in range(p2_ref.shape[0]):           # 9 conv2 / conv3 window positions
        h2 = jnp.dot(p2_ref[p], c2w_ref[...],
                     preferred_element_type=jnp.float32)
        h2 = jnp.maximum(h2 + c2b_ref[...], 0.0)               # relu(conv2) @ pos p
        acc3 = acc3 + jnp.dot(h2, c3w_ref[p],
                              preferred_element_type=jnp.float32)
    h3 = jnp.maximum(acc3 + c3b_ref[...], 0.0)                 # relu(conv3), flatten==channels
    h4 = jnp.dot(h3, l1w_ref[...], preferred_element_type=jnp.float32) + l1b_ref[...]
    h4 = jnp.maximum(h4, 0.0)                                  # relu(layer1)
    q = jnp.dot(h4, l3w_ref[...], preferred_element_type=jnp.float32) + l3b_ref[...]
    o_ref[...] = q.astype(o_ref.dtype)                         # layer3 (no relu)


def fused_head(p2, c2_w, c2_b, c3_w, c3_b, l1_w, l1_b, l3_wp, l3_bp,
               *, cap=HEAD_ROW_TILE_CAP):
    """p2: (9, B, 1024) bf16 conv2 patches, one leading slab per window pos."""
    P, B, K2 = p2.shape
    N2 = c2_w.shape[1]
    H = l1_w.shape[1]
    Np = l3_wp.shape[1]                         # already padded to a multiple of 128
    tm = _pick_row_tile(B, cap)
    flops = 2 * B * P * K2 * N2 + 2 * B * P * N2 * c3_w.shape[-1] \
        + 2 * B * l1_w.shape[0] * H + 2 * B * H * Np
    w_bytes = sum(int(a.size) * a.dtype.itemsize
                  for a in (c2_w, c2_b, c3_w, c3_b, l1_w, l1_b, l3_wp, l3_bp))
    cost = pl.CostEstimate(
        flops=flops, transcendentals=0,
        bytes_accessed=int(p2.size) * p2.dtype.itemsize + w_bytes + B * Np * 4)
    return pl.pallas_call(
        _head_kernel,
        out_shape=jax.ShapeDtypeStruct((B, Np), jnp.float32),
        grid=(pl.cdiv(B, tm),),
        in_specs=[
            pl.BlockSpec((P, tm, K2), lambda i: (0, i, 0)),   # patches: tiled over batch
            pl.BlockSpec(c2_w.shape, lambda i: (0, 0)),
            pl.BlockSpec(c2_b.shape, lambda i: (0, 0)),
            pl.BlockSpec(c3_w.shape, lambda i: (0, 0, 0)),
            pl.BlockSpec(c3_b.shape, lambda i: (0, 0)),
            pl.BlockSpec(l1_w.shape, lambda i: (0, 0)),
            pl.BlockSpec(l1_b.shape, lambda i: (0, 0)),
            pl.BlockSpec(l3_wp.shape, lambda i: (0, 0)),
            pl.BlockSpec(l3_bp.shape, lambda i: (0, 0)),
        ],
        out_specs=pl.BlockSpec((tm, Np), lambda i: (i, 0)),
        compiler_params=pltpu.CompilerParams(
            dimension_semantics=("parallel",),
            vmem_limit_bytes=VMEM_LIMIT_BYTES),
        cost_estimate=cost,
    )(p2, c2_w, c2_b, c3_w, c3_b, l1_w, l1_b, l3_wp, l3_bp)


# ---------------------------------------------------------------------------
# Wrapper-side layout helpers (pure data movement, no FLOPs)
# ---------------------------------------------------------------------------
def prep_kernel_params(p, num_actions):
    """PyTorch-layout params -> GEMM-layout kernel params.
    conv weights are flattened in PyTorch (cin, kh, kw) patch order, which is
    exactly the feature order produced by lax.conv_general_dilated_patches."""
    c1, c2, c3 = p["conv1_w"], p["conv2_w"], p["conv3_w"]
    n_pad = _round_up(max(num_actions, 1), 128)          # lane-dense final store
    l3_w = jnp.transpose(p["l3_w"])                      # (hidden, num_actions)
    return {
        "c1_w": c1.reshape(c1.shape[0], -1).T.astype(jnp.bfloat16),   # (2048, 64)
        "c1_b": p["conv1_b"].reshape(1, -1),
        "c2_w": c2.reshape(c2.shape[0], -1).T.astype(jnp.bfloat16),   # (1024, 64)
        "c2_b": p["conv2_b"].reshape(1, -1),
        # conv3 on a 1x1 output map: one (Cin, Cout) matmul per window position.
        "c3_w": jnp.transpose(c3, (2, 3, 1, 0)).reshape(
            c3.shape[2] * c3.shape[3], c3.shape[1], c3.shape[0]),      # (9, 64, 64)
        "c3_b": p["conv3_b"].reshape(1, -1),
        "l1_w": jnp.transpose(p["l1_w"]),
        "l1_b": p["l1_b"].reshape(1, -1),
        "l3_w": jnp.pad(l3_w, ((0, 0), (0, n_pad - num_actions))),
        "l3_b": jnp.pad(p["l3_b"], (0, n_pad - num_actions)).reshape(1, n_pad),
    }


def cnn_dqn_forward(x, kp, num_actions):
    """x: (B, 32, H, W) float32 (NCHW, like PyTorch)."""
    B = x.shape[0]
    xb = x.astype(jnp.bfloat16)                 # bf16 patches: halve im2col HBM bytes

    # conv1 (8x8, stride 4) as an im2col GEMM.  Patch extraction is one fused
    # XLA op; it also folds in the NCHW->NHWC transpose.  Feature order is
    # PyTorch's (c, kh, kw).
    p1 = lax.conv_general_dilated_patches(
        xb, (8, 8), (4, 4), "VALID",
        dimension_numbers=("NCHW", "OIHW", "NHWC"))       # (B, H1, W1, 2048) bf16
    _, H1, W1, K1 = p1.shape
    y1 = gemm_bias_relu(p1.reshape(B * H1 * W1, K1), kp["c1_w"], kp["c1_b"])
    y1 = y1.reshape(B, H1, W1, -1)                        # NHWC, bf16

    # conv2 patches (4x4, stride 2).
    p2 = lax.conv_general_dilated_patches(
        y1, (4, 4), (2, 2), "VALID",
        dimension_numbers=("NHWC", "HWIO", "NHWC"))       # (B, H2, W2, 1024) bf16
    _, H2, W2, K2 = p2.shape

    # conv3 (3x3, stride 1) must reduce the conv2 map to 1x1 for this config,
    # so its single window covers all 9 conv2 output positions and the PyTorch
    # flatten equals the conv3 channels.
    assert H2 == 3 and W2 == 3, "fused head requires a 1x1 conv3 output map"
    # TODO(synk): for configs where conv3's output is larger than 1x1, run
    # conv2/conv3 through gemm_bias_relu and match PyTorch's channel-major flatten.
    p2 = jnp.transpose(p2.reshape(B, H2 * W2, K2), (1, 0, 2))   # (9, B, 1024)

    q = fused_head(p2, kp["c2_w"], kp["c2_b"], kp["c3_w"], kp["c3_b"],
                   kp["l1_w"], kp["l1_b"], kp["l3_w"], kp["l3_b"])
    return q[:, :num_actions]


# ---------------------------------------------------------------------------
# Deterministic synthetic parameters + pure-JAX reference
# ---------------------------------------------------------------------------
def init_params(key, num_hidden_units, num_actions):
    """PyTorch-layout params: conv (Cout,Cin,KH,KW), linear (out,in)."""
    specs = {
        "conv1_w": (64, 32, 8, 8), "conv1_b": (64,),
        "conv2_w": (64, 64, 4, 2 + 2), "conv2_b": (64,),
        "conv3_w": (64, 64, 3, 3), "conv3_b": (64,),
        "l1_w": (num_hidden_units, num_hidden_units), "l1_b": (num_hidden_units,),
        "l3_w": (num_actions, num_hidden_units), "l3_b": (num_actions,),
    }
    specs["conv2_w"] = (64, 64, 4, 4)
    params = {}
    keys = jax.random.split(key, len(specs))
    for k, (name, shape) in zip(keys, sorted(specs.items())):
        if name.endswith("_b"):
            scale = 0.01
        else:
            fan_in = 1
            for d in shape[1:]:
                fan_in *= d
            scale = 1.0 / float(fan_in) ** 0.5
        params[name] = (scale * jax.random.normal(k, shape)).astype(jnp.float32)
    return params


def reference_forward(x, p):
    """Pure-JAX/XLA reference mirroring the PyTorch forward exactly (f32)."""
    dn = ("NCHW", "OIHW", "NCHW")
    with jax.default_matmul_precision("float32"):
        h = lax.conv_general_dilated(x, p["conv1_w"], (4, 4), "VALID",
                                     dimension_numbers=dn)
        h = jax.nn.relu(h + p["conv1_b"][None, :, None, None])
        h = lax.conv_general_dilated(h, p["conv2_w"], (2, 2), "VALID",
                                     dimension_numbers=dn)
        h = jax.nn.relu(h + p["conv2_b"][None, :, None, None])
        h = lax.conv_general_dilated(h, p["conv3_w"], (1, 1), "VALID",
                                     dimension_numbers=dn)
        h = jax.nn.relu(h + p["conv3_b"][None, :, None, None])
        h = h.reshape(h.shape[0], -1)                 # torch.flatten(x, 1)
        h = jax.nn.relu(h @ p["l1_w"].T + p["l1_b"])  # layer1 + ReLU
        return h @ p["l3_w"].T + p["l3_b"]            # layer3 (layer2 unused)


if __name__ == "__main__":
    batch = 2
    in_channels = 32        # fixed by the module: Conv2d(32, 64, 8, 4)
    spatial = 36            # 36 -> 8 -> 3 -> 1, so flatten = 64*1*1
    num_hidden_units = 64   # must equal the conv-stack flatten size
    num_actions = 4

    key = jax.random.PRNGKey(0)
    kx, kp = jax.random.split(key)
    x = jax.random.normal(kx, (batch, in_channels, spatial, spatial), dtype=jnp.float32)
    params = init_params(kp, num_hidden_units, num_actions)
    kernel_params = prep_kernel_params(params, num_actions)

    fwd = jax.jit(lambda inp: cnn_dqn_forward(inp, kernel_params, num_actions))
    q = jax.block_until_ready(fwd(x))

    q_ref = reference_forward(x, params)
    assert q.shape == (batch, num_actions)
    # bf16 operands on the conv1/conv2 GEMMs (f32 accumulation) vs the all-f32
    # XLA conv reference: tolerance loosened accordingly (review-sanctioned).
    assert jnp.allclose(q, q_ref, atol=3e-2, rtol=3e-2), (
        float(jnp.max(jnp.abs(q - q_ref))))

    print("KERNEL_OK")
</pallas_src>

<mosaic_0001>
module attributes {stable_mosaic.version = 11 : i64} {
  func.func @_gemm_bias_relu_kernel(%arg0: i32, %arg1: memref<64x2048xbf16, #tpu.memory_space<vmem>>, %arg2: memref<2048x64xbf16, #tpu.memory_space<vmem>>, %arg3: memref<1x64xf32, #tpu.memory_space<vmem>>, %arg4: memref<64x64xbf16, #tpu.memory_space<vmem>>) attributes {dimension_semantics = [#tpu.dimension_semantics<parallel>], iteration_bounds = array<i64: 2>, scalar_prefetch = 0 : i64, scratch_operands = 0 : i64, tpu.core_type = #tpu.core_type<tc>, window_params = [{transform_indices = @transform_0, window_bounds = array<i64: 64, 2048>}, {pipeline_mode = #tpu.pipeline_mode<synchronous>, transform_indices = @transform_1, window_bounds = array<i64: 2048, 64>}, {pipeline_mode = #tpu.pipeline_mode<synchronous>, transform_indices = @transform_2, window_bounds = array<i64: 1, 64>}, {transform_indices = @transform_3, window_bounds = array<i64: 64, 64>}]} {
    %c0 = arith.constant 0 : index
    %c0_0 = arith.constant 0 : index
    %0 = vector.load %arg1[%c0, %c0_0] : memref<64x2048xbf16, #tpu.memory_space<vmem>>, vector<64x2048xbf16>
    %c0_1 = arith.constant 0 : index
    %c0_2 = arith.constant 0 : index
    %1 = vector.load %arg2[%c0_1, %c0_2] : memref<2048x64xbf16, #tpu.memory_space<vmem>>, vector<2048x64xbf16>
    %cst = arith.constant dense<0.000000e+00> : vector<64x64xf32>
    %2 = tpu.matmul %0, %1, %cst {dimension_numbers = #tpu.dot_dimension_numbers<[1], [0], [0], [1], [0, 0, 1, 1], [], []>} : vector<64x2048xbf16>, vector<2048x64xbf16>, vector<64x64xf32> -> vector<64x64xf32>
    %c0_3 = arith.constant 0 : index
    %c0_4 = arith.constant 0 : index
    %3 = vector.load %arg3[%c0_3, %c0_4] : memref<1x64xf32, #tpu.memory_space<vmem>>, vector<1x64xf32>
    %4 = vector.broadcast %3 : vector<1x64xf32> to vector<64x64xf32>
    %5 = arith.addf %2, %4 : vector<64x64xf32>
    %cst_5 = arith.constant 0.000000e+00 : f32
    %6 = vector.broadcast %cst_5 : f32 to vector<64x64xf32>
    %7 = arith.maximumf %5, %6 : vector<64x64xf32>
    %8 = arith.truncf %7 : vector<64x64xf32> to vector<64x64xbf16>
    %c0_6 = arith.constant 0 : index
    %c0_7 = arith.constant 0 : index
    %9 = vector.load %arg4[%c0_6, %c0_7] : memref<64x64xbf16, #tpu.memory_space<vmem>>, vector<64x64xbf16>
    tpu.vector_store %arg4[%c0_6, %c0_7], %8 {strides = array<i32>} : memref<64x64xbf16, #tpu.memory_space<vmem>>, vector<64x64xbf16>,
    return
  }
  func.func @transform_0(%arg0: i32) -> (i32, i32) {
    %c0_i32 = arith.constant 0 : i32
    %c0_i32_0 = arith.constant 0 : i32
    return %arg0, %c0_i32 : i32, i32
  }
  func.func @transform_1(%arg0: i32) -> (i32, i32) {
    %c0_i32 = arith.constant 0 : i32
    %c0_i32_0 = arith.constant 0 : i32
    %c0_i32_1 = arith.constant 0 : i32
    return %c0_i32, %c0_i32_0 : i32, i32
  }
  func.func @transform_2(%arg0: i32) -> (i32, i32) {
    %c0_i32 = arith.constant 0 : i32
    %c0_i32_0 = arith.constant 0 : i32
    %c0_i32_1 = arith.constant 0 : i32
    return %c0_i32, %c0_i32_0 : i32, i32
  }
  func.func @transform_3(%arg0: i32) -> (i32, i32) {
    %c0_i32 = arith.constant 0 : i32
    %c0_i32_0 = arith.constant 0 : i32
    return %arg0, %c0_i32 : i32, i32
  }
}

module attributes {stable_mosaic.version = 11 : i64} {
  func.func @_head_kernel(%arg0: i32, %arg1: memref<9x2x1024xbf16, #tpu.memory_space<vmem>>, %arg2: memref<1024x64xbf16, #tpu.memory_space<vmem>>, %arg3: memref<1x64xf32, #tpu.memory_space<vmem>>, %arg4: memref<9x64x64xf32, #tpu.memory_space<vmem>>, %arg5: memref<1x64xf32, #tpu.memory_space<vmem>>, %arg6: memref<64x64xf32, #tpu.memory_space<vmem>>, %arg7: memref<1x64xf32, #tpu.memory_space<vmem>>, %arg8: memref<64x128xf32, #tpu.memory_space<vmem>>, %arg9: memref<1x128xf32, #tpu.memory_space<vmem>>, %arg10: memref<2x128xf32, #tpu.memory_space<vmem>>) attributes {dimension_semantics = [#tpu.dimension_semantics<parallel>], iteration_bounds = array<i64: 1>, scalar_prefetch = 0 : i64, scratch_operands = 0 : i64, tpu.core_type = #tpu.core_type<tc>, window_params = [{transform_indices = @transform_0, window_bounds = array<i64: 9, 2, 1024>}, {pipeline_mode = #tpu.pipeline_mode<synchronous>, transform_indices = @transform_1, window_bounds = array<i64: 1024, 64>}, {pipeline_mode = #tpu.pipeline_mode<synchronous>, transform_indices = @transform_2, window_bounds = array<i64: 1, 64>}, {pipeline_mode = #tpu.pipeline_mode<synchronous>, transform_indices = @transform_3, window_bounds = array<i64: 9, 64, 64>}, {pipeline_mode = #tpu.pipeline_mode<synchronous>, transform_indices = @transform_4, window_bounds = array<i64: 1, 64>}, {pipeline_mode = #tpu.pipeline_mode<synchronous>, transform_indices = @transform_5, window_bounds = array<i64: 64, 64>}, {pipeline_mode = #tpu.pipeline_mode<synchronous>, transform_indices = @transform_6, window_bounds = array<i64: 1, 64>}, {pipeline_mode = #tpu.pipeline_mode<synchronous>, transform_indices = @transform_7, window_bounds = array<i64: 64, 128>}, {pipeline_mode = #tpu.pipeline_mode<synchronous>, transform_indices = @transform_8, window_bounds = array<i64: 1, 128>}, {transform_indices = @transform_9, window_bounds = array<i64: 2, 128>}]} {
    %cst = arith.constant 0.000000e+00 : f32
    %0 = vector.broadcast %cst : f32 to vector<2x64xf32>
    %c0 = arith.constant 0 : index
    %c0_0 = arith.constant 0 : index
    %c0_1 = arith.constant 0 : index
    %1 = vector.load %arg1[%c0, %c0_0, %c0_1] : memref<9x2x1024xbf16, #tpu.memory_space<vmem>>, vector<1x2x1024xbf16>
    %2 = vector.shape_cast %1 : vector<1x2x1024xbf16> to vector<2x1024xbf16>
    %c0_2 = arith.constant 0 : index
    %c0_3 = arith.constant 0 : index
    %3 = vector.load %arg2[%c0_2, %c0_3] : memref<1024x64xbf16, #tpu.memory_space<vmem>>, vector<1024x64xbf16>
    %cst_4 = arith.constant dense<0.000000e+00> : vector<2x64xf32>
    %4 = tpu.matmul %2, %3, %cst_4 {dimension_numbers = #tpu.dot_dimension_numbers<[1], [0], [0], [1], [0, 0, 1, 1], [], []>} : vector<2x1024xbf16>, vector<1024x64xbf16>, vector<2x64xf32> -> vector<2x64xf32>
    %c0_5 = arith.constant 0 : index
    %c0_6 = arith.constant 0 : index
    %5 = vector.load %arg3[%c0_5, %c0_6] : memref<1x64xf32, #tpu.memory_space<vmem>>, vector<1x64xf32>
    %6 = vector.broadcast %5 : vector<1x64xf32> to vector<2x64xf32>
    %7 = arith.addf %4, %6 : vector<2x64xf32>
    %cst_7 = arith.constant 0.000000e+00 : f32
    %8 = vector.broadcast %cst_7 : f32 to vector<2x64xf32>
    %9 = arith.maximumf %7, %8 : vector<2x64xf32>
    %c0_8 = arith.constant 0 : index
    %c0_9 = arith.constant 0 : index
    %c0_10 = arith.constant 0 : index
    %10 = vector.load %arg4[%c0_8, %c0_9, %c0_10] : memref<9x64x64xf32, #tpu.memory_space<vmem>>, vector<1x64x64xf32>
    %11 = vector.shape_cast %10 : vector<1x64x64xf32> to vector<64x64xf32>
    %cst_11 = arith.constant dense<0.000000e+00> : vector<2x64xf32>
    %12 = tpu.matmul %9, %11, %cst_11 {dimension_numbers = #tpu.dot_dimension_numbers<[1], [0], [0], [1], [0, 0, 1, 1], [], []>} : vector<2x64xf32>, vector<64x64xf32>, vector<2x64xf32> -> vector<2x64xf32>
    %13 = arith.addf %0, %12 : vector<2x64xf32>
    %c1 = arith.constant 1 : index
    %c0_12 = arith.constant 0 : index
    %c0_13 = arith.constant 0 : index
    %14 = vector.load %arg1[%c1, %c0_12, %c0_13] : memref<9x2x1024xbf16, #tpu.memory_space<vmem>>, vector<1x2x1024xbf16>
    %15 = vector.shape_cast %14 : vector<1x2x1024xbf16> to vector<2x1024xbf16>
    %c0_14 = arith.constant 0 : index
    %c0_15 = arith.constant 0 : index
    %16 = vector.load %arg2[%c0_14, %c0_15] : memref<1024x64xbf16, #tpu.memory_space<vmem>>, vector<1024x64xbf16>
    %cst_16 = arith.constant dense<0.000000e+00> : vector<2x64xf32>
    %17 = tpu.matmul %15, %16, %cst_16 {dimension_numbers = #tpu.dot_dimension_numbers<[1], [0], [0], [1], [0, 0, 1, 1], [], []>} : vector<2x1024xbf16>, vector<1024x64xbf16>, vector<2x64xf32> -> vector<2x64xf32>
    %c0_17 = arith.constant 0 : index
    %c0_18 = arith.constant 0 : index
    %18 = vector.load %arg3[%c0_17, %c0_18] : memref<1x64xf32, #tpu.memory_space<vmem>>, vector<1x64xf32>
    %19 = vector.broadcast %18 : vector<1x64xf32> to vector<2x64xf32>
    %20 = arith.addf %17, %19 : vector<2x64xf32>
    %cst_19 = arith.constant 0.000000e+00 : f32
    %21 = vector.broadcast %cst_19 : f32 to vector<2x64xf32>
    %22 = arith.maximumf %20, %21 : vector<2x64xf32>
    %c1_20 = arith.constant 1 : index
    %c0_21 = arith.constant 0 : index
    %c0_22 = arith.constant 0 : index
    %23 = vector.load %arg4[%c1_20, %c0_21, %c0_22] : memref<9x64x64xf32, #tpu.memory_space<vmem>>, vector<1x64x64xf32>
    %24 = vector.shape_cast %23 : vector<1x64x64xf32> to vector<64x64xf32>
    %cst_23 = arith.constant dense<0.000000e+00> : vector<2x64xf32>
    %25 = tpu.matmul %22, %24, %cst_23 {dimension_numbers = #tpu.dot_dimension_numbers<[1], [0], [0], [1], [0, 0, 1, 1], [], []>} : vector<2x64xf32>, vector<64x64xf32>, vector<2x64xf32> -> vector<2x64xf32>
    %26 = arith.addf %13, %25 : vector<2x64xf32>
    %c2 = arith.constant 2 : index
    %c0_24 = arith.constant 0 : index
    %c0_25 = arith.constant 0 : index
    %27 = vector.load %arg1[%c2, %c0_24, %c0_25] : memref<9x2x1024xbf16, #tpu.memory_space<vmem>>, vector<1x2x1024xbf16>
    %28 = vector.shape_cast %27 : vector<1x2x1024xbf16> to vector<2x1024xbf16>
    %c0_26 = arith.constant 0 : index
    %c0_27 = arith.constant 0 : index
    %29 = vector.load %arg2[%c0_26, %c0_27] : memref<1024x64xbf16, #tpu.memory_space<vmem>>, vector<1024x64xbf16>
    %cst_28 = arith.constant dense<0.000000e+00> : vector<2x64xf32>
    %30 = tpu.matmul %28, %29, %cst_28 {dimension_numbers = #tpu.dot_dimension_numbers<[1], [0], [0], [1], [0, 0, 1, 1], [], []>} : vector<2x1024xbf16>, vector<1024x64xbf16>, vector<2x64xf32> -> vector<2x64xf32>
    %c0_29 = arith.constant 0 : index
    %c0_30 = arith.constant 0 : index
    %31 = vector.load %arg3[%c0_29, %c0_30] : memref<1x64xf32, #tpu.memory_space<vmem>>, vector<1x64xf32>
    %32 = vector.broadcast %31 : vector<1x64xf32> to vector<2x64xf32>
    %33 = arith.addf %30, %32 : vector<2x64xf32>
    %cst_31 = arith.constant 0.000000e+00 : f32
    %34 = vector.broadcast %cst_31 : f32 to vector<2x64xf32>
    %35 = arith.maximumf %33, %34 : vector<2x64xf32>
    %c2_32 = arith.constant 2 : index
    %c0_33 = arith.constant 0 : index
    %c0_34 = arith.constant 0 : index
    %36 = vector.load %arg4[%c2_32, %c0_33, %c0_34] : memref<9x64x64xf32, #tpu.memory_space<vmem>>, vector<1x64x64xf32>
    %37 = vector.shape_cast %36 : vector<1x64x64xf32> to vector<64x64xf32>
    %cst_35 = arith.constant dense<0.000000e+00> : vector<2x64xf32>
    %38 = tpu.matmul %35, %37, %cst_35 {dimension_numbers = #tpu.dot_dimension_numbers<[1], [0], [0], [1], [0, 0, 1, 1], [], []>} : vector<2x64xf32>, vector<64x64xf32>, vector<2x64xf32> -> vector<2x64xf32>
    %39 = arith.addf %26, %38 : vector<2x64xf32>
    %c3 = arith.constant 3 : index
    %c0_36 = arith.constant 0 : index
    %c0_37 = arith.constant 0 : index
    %40 = vector.load %arg1[%c3, %c0_36, %c0_37] : memref<9x2x1024xbf16, #tpu.memory_space<vmem>>, vector<1x2x1024xbf16>
    %41 = vector.shape_cast %40 : vector<1x2x1024xbf16> to vector<2x1024xbf16>
    %c0_38 = arith.constant 0 : index
    %c0_39 = arith.constant 0 : index
    %42 = vector.load %arg2[%c0_38, %c0_39] : memref<1024x64xbf16, #tpu.memory_space<vmem>>, vector<1024x64xbf16>
    %cst_40 = arith.constant dense<0.000000e+00> : vector<2x64xf32>
    %43 = tpu.matmul %41, %42, %cst_40 {dimension_numbers = #tpu.dot_dimension_numbers<[1], [0], [0], [1], [0, 0, 1, 1], [], []>} : vector<2x1024xbf16>, vector<1024x64xbf16>, vector<2x64xf32> -> vector<2x64xf32>
    %c0_41 = arith.constant 0 : index
    %c0_42 = arith.constant 0 : index
    %44 = vector.load %arg3[%c0_41, %c0_42] : memref<1x64xf32, #tpu.memory_space<vmem>>, vector<1x64xf32>
    %45 = vector.broadcast %44 : vector<1x64xf32> to vector<2x64xf32>
    %46 = arith.addf %43, %45 : vector<2x64xf32>
    %cst_43 = arith.constant 0.000000e+00 : f32
    %47 = vector.broadcast %cst_43 : f32 to vector<2x64xf32>
    %48 = arith.maximumf %46, %47 : vector<2x64xf32>
    %c3_44 = arith.constant 3 : index
    %c0_45 = arith.constant 0 : index
    %c0_46 = arith.constant 0 : index
    %49 = vector.load %arg4[%c3_44, %c0_45, %c0_46] : memref<9x64x64xf32, #tpu.memory_space<vmem>>, vector<1x64x64xf32>
    %50 = vector.shape_cast %49 : vector<1x64x64xf32> to vector<64x64xf32>
    %cst_47 = arith.constant dense<0.000000e+00> : vector<2x64xf32>
    %51 = tpu.matmul %48, %50, %cst_47 {dimension_numbers = #tpu.dot_dimension_numbers<[1], [0], [0], [1], [0, 0, 1, 1], [], []>} : vector<2x64xf32>, vector<64x64xf32>, vector<2x64xf32> -> vector<2x64xf32>
    %52 = arith.addf %39, %51 : vector<2x64xf32>
    %c4 = arith.constant 4 : index
    %c0_48 = arith.constant 0 : index
    %c0_49 = arith.constant 0 : index
    %53 = vector.load %arg1[%c4, %c0_48, %c0_49] : memref<9x2x1024xbf16, #tpu.memory_space<vmem>>, vector<1x2x1024xbf16>
    %54 = vector.shape_cast %53 : vector<1x2x1024xbf16> to vector<2x1024xbf16>
    %c0_50 = arith.constant 0 : index
    %c0_51 = arith.constant 0 : index
    %55 = vector.load %arg2[%c0_50, %c0_51] : memref<1024x64xbf16, #tpu.memory_space<vmem>>, vector<1024x64xbf16>
    %cst_52 = arith.constant dense<0.000000e+00> : vector<2x64xf32>
    %56 = tpu.matmul %54, %55, %cst_52 {dimension_numbers = #tpu.dot_dimension_numbers<[1], [0], [0], [1], [0, 0, 1, 1], [], []>} : vector<2x1024xbf16>, vector<1024x64xbf16>, vector<2x64xf32> -> vector<2x64xf32>
    %c0_53 = arith.constant 0 : index
    %c0_54 = arith.constant 0 : index
    %57 = vector.load %arg3[%c0_53, %c0_54] : memref<1x64xf32, #tpu.memory_space<vmem>>, vector<1x64xf32>
    %58 = vector.broadcast %57 : vector<1x64xf32> to vector<2x64xf32>
    %59 = arith.addf %56, %58 : vector<2x64xf32>
    %cst_55 = arith.constant 0.000000e+00 : f32
    %60 = vector.broadcast %cst_55 : f32 to vector<2x64xf32>
    %61 = arith.maximumf %59, %60 : vector<2x64xf32>
    %c4_56 = arith.constant 4 : index
    %c0_57 = arith.constant 0 : index
    %c0_58 = arith.constant 0 : index
    %62 = vector.load %arg4[%c4_56, %c0_57, %c0_58] : memref<9x64x64xf32, #tpu.memory_space<vmem>>, vector<1x64x64xf32>
    %63 = vector.shape_cast %62 : vector<1x64x64xf32> to vector<64x64xf32>
    %cst_59 = arith.constant dense<0.000000e+00> : vector<2x64xf32>
    %64 = tpu.matmul %61, %63, %cst_59 {dimension_numbers = #tpu.dot_dimension_numbers<[1], [0], [0], [1], [0, 0, 1, 1], [], []>} : vector<2x64xf32>, vector<64x64xf32>, vector<2x64xf32> -> vector<2x64xf32>
    %65 = arith.addf %52, %64 : vector<2x64xf32>
    %c5 = arith.constant 5 : index
    %c0_60 = arith.constant 0 : index
    %c0_61 = arith.constant 0 : index
    %66 = vector.load %arg1[%c5, %c0_60, %c0_61] : memref<9x2x1024xbf16, #tpu.memory_space<vmem>>, vector<1x2x1024xbf16>
    %67 = vector.shape_cast %66 : vector<1x2x1024xbf16> to vector<2x1024xbf16>
    %c0_62 = arith.constant 0 : index
    %c0_63 = arith.constant 0 : index
    %68 = vector.load %arg2[%c0_62, %c0_63] : memref<1024x64xbf16, #tpu.memory_space<vmem>>, vector<1024x64xbf16>
    %cst_64 = arith.constant dense<0.000000e+00> : vector<2x64xf32>
    %69 = tpu.matmul %67, %68, %cst_64 {dimension_numbers = #tpu.dot_dimension_numbers<[1], [0], [0], [1], [0, 0, 1, 1], [], []>} : vector<2x1024xbf16>, vector<1024x64xbf16>, vector<2x64xf32> -> vector<2x64xf32>
    %c0_65 = arith.constant 0 : index
    %c0_66 = arith.constant 0 : index
    %70 = vector.load %arg3[%c0_65, %c0_66] : memref<1x64xf32, #tpu.memory_space<vmem>>, vector<1x64xf32>
    %71 = vector.broadcast %70 : vector<1x64xf32> to vector<2x64xf32>
    %72 = arith.addf %69, %71 : vector<2x64xf32>
    %cst_67 = arith.constant 0.000000e+00 : f32
    %73 = vector.broadcast %cst_67 : f32 to vector<2x64xf32>
    %74 = arith.maximumf %72, %73 : vector<2x64xf32>
    %c5_68 = arith.constant 5 : index
    %c0_69 = arith.constant 0 : index
    %c0_70 = arith.constant 0 : index
    %75 = vector.load %arg4[%c5_68, %c0_69, %c0_70] : memref<9x64x64xf32, #tpu.memory_space<vmem>>, vector<1x64x64xf32>
    %76 = vector.shape_cast %75 : vector<1x64x64xf32> to vector<64x64xf32>
    %cst_71 = arith.constant dense<0.000000e+00> : vector<2x64xf32>
    %77 = tpu.matmul %74, %76, %cst_71 {dimension_numbers = #tpu.dot_dimension_numbers<[1], [0], [0], [1], [0, 0, 1, 1], [], []>} : vector<2x64xf32>, vector<64x64xf32>, vector<2x64xf32> -> vector<2x64xf32>
    %78 = arith.addf %65, %77 : vector<2x64xf32>
    %c6 = arith.constant 6 : index
    %c0_72 = arith.constant 0 : index
    %c0_73 = arith.constant 0 : index
    %79 = vector.load %arg1[%c6, %c0_72, %c0_73] : memref<9x2x1024xbf16, #tpu.memory_space<vmem>>, vector<1x2x1024xbf16>
    %80 = vector.shape_cast %79 : vector<1x2x1024xbf16> to vector<2x1024xbf16>
    %c0_74 = arith.constant 0 : index
    %c0_75 = arith.constant 0 : index
    %81 = vector.load %arg2[%c0_74, %c0_75] : memref<1024x64xbf16, #tpu.memory_space<vmem>>, vector<1024x64xbf16>
    %cst_76 = arith.constant dense<0.000000e+00> : vector<2x64xf32>
    %82 = tpu.matmul %80, %81, %cst_76 {dimension_numbers = #tpu.dot_dimension_numbers<[1], [0], [0], [1], [0, 0, 1, 1], [], []>} : vector<2x1024xbf16>, vector<1024x64xbf16>, vector<2x64xf32> -> vector<2x64xf32>
    %c0_77 = arith.constant 0 : index
    %c0_78 = arith.constant 0 : index
    %83 = vector.load %arg3[%c0_77, %c0_78] : memref<1x64xf32, #tpu.memory_space<vmem>>, vector<1x64xf32>
    %84 = vector.broadcast %83 : vector<1x64xf32> to vector<2x64xf32>
    %85 = arith.addf %82, %84 : vector<2x64xf32>
    %cst_79 = arith.constant 0.000000e+00 : f32
    %86 = vector.broadcast %cst_79 : f32 to vector<2x64xf32>
    %87 = arith.maximumf %85, %86 : vector<2x64xf32>
    %c6_80 = arith.constant 6 : index
    %c0_81 = arith.constant 0 : index
    %c0_82 = arith.constant 0 : index
    %88 = vector.load %arg4[%c6_80, %c0_81, %c0_82] : memref<9x64x64xf32, #tpu.memory_space<vmem>>, vector<1x64x64xf32>
    %89 = vector.shape_cast %88 : vector<1x64x64xf32> to vector<64x64xf32>
    %cst_83 = arith.constant dense<0.000000e+00> : vector<2x64xf32>
    %90 = tpu.matmul %87, %89, %cst_83 {dimension_numbers = #tpu.dot_dimension_numbers<[1], [0], [0], [1], [0, 0, 1, 1], [], []>} : vector<2x64xf32>, vector<64x64xf32>, vector<2x64xf32> -> vector<2x64xf32>
    %91 = arith.addf %78, %90 : vector<2x64xf32>
    %c7 = arith.constant 7 : index
    %c0_84 = arith.constant 0 : index
    %c0_85 = arith.constant 0 : index
    %92 = vector.load %arg1[%c7, %c0_84, %c0_85] : memref<9x2x1024xbf16, #tpu.memory_space<vmem>>, vector<1x2x1024xbf16>
    %93 = vector.shape_cast %92 : vector<1x2x1024xbf16> to vector<2x1024xbf16>
    %c0_86 = arith.constant 0 : index
    %c0_87 = arith.constant 0 : index
    %94 = vector.load %arg2[%c0_86, %c0_87] : memref<1024x64xbf16, #tpu.memory_space<vmem>>, vector<1024x64xbf16>
    %cst_88 = arith.constant dense<0.000000e+00> : vector<2x64xf32>
    %95 = tpu.matmul %93, %94, %cst_88 {dimension_numbers = #tpu.dot_dimension_numbers<[1], [0], [0], [1], [0, 0, 1, 1], [], []>} : vector<2x1024xbf16>, vector<1024x64xbf16>, vector<2x64xf32> -> vector<2x64xf32>
    %c0_89 = arith.constant 0 : index
    %c0_90 = arith.constant 0 : index
    %96 = vector.load %arg3[%c0_89, %c0_90] : memref<1x64xf32, #tpu.memory_space<vmem>>, vector<1x64xf32>
    %97 = vector.broadcast %96 : vector<1x64xf32> to vector<2x64xf32>
    %98 = arith.addf %95, %97 : vector<2x64xf32>
    %cst_91 = arith.constant 0.000000e+00 : f32
    %99 = vector.broadcast %cst_91 : f32 to vector<2x64xf32>
    %100 = arith.maximumf %98, %99 : vector<2x64xf32>
    %c7_92 = arith.constant 7 : index
    %c0_93 = arith.constant 0 : index
    %c0_94 = arith.constant 0 : index
    %101 = vector.load %arg4[%c7_92, %c0_93, %c0_94] : memref<9x64x64xf32, #tpu.memory_space<vmem>>, vector<1x64x64xf32>
    %102 = vector.shape_cast %101 : vector<1x64x64xf32> to vector<64x64xf32>
    %cst_95 = arith.constant dense<0.000000e+00> : vector<2x64xf32>
    %103 = tpu.matmul %100, %102, %cst_95 {dimension_numbers = #tpu.dot_dimension_numbers<[1], [0], [0], [1], [0, 0, 1, 1], [], []>} : vector<2x64xf32>, vector<64x64xf32>, vector<2x64xf32> -> vector<2x64xf32>
    %104 = arith.addf %91, %103 : vector<2x64xf32>
    %c8 = arith.constant 8 : index
    %c0_96 = arith.constant 0 : index
    %c0_97 = arith.constant 0 : index
    %105 = vector.load %arg1[%c8, %c0_96, %c0_97] : memref<9x2x1024xbf16, #tpu.memory_space<vmem>>, vector<1x2x1024xbf16>
    %106 = vector.shape_cast %105 : vector<1x2x1024xbf16> to vector<2x1024xbf16>
    %c0_98 = arith.constant 0 : index
    %c0_99 = arith.constant 0 : index
    %107 = vector.load %arg2[%c0_98, %c0_99] : memref<1024x64xbf16, #tpu.memory_space<vmem>>, vector<1024x64xbf16>
    %cst_100 = arith.constant dense<0.000000e+00> : vector<2x64xf32>
    %108 = tpu.matmul %106, %107, %cst_100 {dimension_numbers = #tpu.dot_dimension_numbers<[1], [0], [0], [1], [0, 0, 1, 1], [], []>} : vector<2x1024xbf16>, vector<1024x64xbf16>, vector<2x64xf32> -> vector<2x64xf32>
    %c0_101 = arith.constant 0 : index
    %c0_102 = arith.constant 0 : index
    %109 = vector.load %arg3[%c0_101, %c0_102] : memref<1x64xf32, #tpu.memory_space<vmem>>, vector<1x64xf32>
    %110 = vector.broadcast %109 : vector<1x64xf32> to vector<2x64xf32>
    %111 = arith.addf %108, %110 : vector<2x64xf32>
    %cst_103 = arith.constant 0.000000e+00 : f32
    %112 = vector.broadcast %cst_103 : f32 to vector<2x64xf32>
    %113 = arith.maximumf %111, %112 : vector<2x64xf32>
    %c8_104 = arith.constant 8 : index
    %c0_105 = arith.constant 0 : index
    %c0_106 = arith.constant 0 : index
    %114 = vector.load %arg4[%c8_104, %c0_105, %c0_106] : memref<9x64x64xf32, #tpu.memory_space<vmem>>, vector<1x64x64xf32>
    %115 = vector.shape_cast %114 : vector<1x64x64xf32> to vector<64x64xf32>
    %cst_107 = arith.constant dense<0.000000e+00> : vector<2x64xf32>
    %116 = tpu.matmul %113, %115, %cst_107 {dimension_numbers = #tpu.dot_dimension_numbers<[1], [0], [0], [1], [0, 0, 1, 1], [], []>} : vector<2x64xf32>, vector<64x64xf32>, vector<2x64xf32> -> vector<2x64xf32>
    %117 = arith.addf %104, %116 : vector<2x64xf32>
    %c0_108 = arith.constant 0 : index
    %c0_109 = arith.constant 0 : index
    %118 = vector.load %arg5[%c0_108, %c0_109] : memref<1x64xf32, #tpu.memory_space<vmem>>, vector<1x64xf32>
    %119 = vector.broadcast %118 : vector<1x64xf32> to vector<2x64xf32>
    %120 = arith.addf %117, %119 : vector<2x64xf32>
    %cst_110 = arith.constant 0.000000e+00 : f32
    %121 = vector.broadcast %cst_110 : f32 to vector<2x64xf32>
    %122 = arith.maximumf %120, %121 : vector<2x64xf32>
    %c0_111 = arith.constant 0 : index
    %c0_112 = arith.constant 0 : index
    %123 = vector.load %arg6[%c0_111, %c0_112] : memref<64x64xf32, #tpu.memory_space<vmem>>, vector<64x64xf32>
    %cst_113 = arith.constant dense<0.000000e+00> : vector<2x64xf32>
    %124 = tpu.matmul %122, %123, %cst_113 {dimension_numbers = #tpu.dot_dimension_numbers<[1], [0], [0], [1], [0, 0, 1, 1], [], []>} : vector<2x64xf32>, vector<64x64xf32>, vector<2x64xf32> -> vector<2x64xf32>
    %c0_114 = arith.constant 0 : index
    %c0_115 = arith.constant 0 : index
    %125 = vector.load %arg7[%c0_114, %c0_115] : memref<1x64xf32, #tpu.memory_space<vmem>>, vector<1x64xf32>
    %126 = vector.broadcast %125 : vector<1x64xf32> to vector<2x64xf32>
    %127 = arith.addf %124, %126 : vector<2x64xf32>
    %cst_116 = arith.constant 0.000000e+00 : f32
    %128 = vector.broadcast %cst_116 : f32 to vector<2x64xf32>
    %129 = arith.maximumf %127, %128 : vector<2x64xf32>
    %c0_117 = arith.constant 0 : index
    %c0_118 = arith.constant 0 : index
    %130 = vector.load %arg8[%c0_117, %c0_118] : memref<64x128xf32, #tpu.memory_space<vmem>>, vector<64x128xf32>
    %cst_119 = arith.constant dense<0.000000e+00> : vector<2x128xf32>
    %131 = tpu.matmul %129, %130, %cst_119 {dimension_numbers = #tpu.dot_dimension_numbers<[1], [0], [0], [1], [0, 0, 1, 1], [], []>} : vector<2x64xf32>, vector<64x128xf32>, vector<2x128xf32> -> vector<2x128xf32>
    %c0_120 = arith.constant 0 : index
    %c0_121 = arith.constant 0 : index
    %132 = vector.load %arg9[%c0_120, %c0_121] : memref<1x128xf32, #tpu.memory_space<vmem>>, vector<1x128xf32>
    %133 = vector.broadcast %132 : vector<1x128xf32> to vector<2x128xf32>
    %134 = arith.addf %131, %133 : vector<2x128xf32>
    %c0_122 = arith.constant 0 : index
    %c0_123 = arith.constant 0 : index
    %135 = vector.load %arg10[%c0_122, %c0_123] : memref<2x128xf32, #tpu.memory_space<vmem>>, vector<2x128xf32>
    tpu.vector_store %arg10[%c0_122, %c0_123], %134 {strides = array<i32>} : memref<2x128xf32, #tpu.memory_space<vmem>>, vector<2x128xf32>,
    return
  }
  func.func @transform_0(%arg0: i32) -> (i32, i32, i32) {
    %c0_i32 = arith.constant 0 : i32
    %c0_i32_0 = arith.constant 0 : i32
    %c0_i32_1 = arith.constant 0 : i32
    return %c0_i32, %arg0, %c0_i32_0 : i32, i32, i32
  }
  func.func @transform_1(%arg0: i32) -> (i32, i32) {
    %c0_i32 = arith.constant 0 : i32
    %c0_i32_0 = arith.constant 0 : i32
    %c0_i32_1 = arith.constant 0 : i32
    return %c0_i32, %c0_i32_0 : i32, i32
  }
  func.func @transform_2(%arg0: i32) -> (i32, i32) {
    %c0_i32 = arith.constant 0 : i32
    %c0_i32_0 = arith.constant 0 : i32
    %c0_i32_1 = arith.constant 0 : i32
    return %c0_i32, %c0_i32_0 : i32, i32
  }
  func.func @transform_3(%arg0: i32) -> (i32, i32, i32) {
    %c0_i32 = arith.constant 0 : i32
    %c0_i32_0 = arith.constant 0 : i32
    %c0_i32_1 = arith.constant 0 : i32
    %c0_i32_2 = arith.constant 0 : i32
    return %c0_i32, %c0_i32_0, %c0_i32_1 : i32, i32, i32
  }
  func.func @transform_4(%arg0: i32) -> (i32, i32) {
    %c0_i32 = arith.constant 0 : i32
    %c0_i32_0 = arith.constant 0 : i32
    %c0_i32_1 = arith.constant 0 : i32
    return %c0_i32, %c0_i32_0 : i32, i32
  }
  func.func @transform_5(%arg0: i32) -> (i32, i32) {
    %c0_i32 = arith.constant 0 : i32
    %c0_i32_0 = arith.constant 0 : i32
    %c0_i32_1 = arith.constant 0 : i32
    return %c0_i32, %c0_i32_0 : i32, i32
  }
  func.func @transform_6(%arg0: i32) -> (i32, i32) {
    %c0_i32 = arith.constant 0 : i32
    %c0_i32_0 = arith.constant 0 : i32
    %c0_i32_1 = arith.constant 0 : i32
    return %c0_i32, %c0_i32_0 : i32, i32
  }
  func.func @transform_7(%arg0: i32) -> (i32, i32) {
    %c0_i32 = arith.constant 0 : i32
    %c0_i32_0 = arith.constant 0 : i32
    %c0_i32_1 = arith.constant 0 : i32
    return %c0_i32, %c0_i32_0 : i32, i32
  }
  func.func @transform_8(%arg0: i32) -> (i32, i32) {
    %c0_i32 = arith.constant 0 : i32
    %c0_i32_0 = arith.constant 0 : i32
    %c0_i32_1 = arith.constant 0 : i32
    return %c0_i32, %c0_i32_0 : i32, i32
  }
  func.func @transform_9(%arg0: i32) -> (i32, i32) {
    %c0_i32 = arith.constant 0 : i32
    %c0_i32_0 = arith.constant 0 : i32
    return %arg0, %c0_i32 : i32, i32
  }
}

</mosaic_0001>

<llo_original>
// kernel: _lambda_.2
$region0: #{_lambda_.2}
  #allocation0 [shape = 'u32[]', space=smem, size = 0x4, offset = 0x4, fixed_abs, tag = 'smem constant byte address 0x4 - core index']
  #allocation1 [shape = 'u32[144,128]{1,0:T(1,128)}', space=vmem, size = 0x12000, scoped, tag = 'internal scratch']
  %s0 = inlined_call_operand.vmem [shape: bf16[128,2048], index: 0, kind: input, shape index: {}]
  %s1 = inlined_call_operand.vmem [shape: bf16[2048,64], index: 1, kind: input, shape index: {}]
  %s2 = inlined_call_operand.vmem [shape: f32[1,64], index: 2, kind: input, shape index: {}]
  %s3 = inlined_call_operand.vmem [shape: bf16[128,64], index: 3, kind: output, shape index: {}]
  %s4 = sld [smem:[#allocation0]]
  $region45: #{_lambda_.2} parent=0
    _
  %s6 = ssub.s32 1, %s4
  %s7 = scalar_select 0, %s6, %s4
  loop: start=0, step=1, limit=4
  $region2: #{_lambda_.2} parent=0 // loop_pre_header
    _
  $region3: #{_lambda_.2} parent=0 // loop_header
    %s9 = sphi 0, %s13
    %p10 = scmp.ge.s32.totalorder %s9, 4
    %s19 = sphi 0, %s21
    %s22 = sphi 0, %s19
    %s23 = sphi 0, %s22
    %s39 = sphi 0, %s23
    %s43 = sphi 0, %s43
    %s45 = sphi 0, %s43
    %s46 = sphi 0, %s45
    %s60 = sphi 0, %s46
    %s64 = sphi 0, %s64
    %s66 = sphi 0, %s64
    %s67 = sphi 0, %s66
    %s81 = sphi 0, %s67
    %s87 = sphi 0, %s89
    %s90 = sphi 0, %s87
    %s91 = sphi 0, %s90
    %s107 = sphi 0, %s91
  $region4: #{_lambda_.2} parent=0 // loop_header_branch
    %12 = sbr.rel (%p10) target = $region8
  $region5: #{_lambda_.2} parent=0 // loop_body
    %s14 = ssub.s32 %s9, 1
    %s15 = ssub.s32 %s9, 2
    %s16 = sadd.s32 %s9, 1
    %s17 = ssub.s32 %s9, %s16
    %p18 = scmp.eq.s32.totalorder %s17, 0
    %s20 = sadd.s32 %s19, 1
    %s21 = scalar_select %p18, %s19, %s20
    %p24 = pneg %p18
    %p25 = scmp.eq.s32.totalorder %s9, 1
    %p26 = por %p24, %p25
    %p27 = scmp.ne.s32.totalorder %s19, %s22
    %p28 = scmp.eq.s32.totalorder %s9, 0
    %p29 = por %p27, %p28
    %p30 = scmp.ne.s32.totalorder %s19, %s22
    %p31 = scmp.eq.s32.totalorder %s14, 1
    %p32 = por %p30, %p31
    %p33 = scmp.ne.s32.totalorder %s22, %s23
    %p34 = scmp.eq.s32.totalorder %s14, 0
    %p35 = por %p33, %p34
    %p36 = scmp.ne.s32.totalorder %s22, %s23
    %p37 = scmp.eq.s32.totalorder %s15, 1
    %p38 = por %p36, %p37
    %p40 = scmp.ne.s32.totalorder %s23, %s39
    %p41 = scmp.eq.s32.totalorder %s15, 0
    %p42 = por %p40, %p41
    %s44 = sadd.s32 %s43, 1
    %p47 = scmp.eq.s32.totalorder %s9, 1
    %p48 = scmp.ne.s32.totalorder %s43, %s45
    %p49 = scmp.eq.s32.totalorder %s9, 0
    %p50 = por %p48, %p49
    %p51 = scmp.ne.s32.totalorder %s43, %s45
    %p52 = scmp.eq.s32.totalorder %s14, 1
    %p53 = por %p51, %p52
    %p54 = scmp.ne.s32.totalorder %s45, %s46
    %p55 = scmp.eq.s32.totalorder %s14, 0
    %p56 = por %p54, %p55
    %p57 = scmp.ne.s32.totalorder %s45, %s46
    %p58 = scmp.eq.s32.totalorder %s15, 1
    %p59 = por %p57, %p58
    %p61 = scmp.ne.s32.totalorder %s46, %s60
    %p62 = scmp.eq.s32.totalorder %s15, 0
    %p63 = por %p61, %p62
    %s65 = sadd.s32 %s64, 1
    %p68 = scmp.eq.s32.totalorder %s9, 1
    %p69 = scmp.ne.s32.totalorder %s64, %s66
    %p70 = scmp.eq.s32.totalorder %s9, 0
    %p71 = por %p69, %p70
    %p72 = scmp.ne.s32.totalorder %s64, %s66
    %p73 = scmp.eq.s32.totalorder %s14, 1
    %p74 = por %p72, %p73
    %p75 = scmp.ne.s32.totalorder %s66, %s67
    %p76 = scmp.eq.s32.totalorder %s14, 0
    %p77 = por %p75, %p76
    %p78 = scmp.ne.s32.totalorder %s66, %s67
    %p79 = scmp.eq.s32.totalorder %s15, 1
    %p80 = por %p78, %p79
    %p82 = scmp.ne.s32.totalorder %s67, %s81
    %p83 = scmp.eq.s32.totalorder %s15, 0
    %p84 = por %p82, %p83
    %s85 = ssub.s32 %s9, %s16
    %p86 = scmp.eq.s32.totalorder %s85, 0
    %s88 = sadd.s32 %s87, 1
    %s89 = scalar_select %p86, %s87, %s88
    %p92 = pneg %p86
    %p93 = scmp.eq.s32.totalorder %s9, 1
    %p94 = por %p92, %p93
    %p95 = scmp.ne.s32.totalorder %s87, %s90
    %p96 = scmp.eq.s32.totalorder %s9, 0
    %p97 = por %p95, %p96
    %p98 = scmp.ne.s32.totalorder %s87, %s90
    %p99 = scmp.eq.s32.totalorder %s14, 1
    %p100 = por %p98, %p99
    %p101 = scmp.ne.s32.totalorder %s90, %s91
    %p102 = scmp.eq.s32.totalorder %s14, 0
    %p103 = por %p101, %p102
    %p104 = scmp.ne.s32.totalorder %s90, %s91
    %p105 = scmp.eq.s32.totalorder %s15, 1
    %p106 = por %p104, %p105
    %p108 = scmp.ne.s32.totalorder %s91, %s107
    %p109 = scmp.eq.s32.totalorder %s15, 0
    %p110 = por %p108, %p109
    %p111 = scmp.le.s32.totalorder 1, %s9
    %p112 = scmp.lt.s32.totalorder %s9, 3
    %p113 = pnand %p111, %p112
    %p114 = pneg %p113
    // Predicated region
    $region9: #{_lambda_.2} parent=5 // pred_check
      _
    $region10: #{_lambda_.2} parent=5 // pred_check_branch
      %116 = sbr.rel (%p113) target = $region12
    $region11: #{_lambda_.2} parent=5 // pred_region
      %s117 = ssub.s32 %s9, 1
      // Predicated region
      $region13: #{_lambda_.2} parent=11 // pred_check
        %p118 = pneg %p56
      $region14: #{_lambda_.2} parent=11 // pred_check_branch
        %120 = sbr.rel (%p118) target = $region16
      $region15: #{_lambda_.2} parent=11 // pred_region
        _
      $region16: #{_lambda_.2} parent=11 // pred_fallthru
        _
      // Predicated region
      $region17: #{_lambda_.2} parent=11 // pred_check
        %p121 = pneg %p77
      $region18: #{_lambda_.2} parent=11 // pred_check_branch
        %123 = sbr.rel (%p121) target = $region20
      $region19: #{_lambda_.2} parent=11 // pred_region
        _
      $region20: #{_lambda_.2} parent=11 // pred_fallthru
        _
    $region12: #{_lambda_.2} parent=5 // pred_fallthru
      _
    %p124 = scmp.lt.s32.totalorder %s9, 2
    // Predicated region
    $region21: #{_lambda_.2} parent=5 // pred_check
      %p125 = pneg %p124
    $region22: #{_lambda_.2} parent=5 // pred_check_branch
      %127 = sbr.rel (%p125) target = $region24
    $region23: #{_lambda_.2} parent=5 // pred_region
      // Predicated region
      $region25: #{_lambda_.2} parent=23 // pred_check
        %p128 = pneg %p29
      $region26: #{_lambda_.2} parent=23 // pred_check_branch
        %130 = sbr.rel (%p128) target = $region28
      $region27: #{_lambda_.2} parent=23 // pred_region
        %s131 = smul.u32 8, %s9
        %p132 = scmp.lt.s32.totalorder %s131, 15
        %s133 = scalar_select %p132, %s131, 15
        %s134 = smul.addr %s133, 16
        %s135 = smul.addr %s134, 4
        %s136 = scalar_lea.vmem %s0, %s135
        %s137 = smul.u32 8, %s9
      $region28: #{_lambda_.2} parent=23 // pred_fallthru
        _
    $region24: #{_lambda_.2} parent=5 // pred_fallthru
      _
    %p138 = scmp.le.s32.totalorder 1, %s9
    %p139 = scmp.lt.s32.totalorder %s9, 3
    %p140 = pnand %p138, %p139
    %p141 = pneg %p140
    // Predicated region
    $region29: #{_lambda_.2} parent=5 // pred_check
      _
    $region30: #{_lambda_.2} parent=5 // pred_check_branch
      %143 = sbr.rel (%p140) target = $region32
    $region31: #{_lambda_.2} parent=5 // pred_region
      %s144 = ssub.s32 %s9, 1
      %s145 = smul.u32 8, %s14
      %p146 = scmp.lt.s32.totalorder %s145, 15
      %s147 = scalar_select %p146, %s145, 15
      %s148 = smul.addr %s147, 16
      %s149 = smul.addr %s148, 4
      %s150 = scalar_lea.vmem %s0, %s149
      %p151 = pneg %p35
      %p152 = pneg %p32
      %p153 = pneg %p56
      %p154 = pneg %p53
      %p155 = pneg %p77
      %p156 = pneg %p74
      %p157 = pneg %p103
      %p158 = pneg %p100
      %s159 = smul.u32 8, %s14
      %p160 = scmp.lt.s32.totalorder %s159, 15
      %s161 = scalar_select %p160, %s159, 15
      %s162 = smul.addr %s161, 4
      %s163 = scalar_lea.vmem %s3, %s162
      %s164 = smul.u32 8, %s14
      %p165 = scmp.lt.s32.totalorder %s164, 15
      %s166 = scalar_select %p165, %s164, 15
      %s167 = smul.addr %s166, 16
      %s168 = smul.addr %s167, 4
      %s169 = scalar_lea.vmem %s0, %s168
      %s170 = smul.u32 8, %s14
      %s171 = smul.u32 8, %s14
      %p172 = scmp.lt.s32.totalorder %s171, 15
      %s173 = scalar_select %p172, %s171, 15
      %s174 = smul.addr %s173, 4
      %s175 = scalar_lea.vmem %s3, %s174
      %s176 = smul.u32 8, %s14
      %v178 = vld [vmem:[%s169] sm:$0xff]
      %v179 = vld [vmem:[%s169 + $0x8] sm:$0xff]
      %v180 = vld [vmem:[%s169 + $0x10] sm:$0xff]
      %v181 = vld [vmem:[%s169 + $0x18] sm:$0xff]
      %v182 = vld [vmem:[%s169 + $0x20] sm:$0xff]
      %v183 = vld [vmem:[%s169 + $0x28] sm:$0xff]
      %v184 = vld [vmem:[%s169 + $0x30] sm:$0xff]
      %v185 = vld [vmem:[%s169 + $0x38] sm:$0xff]
      %v186 = vld [vmem:[%s169 + $0x40] sm:$0xff]
      %v187 = vld [vmem:[%s169 + $0x48] sm:$0xff]
      %v188 = vld [vmem:[%s169 + $0x50] sm:$0xff]
      %v189 = vld [vmem:[%s169 + $0x58] sm:$0xff]
      %v190 = vld [vmem:[%s169 + $0x60] sm:$0xff]
      %v191 = vld [vmem:[%s169 + $0x68] sm:$0xff]
      %v192 = vld [vmem:[%s169 + $0x70] sm:$0xff]
      %v193 = vld [vmem:[%s169 + $0x78] sm:$0xff]
      %v194 = vld [vmem:[%s169 + $0x80] sm:$0xff]
      %v195 = vld [vmem:[%s169 + $0x88] sm:$0xff]
      %v196 = vld [vmem:[%s169 + $0x90] sm:$0xff]
      %v197 = vld [vmem:[%s169 + $0x98] sm:$0xff]
      %v198 = vld [vmem:[%s169 + $0xa0] sm:$0xff]
      %v199 = vld [vmem:[%s169 + $0xa8] sm:$0xff]
      %v200 = vld [vmem:[%s169 + $0xb0] sm:$0xff]
      %v201 = vld [vmem:[%s169 + $0xb8] sm:$0xff]
      %v202 = vld [vmem:[%s169 + $0xc0] sm:$0xff]
      %v203 = vld [vmem:[%s169 + $0xc8] sm:$0xff]
      %v204 = vld [vmem:[%s169 + $0xd0] sm:$0xff]
      %v205 = vld [vmem:[%s169 + $0xd8] sm:$0xff]
      %v206 = vld [vmem:[%s169 + $0xe0] sm:$0xff]
      %v207 = vld [vmem:[%s169 + $0xe8] sm:$0xff]
      %v208 = vld [vmem:[%s169 + $0xf0] sm:$0xff]
      %v209 = vld [vmem:[%s169 + $0xf8] sm:$0xff]
      %v210 = vld [vmem:[%s169 + $0x100] sm:$0xff]
      %v211 = vld [vmem:[%s169 + $0x108] sm:$0xff]
      %v212 = vld [vmem:[%s169 + $0x110] sm:$0xff]
      %v213 = vld [vmem:[%s169 + $0x118] sm:$0xff]
      %v214 = vld [vmem:[%s169 + $0x120] sm:$0xff]
      %v215 = vld [vmem:[%s169 + $0x128] sm:$0xff]
      %v216 = vld [vmem:[%s169 + $0x130] sm:$0xff]
      %v217 = vld [vmem:[%s169 + $0x138] sm:$0xff]
      %v218 = vld [vmem:[%s169 + $0x140] sm:$0xff]
      %v219 = vld [vmem:[%s169 + $0x148] sm:$0xff]
      %v220 = vld [vmem:[%s169 + $0x150] sm:$0xff]
      %v221 = vld [vmem:[%s169 + $0x158] sm:$0xff]
      %v222 = vld [vmem:[%s169 + $0x160] sm:$0xff]
      %v223 = vld [vmem:[%s169 + $0x168] sm:$0xff]
      %v224 = vld [vmem:[%s169 + $0x170] sm:$0xff]
      %v225 = vld [vmem:[%s169 + $0x178] sm:$0xff]
      %v226 = vld [vmem:[%s169 + $0x180] sm:$0xff]
      %v227 = vld [vmem:[%s169 + $0x188] sm:$0xff]
      %v228 = vld [vmem:[%s169 + $0x190] sm:$0xff]
      %v229 = vld [vmem:[%s169 + $0x198] sm:$0xff]
      %v230 = vld [vmem:[%s169 + $0x1a0] sm:$0xff]
      %v231 = vld [vmem:[%s169 + $0x1a8] sm:$0xff]
      %v232 = vld [vmem:[%s169 + $0x1b0] sm:$0xff]
      %v233 = vld [vmem:[%s169 + $0x1b8] sm:$0xff]
      %v234 = vld [vmem:[%s169 + $0x1c0] sm:$0xff]
      %v235 = vld [vmem:[%s169 + $0x1c8] sm:$0xff]
      %v236 = vld [vmem:[%s169 + $0x1d0] sm:$0xff]
      %v237 = vld [vmem:[%s169 + $0x1d8] sm:$0xff]
      %v238 = vld [vmem:[%s169 + $0x1e0] sm:$0xff]
      %v239 = vld [vmem:[%s169 + $0x1e8] sm:$0xff]
      %v240 = vld [vmem:[%s169 + $0x1f0] sm:$0xff]
      %v241 = vld [vmem:[%s169 + $0x1f8] sm:$0xff]
      %v242 = vld [vmem:[%s1] sm:$0xf]
      %v243 = vld [vmem:[%s1 + $0x4] sm:$0xf]
      %v244 = vld [vmem:[%s1 + $0x8] sm:$0xf]
      %v245 = vld [vmem:[%s1 + $0xc] sm:$0xf]
      %v246 = vld [vmem:[%s1 + $0x10] sm:$0xf]
      %v247 = vld [vmem:[%s1 + $0x14] sm:$0xf]
      %v248 = vld [vmem:[%s1 + $0x18] sm:$0xf]
      %v249 = vld [vmem:[%s1 + $0x1c] sm:$0xf]
      %v250 = vld [vmem:[%s1 + $0x20] sm:$0xf]
      %v251 = vld [vmem:[%s1 + $0x24] sm:$0xf]
      %v252 = vld [vmem:[%s1 + $0x28] sm:$0xf]
      %v253 = vld [vmem:[%s1 + $0x2c] sm:$0xf]
      %v254 = vld [vmem:[%s1 + $0x30] sm:$0xf]
      %v255 = vld [vmem:[%s1 + $0x34] sm:$0xf]
      %v256 = vld [vmem:[%s1 + $0x38] sm:$0xf]
      %v257 = vld [vmem:[%s1 + $0x3c] sm:$0xf]
      %v258 = vld [vmem:[%s1 + $0x40] sm:$0xf]
      %v259 = vld [vmem:[%s1 + $0x44] sm:$0xf]
      %v260 = vld [vmem:[%s1 + $0x48] sm:$0xf]
      %v261 = vld [vmem:[%s1 + $0x4c] sm:$0xf]
      %v262 = vld [vmem:[%s1 + $0x50] sm:$0xf]
      %v263 = vld [vmem:[%s1 + $0x54] sm:$0xf]
      %v264 = vld [vmem:[%s1 + $0x58] sm:$0xf]
      %v265 = vld [vmem:[%s1 + $0x5c] sm:$0xf]
      %v266 = vld [vmem:[%s1 + $0x60] sm:$0xf]
      %v267 = vld [vmem:[%s1 + $0x64] sm:$0xf]
      %v268 = vld [vmem:[%s1 + $0x68] sm:$0xf]
      %v269 = vld [vmem:[%s1 + $0x6c] sm:$0xf]
      %v270 = vld [vmem:[%s1 + $0x70] sm:$0xf]
      %v271 = vld [vmem:[%s1 + $0x74] sm:$0xf]
      %v272 = vld [vmem:[%s1 + $0x78] sm:$0xf]
      %v273 = vld [vmem:[%s1 + $0x7c] sm:$0xf]
      %v274 = vld [vmem:[%s1 + $0x80] sm:$0xf]
      %v275 = vld [vmem:[%s1 + $0x84] sm:$0xf]
      %v276 = vld [vmem:[%s1 + $0x88] sm:$0xf]
      %v277 = vld [vmem:[%s1 + $0x8c] sm:$0xf]
      %v278 = vld [vmem:[%s1 + $0x90] sm:$0xf]
      %v279 = vld [vmem:[%s1 + $0x94] sm:$0xf]
      %v280 = vld [vmem:[%s1 + $0x98] sm:$0xf]
      %v281 = vld [vmem:[%s1 + $0x9c] sm:$0xf]
      %v282 = vld [vmem:[%s1 + $0xa0] sm:$0xf]
      %v283 = vld [vmem:[%s1 + $0xa4] sm:$0xf]
      %v284 = vld [vmem:[%s1 + $0xa8] sm:$0xf]
      %v285 = vld [vmem:[%s1 + $0xac] sm:$0xf]
      %v286 = vld [vmem:[%s1 + $0xb0] sm:$0xf]
      %v287 = vld [vmem:[%s1 + $0xb4] sm:$0xf]
      %v288 = vld [vmem:[%s1 + $0xb8] sm:$0xf]
      %v289 = vld [vmem:[%s1 + $0xbc] sm:$0xf]
      %v290 = vld [vmem:[%s1 + $0xc0] sm:$0xf]
      %v291 = vld [vmem:[%s1 + $0xc4] sm:$0xf]
      %v292 = vld [vmem:[%s1 + $0xc8] sm:$0xf]
      %v293 = vld [vmem:[%s1 + $0xcc] sm:$0xf]
      %v294 = vld [vmem:[%s1 + $0xd0] sm:$0xf]
      %v295 = vld [vmem:[%s1 + $0xd4] sm:$0xf]
      %v296 = vld [vmem:[%s1 + $0xd8] sm:$0xf]
      %v297 = vld [vmem:[%s1 + $0xdc] sm:$0xf]
      %v298 = vld [vmem:[%s1 + $0xe0] sm:$0xf]
      %v299 = vld [vmem:[%s1 + $0xe4] sm:$0xf]
      %v300 = vld [vmem:[%s1 + $0xe8] sm:$0xf]
      %v301 = vld [vmem:[%s1 + $0xec] sm:$0xf]
      %v302 = vld [vmem:[%s1 + $0xf0] sm:$0xf]
      %v303 = vld [vmem:[%s1 + $0xf4] sm:$0xf]
      %v304 = vld [vmem:[%s1 + $0xf8] sm:$0xf]
      %v305 = vld [vmem:[%s1 + $0xfc] sm:$0xf]
      %v306 = vld [vmem:[%s1 + $0x100] sm:$0xf]
      %v307 = vld [vmem:[%s1 + $0x104] sm:$0xf]
      %v308 = vld [vmem:[%s1 + $0x108] sm:$0xf]
      %v309 = vld [vmem:[%s1 + $0x10c] sm:$0xf]
      %v310 = vld [vmem:[%s1 + $0x110] sm:$0xf]
      %v311 = vld [vmem:[%s1 + $0x114] sm:$0xf]
      %v312 = vld [vmem:[%s1 + $0x118] sm:$0xf]
      %v313 = vld [vmem:[%s1 + $0x11c] sm:$0xf]
      %v314 = vld [vmem:[%s1 + $0x120] sm:$0xf]
      %v315 = vld [vmem:[%s1 + $0x124] sm:$0xf]
      %v316 = vld [vmem:[%s1 + $0x128] sm:$0xf]
      %v317 = vld [vmem:[%s1 + $0x12c] sm:$0xf]
      %v318 = vld [vmem:[%s1 + $0x130] sm:$0xf]
      %v319 = vld [vmem:[%s1 + $0x134] sm:$0xf]
      %v320 = vld [vmem:[%s1 + $0x138] sm:$0xf]
      %v321 = vld [vmem:[%s1 + $0x13c] sm:$0xf]
      %v322 = vld [vmem:[%s1 + $0x140] sm:$0xf]
      %v323 = vld [vmem:[%s1 + $0x144] sm:$0xf]
      %v324 = vld [vmem:[%s1 + $0x148] sm:$0xf]
      %v325 = vld [vmem:[%s1 + $0x14c] sm:$0xf]
      %v326 = vld [vmem:[%s1 + $0x150] sm:$0xf]
      %v327 = vld [vmem:[%s1 + $0x154] sm:$0xf]
      %v328 = vld [vmem:[%s1 + $0x158] sm:$0xf]
      %v329 = vld [vmem:[%s1 + $0x15c] sm:$0xf]
      %v330 = vld [vmem:[%s1 + $0x160] sm:$0xf]
      %v331 = vld [vmem:[%s1 + $0x164] sm:$0xf]
      %v332 = vld [vmem:[%s1 + $0x168] sm:$0xf]
      %v333 = vld [vmem:[%s1 + $0x16c] sm:$0xf]
      %v334 = vld [vmem:[%s1 + $0x170] sm:$0xf]
      %v335 = vld [vmem:[%s1 + $0x174] sm:$0xf]
      %v336 = vld [vmem:[%s1 + $0x178] sm:$0xf]
      %v337 = vld [vmem:[%s1 + $0x17c] sm:$0xf]
      %v338 = vld [vmem:[%s1 + $0x180] sm:$0xf]
      %v339 = vld [vmem:[%s1 + $0x184] sm:$0xf]
      %v340 = vld [vmem:[%s1 + $0x188] sm:$0xf]
      %v341 = vld [vmem:[%s1 + $0x18c] sm:$0xf]
      %v342 = vld [vmem:[%s1 + $0x190] sm:$0xf]
      %v343 = vld [vmem:[%s1 + $0x194] sm:$0xf]
      %v344 = vld [vmem:[%s1 + $0x198] sm:$0xf]
      %v345 = vld [vmem:[%s1 + $0x19c] sm:$0xf]
      %v346 = vld [vmem:[%s1 + $0x1a0] sm:$0xf]
      %v347 = vld [vmem:[%s1 + $0x1a4] sm:$0xf]
      %v348 = vld [vmem:[%s1 + $0x1a8] sm:$0xf]
      %v349 = vld [vmem:[%s1 + $0x1ac] sm:$0xf]
      %v350 = vld [vmem:[%s1 + $0x1b0] sm:$0xf]
      %v351 = vld [vmem:[%s1 + $0x1b4] sm:$0xf]
      %v352 = vld [vmem:[%s1 + $0x1b8] sm:$0xf]
      %v353 = vld [vmem:[%s1 + $0x1bc] sm:$0xf]
      %v354 = vld [vmem:[%s1 + $0x1c0] sm:$0xf]
      %v355 = vld [vmem:[%s1 + $0x1c4] sm:$0xf]
      %v356 = vld [vmem:[%s1 + $0x1c8] sm:$0xf]
      %v357 = vld [vmem:[%s1 + $0x1cc] sm:$0xf]
      %v358 = vld [vmem:[%s1 + $0x1d0] sm:$0xf]
      %v359 = vld [vmem:[%s1 + $0x1d4] sm:$0xf]
      %v360 = vld [vmem:[%s1 + $0x1d8] sm:$0xf]
      %v361 = vld [vmem:[%s1 + $0x1dc] sm:$0xf]
      %v362 = vld [vmem:[%s1 + $0x1e0] sm:$0xf]
      %v363 = vld [vmem:[%s1 + $0x1e4] sm:$0xf]
      %v364 = vld [vmem:[%s1 + $0x1e8] sm:$0xf]
      %v365 = vld [vmem:[%s1 + $0x1ec] sm:$0xf]
      %v366 = vld [vmem:[%s1 + $0x1f0] sm:$0xf]
      %v367 = vld [vmem:[%s1 + $0x1f4] sm:$0xf]
      %v368 = vld [vmem:[%s1 + $0x1f8] sm:$0xf]
      %v369 = vld [vmem:[%s1 + $0x1fc] sm:$0xf]
      %v370 = vld [vmem:[%s1 + $0x200] sm:$0xf]
      %v371 = vld [vmem:[%s1 + $0x204] sm:$0xf]
      %v372 = vld [vmem:[%s1 + $0x208] sm:$0xf]
      %v373 = vld [vmem:[%s1 + $0x20c] sm:$0xf]
      %v374 = vld [vmem:[%s1 + $0x210] sm:$0xf]
      %v375 = vld [vmem:[%s1 + $0x214] sm:$0xf]
      %v376 = vld [vmem:[%s1 + $0x218] sm:$0xf]
      %v377 = vld [vmem:[%s1 + $0x21c] sm:$0xf]
      %v378 = vld [vmem:[%s1 + $0x220] sm:$0xf]
      %v379 = vld [vmem:[%s1 + $0x224] sm:$0xf]
      %v380 = vld [vmem:[%s1 + $0x228] sm:$0xf]
      %v381 = vld [vmem:[%s1 + $0x22c] sm:$0xf]
      %v382 = vld [vmem:[%s1 + $0x230] sm:$0xf]
      %v383 = vld [vmem:[%s1 + $0x234] sm:$0xf]
      %v384 = vld [vmem:[%s1 + $0x238] sm:$0xf]
      %v385 = vld [vmem:[%s1 + $0x23c] sm:$0xf]
      %v386 = vld [vmem:[%s1 + $0x240] sm:$0xf]
      %v387 = vld [vmem:[%s1 + $0x244] sm:$0xf]
      %v388 = vld [vmem:[%s1 + $0x248] sm:$0xf]
      %v389 = vld [vmem:[%s1 + $0x24c] sm:$0xf]
      %v390 = vld [vmem:[%s1 + $0x250] sm:$0xf]
      %v391 = vld [vmem:[%s1 + $0x254] sm:$0xf]
      %v392 = vld [vmem:[%s1 + $0x258] sm:$0xf]
      %v393 = vld [vmem:[%s1 + $0x25c] sm:$0xf]
      %v394 = vld [vmem:[%s1 + $0x260] sm:$0xf]
      %v395 = vld [vmem:[%s1 + $0x264] sm:$0xf]
      %v396 = vld [vmem:[%s1 + $0x268] sm:$0xf]
      %v397 = vld [vmem:[%s1 + $0x26c] sm:$0xf]
      %v398 = vld [vmem:[%s1 + $0x270] sm:$0xf]
      %v399 = vld [vmem:[%s1 + $0x274] sm:$0xf]
      %v400 = vld [vmem:[%s1 + $0x278] sm:$0xf]
      %v401 = vld [vmem:[%s1 + $0x27c] sm:$0xf]
      %v402 = vld [vmem:[%s1 + $0x280] sm:$0xf]
      %v403 = vld [vmem:[%s1 + $0x284] sm:$0xf]
      %v404 = vld [vmem:[%s1 + $0x288] sm:$0xf]
      %v405 = vld [vmem:[%s1 + $0x28c] sm:$0xf]
      %v406 = vld [vmem:[%s1 + $0x290] sm:$0xf]
      %v407 = vld [vmem:[%s1 + $0x294] sm:$0xf]
      %v408 = vld [vmem:[%s1 + $0x298] sm:$0xf]
      %v409 = vld [vmem:[%s1 + $0x29c] sm:$0xf]
      %v410 = vld [vmem:[%s1 + $0x2a0] sm:$0xf]
      %v411 = vld [vmem:[%s1 + $0x2a4] sm:$0xf]
      %v412 = vld [vmem:[%s1 + $0x2a8] sm:$0xf]
      %v413 = vld [vmem:[%s1 + $0x2ac] sm:$0xf]
      %v414 = vld [vmem:[%s1 + $0x2b0] sm:$0xf]
      %v415 = vld [vmem:[%s1 + $0x2b4] sm:$0xf]
      %v416 = vld [vmem:[%s1 + $0x2b8] sm:$0xf]
      %v417 = vld [vmem:[%s1 + $0x2bc] sm:$0xf]
      %v418 = vld [vmem:[%s1 + $0x2c0] sm:$0xf]
      %v419 = vld [vmem:[%s1 + $0x2c4] sm:$0xf]
      %v420 = vld [vmem:[%s1 + $0x2c8] sm:$0xf]
      %v421 = vld [vmem:[%s1 + $0x2cc] sm:$0xf]
      %v422 = vld [vmem:[%s1 + $0x2d0] sm:$0xf]
      %v423 = vld [vmem:[%s1 + $0x2d4] sm:$0xf]
      %v424 = vld [vmem:[%s1 + $0x2d8] sm:$0xf]
      %v425 = vld [vmem:[%s1 + $0x2dc] sm:$0xf]
      %v426 = vld [vmem:[%s1 + $0x2e0] sm:$0xf]
      %v427 = vld [vmem:[%s1 + $0x2e4] sm:$0xf]
      %v428 = vld [vmem:[%s1 + $0x2e8] sm:$0xf]
      %v429 = vld [vmem:[%s1 + $0x2ec] sm:$0xf]
      %v430 = vld [vmem:[%s1 + $0x2f0] sm:$0xf]
      %v431 = vld [vmem:[%s1 + $0x2f4] sm:$0xf]
      %v432 = vld [vmem:[%s1 + $0x2f8] sm:$0xf]
      %v433 = vld [vmem:[%s1 + $0x2fc] sm:$0xf]
      %v434 = vld [vmem:[%s1 + $0x300] sm:$0xf]
      %v435 = vld [vmem:[%s1 + $0x304] sm:$0xf]
      %v436 = vld [vmem:[%s1 + $0x308] sm:$0xf]
      %v437 = vld [vmem:[%s1 + $0x30c] sm:$0xf]
      %v438 = vld [vmem:[%s1 + $0x310] sm:$0xf]
      %v439 = vld [vmem:[%s1 + $0x314] sm:$0xf]
      %v440 = vld [vmem:[%s1 + $0x318] sm:$0xf]
      %v441 = vld [vmem:[%s1 + $0x31c] sm:$0xf]
      %v442 = vld [vmem:[%s1 + $0x320] sm:$0xf]
      %v443 = vld [vmem:[%s1 + $0x324] sm:$0xf]
      %v444 = vld [vmem:[%s1 + $0x328] sm:$0xf]
      %v445 = vld [vmem:[%s1 + $0x32c] sm:$0xf]
      %v446 = vld [vmem:[%s1 + $0x330] sm:$0xf]
      %v447 = vld [vmem:[%s1 + $0x334] sm:$0xf]
      %v448 = vld [vmem:[%s1 + $0x338] sm:$0xf]
      %v449 = vld [vmem:[%s1 + $0x33c] sm:$0xf]
      %v450 = vld [vmem:[%s1 + $0x340] sm:$0xf]
      %v451 = vld [vmem:[%s1 + $0x344] sm:$0xf]
      %v452 = vld [vmem:[%s1 + $0x348] sm:$0xf]
      %v453 = vld [vmem:[%s1 + $0x34c] sm:$0xf]
      %v454 = vld [vmem:[%s1 + $0x350] sm:$0xf]
      %v455 = vld [vmem:[%s1 + $0x354] sm:$0xf]
      %v456 = vld [vmem:[%s1 + $0x358] sm:$0xf]
      %v457 = vld [vmem:[%s1 + $0x35c] sm:$0xf]
      %v458 = vld [vmem:[%s1 + $0x360] sm:$0xf]
      %v459 = vld [vmem:[%s1 + $0x364] sm:$0xf]
      %v460 = vld [vmem:[%s1 + $0x368] sm:$0xf]
      %v461 = vld [vmem:[%s1 + $0x36c] sm:$0xf]
      %v462 = vld [vmem:[%s1 + $0x370] sm:$0xf]
      %v463 = vld [vmem:[%s1 + $0x374] sm:$0xf]
      %v464 = vld [vmem:[%s1 + $0x378] sm:$0xf]
      %v465 = vld [vmem:[%s1 + $0x37c] sm:$0xf]
      %v466 = vld [vmem:[%s1 + $0x380] sm:$0xf]
      %v467 = vld [vmem:[%s1 + $0x384] sm:$0xf]
      %v468 = vld [vmem:[%s1 + $0x388] sm:$0xf]
      %v469 = vld [vmem:[%s1 + $0x38c] sm:$0xf]
      %v470 = vld [vmem:[%s1 + $0x390] sm:$0xf]
      %v471 = vld [vmem:[%s1 + $0x394] sm:$0xf]
      %v472 = vld [vmem:[%s1 + $0x398] sm:$0xf]
      %v473 = vld [vmem:[%s1 + $0x39c] sm:$0xf]
      %v474 = vld [vmem:[%s1 + $0x3a0] sm:$0xf]
      %v475 = vld [vmem:[%s1 + $0x3a4] sm:$0xf]
      %v476 = vld [vmem:[%s1 + $0x3a8] sm:$0xf]
      %v477 = vld [vmem:[%s1 + $0x3ac] sm:$0xf]
      %v478 = vld [vmem:[%s1 + $0x3b0] sm:$0xf]
      %v479 = vld [vmem:[%s1 + $0x3b4] sm:$0xf]
      %v480 = vld [vmem:[%s1 + $0x3b8] sm:$0xf]
      %v481 = vld [vmem:[%s1 + $0x3bc] sm:$0xf]
      %v482 = vld [vmem:[%s1 + $0x3c0] sm:$0xf]
      %v483 = vld [vmem:[%s1 + $0x3c4] sm:$0xf]
      %v484 = vld [vmem:[%s1 + $0x3c8] sm:$0xf]
      %v485 = vld [vmem:[%s1 + $0x3cc] sm:$0xf]
      %v486 = vld [vmem:[%s1 + $0x3d0] sm:$0xf]
      %v487 = vld [vmem:[%s1 + $0x3d4] sm:$0xf]
      %v488 = vld [vmem:[%s1 + $0x3d8] sm:$0xf]
      %v489 = vld [vmem:[%s1 + $0x3dc] sm:$0xf]
      %v490 = vld [vmem:[%s1 + $0x3e0] sm:$0xf]
      %v491 = vld [vmem:[%s1 + $0x3e4] sm:$0xf]
      %v492 = vld [vmem:[%s1 + $0x3e8] sm:$0xf]
      %v493 = vld [vmem:[%s1 + $0x3ec] sm:$0xf]
      %v494 = vld [vmem:[%s1 + $0x3f0] sm:$0xf]
      %v495 = vld [vmem:[%s1 + $0x3f4] sm:$0xf]
      %v496 = vld [vmem:[%s1 + $0x3f8] sm:$0xf]
      %v497 = vld [vmem:[%s1 + $0x3fc] sm:$0xf]
      %v498 = vld [vmem:[%s2] sm:$0x1]
      %v500 = vlaneseq
      %v501 = vshrl.u32 %v500, 7
      %v502 = vsub.s32 0, %v501
      %v503 = vrot.slane %v498, %v502
      %v569 = vunpack.c.l.b16 %v178
      %v570 = vunpack.c.h.b16 %v178
      %v571 = vunpack.c.l.b16 %v179
      %v572 = vunpack.c.h.b16 %v179
      %v573 = vunpack.c.l.b16 %v180
      %v574 = vunpack.c.h.b16 %v180
      %v575 = vunpack.c.l.b16 %v181
      %v576 = vunpack.c.h.b16 %v181
      %v577 = vunpack.c.l.b16 %v182
      %v578 = vunpack.c.h.b16 %v182
      %v579 = vunpack.c.l.b16 %v183
      %v580 = vunpack.c.h.b16 %v183
      %v581 = vunpack.c.l.b16 %v184
      %v582 = vunpack.c.h.b16 %v184
      %v583 = vunpack.c.l.b16 %v185
      %v584 = vunpack.c.h.b16 %v185
      %v585 = vunpack.c.l.b16 %v186
      %v586 = vunpack.c.h.b16 %v186
      %v587 = vunpack.c.l.b16 %v187
      %v588 = vunpack.c.h.b16 %v187
      %v589 = vunpack.c.l.b16 %v188
      %v590 = vunpack.c.h.b16 %v188
      %v591 = vunpack.c.l.b16 %v189
      %v592 = vunpack.c.h.b16 %v189
      %v593 = vunpack.c.l.b16 %v190
      %v594 = vunpack.c.h.b16 %v190
      %v595 = vunpack.c.l.b16 %v191
      %v596 = vunpack.c.h.b16 %v191
      %v597 = vunpack.c.l.b16 %v192
      %v598 = vunpack.c.h.b16 %v192
      %v599 = vunpack.c.l.b16 %v193
      %v600 = vunpack.c.h.b16 %v193
      %v601 = vunpack.c.l.b16 %v194
      %v602 = vunpack.c.h.b16 %v194
      %v603 = vunpack.c.l.b16 %v195
      %v604 = vunpack.c.h.b16 %v195
      %v605 = vunpack.c.l.b16 %v196
      %v606 = vunpack.c.h.b16 %v196
      %v607 = vunpack.c.l.b16 %v197
      %v608 = vunpack.c.h.b16 %v197
      %v609 = vunpack.c.l.b16 %v198
      %v610 = vunpack.c.h.b16 %v198
      %v611 = vunpack.c.l.b16 %v199
      %v612 = vunpack.c.h.b16 %v199
      %v613 = vunpack.c.l.b16 %v200
      %v614 = vunpack.c.h.b16 %v200
      %v615 = vunpack.c.l.b16 %v201
      %v616 = vunpack.c.h.b16 %v201
      %v617 = vunpack.c.l.b16 %v202
      %v618 = vunpack.c.h.b16 %v202
      %v619 = vunpack.c.l.b16 %v203
      %v620 = vunpack.c.h.b16 %v203
      %v621 = vunpack.c.l.b16 %v204
      %v622 = vunpack.c.h.b16 %v204
      %v623 = vunpack.c.l.b16 %v205
      %v624 = vunpack.c.h.b16 %v205
      %v625 = vunpack.c.l.b16 %v206
      %v626 = vunpack.c.h.b16 %v206
      %v627 = vunpack.c.l.b16 %v207
      %v628 = vunpack.c.h.b16 %v207
      %v629 = vunpack.c.l.b16 %v208
      %v630 = vunpack.c.h.b16 %v208
      %v631 = vunpack.c.l.b16 %v209
      %v632 = vunpack.c.h.b16 %v209
      %v633 = vunpack.c.l.b16 %v210
      %v634 = vunpack.c.h.b16 %v210
      %v635 = vunpack.c.l.b16 %v211
      %v636 = vunpack.c.h.b16 %v211
      %v637 = vunpack.c.l.b16 %v212
      %v638 = vunpack.c.h.b16 %v212
      %v639 = vunpack.c.l.b16 %v213
      %v640 = vunpack.c.h.b16 %v213
      %v641 = vunpack.c.l.b16 %v214
      %v642 = vunpack.c.h.b16 %v214
      %v643 = vunpack.c.l.b16 %v215
      %v644 = vunpack.c.h.b16 %v215
      %v645 = vunpack.c.l.b16 %v216
      %v646 = vunpack.c.h.b16 %v216
      %v647 = vunpack.c.l.b16 %v217
      %v648 = vunpack.c.h.b16 %v217
      %v649 = vunpack.c.l.b16 %v218
      %v650 = vunpack.c.h.b16 %v218
      %v651 = vunpack.c.l.b16 %v219
      %v652 = vunpack.c.h.b16 %v219
      %v653 = vunpack.c.l.b16 %v220
      %v654 = vunpack.c.h.b16 %v220
      %v655 = vunpack.c.l.b16 %v221
      %v656 = vunpack.c.h.b16 %v221
      %v657 = vunpack.c.l.b16 %v222
      %v658 = vunpack.c.h.b16 %v222
      %v659 = vunpack.c.l.b16 %v223
      %v660 = vunpack.c.h.b16 %v223
      %v661 = vunpack.c.l.b16 %v224
      %v662 = vunpack.c.h.b16 %v224
      %v663 = vunpack.c.l.b16 %v225
      %v664 = vunpack.c.h.b16 %v225
      %v665 = vunpack.c.l.b16 %v226
      %v666 = vunpack.c.h.b16 %v226
      %v667 = vunpack.c.l.b16 %v227
      %v668 = vunpack.c.h.b16 %v227
      %v669 = vunpack.c.l.b16 %v228
      %v670 = vunpack.c.h.b16 %v228
      %v671 = vunpack.c.l.b16 %v229
      %v672 = vunpack.c.h.b16 %v229
      %v673 = vunpack.c.l.b16 %v230
      %v674 = vunpack.c.h.b16 %v230
      %v675 = vunpack.c.l.b16 %v231
      %v676 = vunpack.c.h.b16 %v231
      %v677 = vunpack.c.l.b16 %v232
      %v678 = vunpack.c.h.b16 %v232
      %v679 = vunpack.c.l.b16 %v233
      %v680 = vunpack.c.h.b16 %v233
      %v681 = vunpack.c.l.b16 %v234
      %v682 = vunpack.c.h.b16 %v234
      %v683 = vunpack.c.l.b16 %v235
      %v684 = vunpack.c.h.b16 %v235
      %v685 = vunpack.c.l.b16 %v236
      %v686 = vunpack.c.h.b16 %v236
      %v687 = vunpack.c.l.b16 %v237
      %v688 = vunpack.c.h.b16 %v237
      %v689 = vunpack.c.l.b16 %v238
      %v690 = vunpack.c.h.b16 %v238
      %v691 = vunpack.c.l.b16 %v239
      %v692 = vunpack.c.h.b16 %v239
      %v693 = vunpack.c.l.b16 %v240
      %v694 = vunpack.c.h.b16 %v240
      %v695 = vunpack.c.l.b16 %v241
      %v696 = vunpack.c.h.b16 %v241
      %v697 = vpack.c.b16 %v585, %v569
      %v698 = vpack.c.b16 %v586, %v570
      %v699 = vpack.c.b16 %v587, %v571
      %v700 = vpack.c.b16 %v588, %v572
      %v701 = vpack.c.b16 %v589, %v573
      %v702 = vpack.c.b16 %v590, %v574
      %v703 = vpack.c.b16 %v591, %v575
      %v704 = vpack.c.b16 %v592, %v576
      %v705 = vpack.c.b16 %v593, %v577
      %v706 = vpack.c.b16 %v594, %v578
      %v707 = vpack.c.b16 %v595, %v579
      %v708 = vpack.c.b16 %v596, %v580
      %v709 = vpack.c.b16 %v597, %v581
      %v710 = vpack.c.b16 %v598, %v582
      %v711 = vpack.c.b16 %v599, %v583
      %v712 = vpack.c.b16 %v600, %v584
      %v713 = vpack.c.b16 %v617, %v601
      %v714 = vpack.c.b16 %v618, %v602
      %v715 = vpack.c.b16 %v619, %v603
      %v716 = vpack.c.b16 %v620, %v604
      %v717 = vpack.c.b16 %v621, %v605
      %v718 = vpack.c.b16 %v622, %v606
      %v719 = vpack.c.b16 %v623, %v607
      %v720 = vpack.c.b16 %v624, %v608
      %v721 = vpack.c.b16 %v625, %v609
      %v722 = vpack.c.b16 %v626, %v610
      %v723 = vpack.c.b16 %v627, %v611
      %v724 = vpack.c.b16 %v628, %v612
      %v725 = vpack.c.b16 %v629, %v613
      %v726 = vpack.c.b16 %v630, %v614
      %v727 = vpack.c.b16 %v631, %v615
      %v728 = vpack.c.b16 %v632, %v616
      %v729 = vpack.c.b16 %v649, %v633
      %v730 = vpack.c.b16 %v650, %v634
      %v731 = vpack.c.b16 %v651, %v635
      %v732 = vpack.c.b16 %v652, %v636
      %v733 = vpack.c.b16 %v653, %v637
      %v734 = vpack.c.b16 %v654, %v638
      %v735 = vpack.c.b16 %v655, %v639
      %v736 = vpack.c.b16 %v656, %v640
      %v737 = vpack.c.b16 %v657, %v641
      %v738 = vpack.c.b16 %v658, %v642
      %v739 = vpack.c.b16 %v659, %v643
      %v740 = vpack.c.b16 %v660, %v644
      %v741 = vpack.c.b16 %v661, %v645
      %v742 = vpack.c.b16 %v662, %v646
      %v743 = vpack.c.b16 %v663, %v647
      %v744 = vpack.c.b16 %v664, %v648
      %v745 = vpack.c.b16 %v681, %v665
      %v746 = vpack.c.b16 %v682, %v666
      %v747 = vpack.c.b16 %v683, %v667
      %v748 = vpack.c.b16 %v684, %v668
      %v749 = vpack.c.b16 %v685, %v669
      %v750 = vpack.c.b16 %v686, %v670
      %v751 = vpack.c.b16 %v687, %v671
      %v752 = vpack.c.b16 %v688, %v672
      %v753 = vpack.c.b16 %v689, %v673
      %v754 = vpack.c.b16 %v690, %v674
      %v755 = vpack.c.b16 %v691, %v675
      %v756 = vpack.c.b16 %v692, %v676
      %v757 = vpack.c.b16 %v693, %v677
      %v758 = vpack.c.b16 %v694, %v678
      %v759 = vpack.c.b16 %v695, %v679
      %v760 = vpack.c.b16 %v696, %v680
      %v1081 = vunpack.c.l.b16 %v242
      %v1082 = vunpack.c.l.b16 %v243
      %v1083 = vunpack.c.l.b16 %v244
      %v1084 = vunpack.c.l.b16 %v245
      %v1085 = vunpack.c.l.b16 %v246
      %v1086 = vunpack.c.l.b16 %v247
      %v1087 = vunpack.c.l.b16 %v248
      %v1088 = vunpack.c.l.b16 %v249
      %v1089 = vunpack.c.l.b16 %v250
      %v1090 = vunpack.c.l.b16 %v251
      %v1091 = vunpack.c.l.b16 %v252
      %v1092 = vunpack.c.l.b16 %v253
      %v1093 = vunpack.c.l.b16 %v254
      %v1094 = vunpack.c.l.b16 %v255
      %v1095 = vunpack.c.l.b16 %v256
      %v1096 = vunpack.c.l.b16 %v257
      %v1097 = vunpack.c.l.b16 %v258
      %v1098 = vunpack.c.l.b16 %v259
      %v1099 = vunpack.c.l.b16 %v260
      %v1100 = vunpack.c.l.b16 %v261
      %v1101 = vunpack.c.l.b16 %v262
      %v1102 = vunpack.c.l.b16 %v263
      %v1103 = vunpack.c.l.b16 %v264
      %v1104 = vunpack.c.l.b16 %v265
      %v1105 = vunpack.c.l.b16 %v266
      %v1106 = vunpack.c.l.b16 %v267
      %v1107 = vunpack.c.l.b16 %v268
      %v1108 = vunpack.c.l.b16 %v269
      %v1109 = vunpack.c.l.b16 %v270
      %v1110 = vunpack.c.l.b16 %v271
      %v1111 = vunpack.c.l.b16 %v272
      %v1112 = vunpack.c.l.b16 %v273
      %v1113 = vunpack.c.l.b16 %v274
      %v1114 = vunpack.c.l.b16 %v275
      %v1115 = vunpack.c.l.b16 %v276
      %v1116 = vunpack.c.l.b16 %v277
      %v1117 = vunpack.c.l.b16 %v278
      %v1118 = vunpack.c.l.b16 %v279
      %v1119 = vunpack.c.l.b16 %v280
      %v1120 = vunpack.c.l.b16 %v281
      %v1121 = vunpack.c.l.b16 %v282
      %v1122 = vunpack.c.l.b16 %v283
      %v1123 = vunpack.c.l.b16 %v284
      %v1124 = vunpack.c.l.b16 %v285
      %v1125 = vunpack.c.l.b16 %v286
      %v1126 = vunpack.c.l.b16 %v287
      %v1127 = vunpack.c.l.b16 %v288
      %v1128 = vunpack.c.l.b16 %v289
      %v1129 = vunpack.c.l.b16 %v290
      %v1130 = vunpack.c.l.b16 %v291
      %v1131 = vunpack.c.l.b16 %v292
      %v1132 = vunpack.c.l.b16 %v293
      %v1133 = vunpack.c.l.b16 %v294
      %v1134 = vunpack.c.l.b16 %v295
      %v1135 = vunpack.c.l.b16 %v296
      %v1136 = vunpack.c.l.b16 %v297
      %v1137 = vunpack.c.l.b16 %v298
      %v1138 = vunpack.c.l.b16 %v299
      %v1139 = vunpack.c.l.b16 %v300
      %v1140 = vunpack.c.l.b16 %v301
      %v1141 = vunpack.c.l.b16 %v302
      %v1142 = vunpack.c.l.b16 %v303
      %v1143 = vunpack.c.l.b16 %v304
      %v1144 = vunpack.c.l.b16 %v305
      %v1145 = vunpack.c.l.b16 %v306
      %v1146 = vunpack.c.l.b16 %v307
      %v1147 = vunpack.c.l.b16 %v308
      %v1148 = vunpack.c.l.b16 %v309
      %v1149 = vunpack.c.l.b16 %v310
      %v1150 = vunpack.c.l.b16 %v311
      %v1151 = vunpack.c.l.b16 %v312
      %v1152 = vunpack.c.l.b16 %v313
      %v1153 = vunpack.c.l.b16 %v314
      %v1154 = vunpack.c.l.b16 %v315
      %v1155 = vunpack.c.l.b16 %v316
      %v1156 = vunpack.c.l.b16 %v317
      %v1157 = vunpack.c.l.b16 %v318
      %v1158 = vunpack.c.l.b16 %v319
      %v1159 = vunpack.c.l.b16 %v320
      %v1160 = vunpack.c.l.b16 %v321
      %v1161 = vunpack.c.l.b16 %v322
      %v1162 = vunpack.c.l.b16 %v323
      %v1163 = vunpack.c.l.b16 %v324
      %v1164 = vunpack.c.l.b16 %v325
      %v1165 = vunpack.c.l.b16 %v326
      %v1166 = vunpack.c.l.b16 %v327
      %v1167 = vunpack.c.l.b16 %v328
      %v1168 = vunpack.c.l.b16 %v329
      %v1169 = vunpack.c.l.b16 %v330
      %v1170 = vunpack.c.l.b16 %v331
      %v1171 = vunpack.c.l.b16 %v332
      %v1172 = vunpack.c.l.b16 %v333
      %v1173 = vunpack.c.l.b16 %v334
      %v1174 = vunpack.c.l.b16 %v335
      %v1175 = vunpack.c.l.b16 %v336
      %v1176 = vunpack.c.l.b16 %v337
      %v1177 = vunpack.c.l.b16 %v338
      %v1178 = vunpack.c.l.b16 %v339
      %v1179 = vunpack.c.l.b16 %v340
      %v1180 = vunpack.c.l.b16 %v341
      %v1181 = vunpack.c.l.b16 %v342
      %v1182 = vunpack.c.l.b16 %v343
      %v1183 = vunpack.c.l.b16 %v344
      %v1184 = vunpack.c.l.b16 %v345
      %v1185 = vunpack.c.l.b16 %v346
      %v1186 = vunpack.c.l.b16 %v347
      %v1187 = vunpack.c.l.b16 %v348
      %v1188 = vunpack.c.l.b16 %v349
      %v1189 = vunpack.c.l.b16 %v350
      %v1190 = vunpack.c.l.b16 %v351
      %v1191 = vunpack.c.l.b16 %v352
      %v1192 = vunpack.c.l.b16 %v353
      %v1193 = vunpack.c.l.b16 %v354
      %v1194 = vunpack.c.l.b16 %v355
      %v1195 = vunpack.c.l.b16 %v356
      %v1196 = vunpack.c.l.b16 %v357
      %v1197 = vunpack.c.l.b16 %v358
      %v1198 = vunpack.c.l.b16 %v359
      %v1199 = vunpack.c.l.b16 %v360
      %v1200 = vunpack.c.l.b16 %v361
      %v1201 = vunpack.c.l.b16 %v362
      %v1202 = vunpack.c.l.b16 %v363
      %v1203 = vunpack.c.l.b16 %v364
      %v1204 = vunpack.c.l.b16 %v365
      %v1205 = vunpack.c.l.b16 %v366
      %v1206 = vunpack.c.l.b16 %v367
      %v1207 = vunpack.c.l.b16 %v368
      %v1208 = vunpack.c.l.b16 %v369
      %v1209 = vunpack.c.l.b16 %v370
      %v1210 = vunpack.c.l.b16 %v371
      %v1211 = vunpack.c.l.b16 %v372
      %v1212 = vunpack.c.l.b16 %v373
      %v1213 = vunpack.c.l.b16 %v374
      %v1214 = vunpack.c.l.b16 %v375
      %v1215 = vunpack.c.l.b16 %v376
      %v1216 = vunpack.c.l.b16 %v377
      %v1217 = vunpack.c.l.b16 %v378
      %v1218 = vunpack.c.l.b16 %v379
      %v1219 = vunpack.c.l.b16 %v380
      %v1220 = vunpack.c.l.b16 %v381
      %v1221 = vunpack.c.l.b16 %v382
      %v1222 = vunpack.c.l.b16 %v383
      %v1223 = vunpack.c.l.b16 %v384
      %v1224 = vunpack.c.l.b16 %v385
      %v1225 = vunpack.c.l.b16 %v386
      %v1226 = vunpack.c.l.b16 %v387
      %v1227 = vunpack.c.l.b16 %v388
      %v1228 = vunpack.c.l.b16 %v389
      %v1229 = vunpack.c.l.b16 %v390
      %v1230 = vunpack.c.l.b16 %v391
      %v1231 = vunpack.c.l.b16 %v392
      %v1232 = vunpack.c.l.b16 %v393
      %v1233 = vunpack.c.l.b16 %v394
      %v1234 = vunpack.c.l.b16 %v395
      %v1235 = vunpack.c.l.b16 %v396
      %v1236 = vunpack.c.l.b16 %v397
      %v1237 = vunpack.c.l.b16 %v398
      %v1238 = vunpack.c.l.b16 %v399
      %v1239 = vunpack.c.l.b16 %v400
      %v1240 = vunpack.c.l.b16 %v401
      %v1241 = vunpack.c.l.b16 %v402
      %v1242 = vunpack.c.l.b16 %v403
      %v1243 = vunpack.c.l.b16 %v404
      %v1244 = vunpack.c.l.b16 %v405
      %v1245 = vunpack.c.l.b16 %v406
      %v1246 = vunpack.c.l.b16 %v407
      %v1247 = vunpack.c.l.b16 %v408
      %v1248 = vunpack.c.l.b16 %v409
      %v1249 = vunpack.c.l.b16 %v410
      %v1250 = vunpack.c.l.b16 %v411
      %v1251 = vunpack.c.l.b16 %v412
      %v1252 = vunpack.c.l.b16 %v413
      %v1253 = vunpack.c.l.b16 %v414
      %v1254 = vunpack.c.l.b16 %v415
      %v1255 = vunpack.c.l.b16 %v416
      %v1256 = vunpack.c.l.b16 %v417
      %v1257 = vunpack.c.l.b16 %v418
      %v1258 = vunpack.c.l.b16 %v419
      %v1259 = vunpack.c.l.b16 %v420
      %v1260 = vunpack.c.l.b16 %v421
      %v1261 = vunpack.c.l.b16 %v422
      %v1262 = vunpack.c.l.b16 %v423
      %v1263 = vunpack.c.l.b16 %v424
      %v1264 = vunpack.c.l.b16 %v425
      %v1265 = vunpack.c.l.b16 %v426
      %v1266 = vunpack.c.l.b16 %v427
      %v1267 = vunpack.c.l.b16 %v428
      %v1268 = vunpack.c.l.b16 %v429
      %v1269 = vunpack.c.l.b16 %v430
      %v1270 = vunpack.c.l.b16 %v431
      %v1271 = vunpack.c.l.b16 %v432
      %v1272 = vunpack.c.l.b16 %v433
      %v1273 = vunpack.c.l.b16 %v434
      %v1274 = vunpack.c.l.b16 %v435
      %v1275 = vunpack.c.l.b16 %v436
      %v1276 = vunpack.c.l.b16 %v437
      %v1277 = vunpack.c.l.b16 %v438
      %v1278 = vunpack.c.l.b16 %v439
      %v1279 = vunpack.c.l.b16 %v440
      %v1280 = vunpack.c.l.b16 %v441
      %v1281 = vunpack.c.l.b16 %v442
      %v1282 = vunpack.c.l.b16 %v443
      %v1283 = vunpack.c.l.b16 %v444
      %v1284 = vunpack.c.l.b16 %v445
      %v1285 = vunpack.c.l.b16 %v446
      %v1286 = vunpack.c.l.b16 %v447
      %v1287 = vunpack.c.l.b16 %v448
      %v1288 = vunpack.c.l.b16 %v449
      %v1289 = vunpack.c.l.b16 %v450
      %v1290 = vunpack.c.l.b16 %v451
      %v1291 = vunpack.c.l.b16 %v452
      %v1292 = vunpack.c.l.b16 %v453
      %v1293 = vunpack.c.l.b16 %v454
      %v1294 = vunpack.c.l.b16 %v455
      %v1295 = vunpack.c.l.b16 %v456
      %v1296 = vunpack.c.l.b16 %v457
      %v1297 = vunpack.c.l.b16 %v458
      %v1298 = vunpack.c.l.b16 %v459
      %v1299 = vunpack.c.l.b16 %v460
      %v1300 = vunpack.c.l.b16 %v461
      %v1301 = vunpack.c.l.b16 %v462
      %v1302 = vunpack.c.l.b16 %v463
      %v1303 = vunpack.c.l.b16 %v464
      %v1304 = vunpack.c.l.b16 %v465
      %v1305 = vunpack.c.l.b16 %v466
      %v1306 = vunpack.c.l.b16 %v467
      %v1307 = vunpack.c.l.b16 %v468
      %v1308 = vunpack.c.l.b16 %v469
      %v1309 = vunpack.c.l.b16 %v470
      %v1310 = vunpack.c.l.b16 %v471
      %v1311 = vunpack.c.l.b16 %v472
      %v1312 = vunpack.c.l.b16 %v473
      %v1313 = vunpack.c.l.b16 %v474
      %v1314 = vunpack.c.l.b16 %v475
      %v1315 = vunpack.c.l.b16 %v476
      %v1316 = vunpack.c.l.b16 %v477
      %v1317 = vunpack.c.l.b16 %v478
      %v1318 = vunpack.c.l.b16 %v479
      %v1319 = vunpack.c.l.b16 %v480
      %v1320 = vunpack.c.l.b16 %v481
      %v1321 = vunpack.c.l.b16 %v482
      %v1322 = vunpack.c.l.b16 %v483
      %v1323 = vunpack.c.l.b16 %v484
      %v1324 = vunpack.c.l.b16 %v485
      %v1325 = vunpack.c.l.b16 %v486
      %v1326 = vunpack.c.l.b16 %v487
      %v1327 = vunpack.c.l.b16 %v488
      %v1328 = vunpack.c.l.b16 %v489
      %v1329 = vunpack.c.l.b16 %v490
      %v1330 = vunpack.c.l.b16 %v491
      %v1331 = vunpack.c.l.b16 %v492
      %v1332 = vunpack.c.l.b16 %v493
      %v1333 = vunpack.c.l.b16 %v494
      %v1334 = vunpack.c.l.b16 %v495
      %v1335 = vunpack.c.l.b16 %v496
      %v1336 = vunpack.c.l.b16 %v497
      %v1337 = vpack.c.b16 %v1082, %v1081
      %v1338 = vpack.c.b16 %v1084, %v1083
      %v1339 = vpack.c.b16 %v1086, %v1085
      %v1340 = vpack.c.b16 %v1088, %v1087
      %v1341 = vpack.c.b16 %v1090, %v1089
      %v1342 = vpack.c.b16 %v1092, %v1091
      %v1343 = vpack.c.b16 %v1094, %v1093
      %v1344 = vpack.c.b16 %v1096, %v1095
      %v1345 = vpack.c.b16 %v1098, %v1097
      %v1346 = vpack.c.b16 %v1100, %v1099
      %v1347 = vpack.c.b16 %v1102, %v1101
      %v1348 = vpack.c.b16 %v1104, %v1103
      %v1349 = vpack.c.b16 %v1106, %v1105
      %v1350 = vpack.c.b16 %v1108, %v1107
      %v1351 = vpack.c.b16 %v1110, %v1109
      %v1352 = vpack.c.b16 %v1112, %v1111
      %v1353 = vpack.c.b16 %v1114, %v1113
      %v1354 = vpack.c.b16 %v1116, %v1115
      %v1355 = vpack.c.b16 %v1118, %v1117
      %v1356 = vpack.c.b16 %v1120, %v1119
      %v1357 = vpack.c.b16 %v1122, %v1121
      %v1358 = vpack.c.b16 %v1124, %v1123
      %v1359 = vpack.c.b16 %v1126, %v1125
      %v1360 = vpack.c.b16 %v1128, %v1127
      %v1361 = vpack.c.b16 %v1130, %v1129
      %v1362 = vpack.c.b16 %v1132, %v1131
      %v1363 = vpack.c.b16 %v1134, %v1133
      %v1364 = vpack.c.b16 %v1136, %v1135
      %v1365 = vpack.c.b16 %v1138, %v1137
      %v1366 = vpack.c.b16 %v1140, %v1139
      %v1367 = vpack.c.b16 %v1142, %v1141
      %v1368 = vpack.c.b16 %v1144, %v1143
      %v1369 = vpack.c.b16 %v1146, %v1145
      %v1370 = vpack.c.b16 %v1148, %v1147
      %v1371 = vpack.c.b16 %v1150, %v1149
      %v1372 = vpack.c.b16 %v1152, %v1151
      %v1373 = vpack.c.b16 %v1154, %v1153
      %v1374 = vpack.c.b16 %v1156, %v1155
      %v1375 = vpack.c.b16 %v1158, %v1157
      %v1376 = vpack.c.b16 %v1160, %v1159
      %v1377 = vpack.c.b16 %v1162, %v1161
      %v1378 = vpack.c.b16 %v1164, %v1163
      %v1379 = vpack.c.b16 %v1166, %v1165
      %v1380 = vpack.c.b16 %v1168, %v1167
      %v1381 = vpack.c.b16 %v1170, %v1169
      %v1382 = vpack.c.b16 %v1172, %v1171
      %v1383 = vpack.c.b16 %v1174, %v1173
      %v1384 = vpack.c.b16 %v1176, %v1175
      %v1385 = vpack.c.b16 %v1178, %v1177
      %v1386 = vpack.c.b16 %v1180, %v1179
      %v1387 = vpack.c.b16 %v1182, %v1181
      %v1388 = vpack.c.b16 %v1184, %v1183
      %v1389 = vpack.c.b16 %v1186, %v1185
      %v1390 = vpack.c.b16 %v1188, %v1187
      %v1391 = vpack.c.b16 %v1190, %v1189
      %v1392 = vpack.c.b16 %v1192, %v1191
      %v1393 = vpack.c.b16 %v1194, %v1193
      %v1394 = vpack.c.b16 %v1196, %v1195
      %v1395 = vpack.c.b16 %v1198, %v1197
      %v1396 = vpack.c.b16 %v1200, %v1199
      %v1397 = vpack.c.b16 %v1202, %v1201
      %v1398 = vpack.c.b16 %v1204, %v1203
      %v1399 = vpack.c.b16 %v1206, %v1205
      %v1400 = vpack.c.b16 %v1208, %v1207
      %v1401 = vpack.c.b16 %v1210, %v1209
      %v1402 = vpack.c.b16 %v1212, %v1211
      %v1403 = vpack.c.b16 %v1214, %v1213
      %v1404 = vpack.c.b16 %v1216, %v1215
      %v1405 = vpack.c.b16 %v1218, %v1217
      %v1406 = vpack.c.b16 %v1220, %v1219
      %v1407 = vpack.c.b16 %v1222, %v1221
      %v1408 = vpack.c.b16 %v1224, %v1223
      %v1409 = vpack.c.b16 %v1226, %v1225
      %v1410 = vpack.c.b16 %v1228, %v1227
      %v1411 = vpack.c.b16 %v1230, %v1229
      %v1412 = vpack.c.b16 %v1232, %v1231
      %v1413 = vpack.c.b16 %v1234, %v1233
      %v1414 = vpack.c.b16 %v1236, %v1235
      %v1415 = vpack.c.b16 %v1238, %v1237
      %v1416 = vpack.c.b16 %v1240, %v1239
      %v1417 = vpack.c.b16 %v1242, %v1241
      %v1418 = vpack.c.b16 %v1244, %v1243
      %v1419 = vpack.c.b16 %v1246, %v1245
      %v1420 = vpack.c.b16 %v1248, %v1247
      %v1421 = vpack.c.b16 %v1250, %v1249
      %v1422 = vpack.c.b16 %v1252, %v1251
      %v1423 = vpack.c.b16 %v1254, %v1253
      %v1424 = vpack.c.b16 %v1256, %v1255
      %v1425 = vpack.c.b16 %v1258, %v1257
      %v1426 = vpack.c.b16 %v1260, %v1259
      %v1427 = vpack.c.b16 %v1262, %v1261
      %v1428 = vpack.c.b16 %v1264, %v1263
      %v1429 = vpack.c.b16 %v1266, %v1265
      %v1430 = vpack.c.b16 %v1268, %v1267
      %v1431 = vpack.c.b16 %v1270, %v1269
      %v1432 = vpack.c.b16 %v1272, %v1271
      %v1433 = vpack.c.b16 %v1274, %v1273
      %v1434 = vpack.c.b16 %v1276, %v1275
      %v1435 = vpack.c.b16 %v1278, %v1277
      %v1436 = vpack.c.b16 %v1280, %v1279
      %v1437 = vpack.c.b16 %v1282, %v1281
      %v1438 = vpack.c.b16 %v1284, %v1283
      %v1439 = vpack.c.b16 %v1286, %v1285
      %v1440 = vpack.c.b16 %v1288, %v1287
      %v1441 = vpack.c.b16 %v1290, %v1289
      %v1442 = vpack.c.b16 %v1292, %v1291
      %v1443 = vpack.c.b16 %v1294, %v1293
      %v1444 = vpack.c.b16 %v1296, %v1295
      %v1445 = vpack.c.b16 %v1298, %v1297
      %v1446 = vpack.c.b16 %v1300, %v1299
      %v1447 = vpack.c.b16 %v1302, %v1301
      %v1448 = vpack.c.b16 %v1304, %v1303
      %v1449 = vpack.c.b16 %v1306, %v1305
      %v1450 = vpack.c.b16 %v1308, %v1307
      %v1451 = vpack.c.b16 %v1310, %v1309
      %v1452 = vpack.c.b16 %v1312, %v1311
      %v1453 = vpack.c.b16 %v1314, %v1313
      %v1454 = vpack.c.b16 %v1316, %v1315
      %v1455 = vpack.c.b16 %v1318, %v1317
      %v1456 = vpack.c.b16 %v1320, %v1319
      %v1457 = vpack.c.b16 %v1322, %v1321
      %v1458 = vpack.c.b16 %v1324, %v1323
      %v1459 = vpack.c.b16 %v1326, %v1325
      %v1460 = vpack.c.b16 %v1328, %v1327
      %v1461 = vpack.c.b16 %v1330, %v1329
      %v1462 = vpack.c.b16 %v1332, %v1331
      %v1463 = vpack.c.b16 %v1334, %v1333
      %v1464 = vpack.c.b16 %v1336, %v1335
      %1593 = vmatprep.subr.bf16.mxu0 0
      %1594 = vmatpush1.bf16.msra.mxu0 %v1344
      %1595 = vmatprep.subr.bf16.mxu0 0
      %1596 = vmatpush1.bf16.msra.mxu0 %v1343
      %1597 = vmatprep.subr.bf16.mxu0 0
      %1598 = vmatpush1.bf16.msra.mxu0 %v1342
      %1599 = vmatprep.subr.bf16.mxu0 0
      %1600 = vmatpush1.bf16.msra.mxu0 %v1341
      %1601 = vmatprep.subr.bf16.mxu0 0
      %1602 = vmatpush1.bf16.msra.mxu0 %v1340
      %1603 = vmatprep.subr.bf16.mxu0 0
      %1604 = vmatpush1.bf16.msra.mxu0 %v1339
      %1605 = vmatprep.subr.bf16.mxu0 0
      %1606 = vmatpush1.bf16.msra.mxu0 %v1338
      %1607 = vmatprep.subr.bf16.mxu0 0
      %1608 = vmatpush1.bf16.msra.mxu0 %v1337
      %1609 = vmatprep.subr.bf16.mxu0 0
      %1610 = vmatpush2.bf16.msra.mxu0 %v1352
      %1611 = vmatprep.subr.bf16.mxu0 0
      %1612 = vmatpush2.bf16.msra.mxu0 %v1351
      %1613 = vmatprep.subr.bf16.mxu0 0
      %1614 = vmatpush2.bf16.msra.mxu0 %v1350
      %1615 = vmatprep.subr.bf16.mxu0 0
      %1616 = vmatpush2.bf16.msra.mxu0 %v1349
      %1617 = vmatprep.subr.bf16.mxu0 0
      %1618 = vmatpush2.bf16.msra.mxu0 %v1348
      %1619 = vmatprep.subr.bf16.mxu0 0
      %1620 = vmatpush2.bf16.msra.mxu0 %v1347
      %1621 = vmatprep.subr.bf16.mxu0 0
      %1622 = vmatpush2.bf16.msra.mxu0 %v1346
      %1623 = vmatprep.subr.bf16.mxu0 0
      %1624 = vmatpush2.bf16.msra.mxu0 %v1345
      %1625 = vmatprep.mubr.bf16.mxu0 %v698
      %1626 = vmatmul.mubr.bf16.gmra.mxu0 %v697
      %v1627 = vpop.f32.mrf.mxu0
      %v1628 = vadd.f32 %v503, %v1627
      %v1629 = vpop.f32.mrf.mxu0
      %v1630 = vpop.f32.mrf.mxu0
      %v1631 = vadd.f32 %v503, %v1630
      %v1632 = vpop.f32.mrf.mxu0
      %1633 = vmatprep.mubr.bf16.mxu0 %v714
      %1634 = vmatmul.mubr.bf16.gmra.mxu0 %v713
      %v1635 = vpop.f32.mrf.mxu0
      %v1636 = vadd.f32 %v503, %v1635
      %v1637 = vpop.f32.mrf.mxu0
      %v1638 = vpop.f32.mrf.mxu0
      %v1639 = vadd.f32 %v503, %v1638
      %v1640 = vpop.f32.mrf.mxu0
      %1641 = vmatprep.mubr.bf16.mxu0 %v730
      %1642 = vmatmul.mubr.bf16.gmra.mxu0 %v729
      %v1643 = vpop.f32.mrf.mxu0
      %v1644 = vadd.f32 %v503, %v1643
      %v1645 = vpop.f32.mrf.mxu0
      %v1646 = vpop.f32.mrf.mxu0
      %v1647 = vadd.f32 %v503, %v1646
      %v1648 = vpop.f32.mrf.mxu0
      %1649 = vmatprep.mubr.bf16.mxu0 %v746
      %1650 = vmatmul.mubr.bf16.gmra.mxu0 %v745
      %v1651 = vpop.f32.mrf.mxu0
      %v1652 = vadd.f32 %v503, %v1651
      %v1653 = vpop.f32.mrf.mxu0
      %v1654 = vpop.f32.mrf.mxu0
      %v1655 = vadd.f32 %v503, %v1654
      %v1656 = vpop.f32.mrf.mxu0
      %1657 = vdwg.mxu0
      %1658 = vmatprep.subr.bf16.mxu0 0
      %1659 = vmatpush1.bf16.msra.mxu0 %v1360
      %1660 = vmatprep.subr.bf16.mxu0 0
      %1661 = vmatpush1.bf16.msra.mxu0 %v1359
      %1662 = vmatprep.subr.bf16.mxu0 0
      %1663 = vmatpush1.bf16.msra.mxu0 %v1358
      %1664 = vmatprep.subr.bf16.mxu0 0
      %1665 = vmatpush1.bf16.msra.mxu0 %v1357
      %1666 = vmatprep.subr.bf16.mxu0 0
      %1667 = vmatpush1.bf16.msra.mxu0 %v1356
      %1668 = vmatprep.subr.bf16.mxu0 0
      %1669 = vmatpush1.bf16.msra.mxu0 %v1355
      %1670 = vmatprep.subr.bf16.mxu0 0
      %1671 = vmatpush1.bf16.msra.mxu0 %v1354
      %1672 = vmatprep.subr.bf16.mxu0 0
      %1673 = vmatpush1.bf16.msra.mxu0 %v1353
      %1674 = vmatprep.subr.bf16.mxu0 0
      %1675 = vmatpush2.bf16.msra.mxu0 %v1368
      %1676 = vmatprep.subr.bf16.mxu0 0
      %1677 = vmatpush2.bf16.msra.mxu0 %v1367
      %1678 = vmatprep.subr.bf16.mxu0 0
      %1679 = vmatpush2.bf16.msra.mxu0 %v1366
      %1680 = vmatprep.subr.bf16.mxu0 0
      %1681 = vmatpush2.bf16.msra.mxu0 %v1365
      %1682 = vmatprep.subr.bf16.mxu0 0
      %1683 = vmatpush2.bf16.msra.mxu0 %v1364
      %1684 = vmatprep.subr.bf16.mxu0 0
      %1685 = vmatpush2.bf16.msra.mxu0 %v1363
      %1686 = vmatprep.subr.bf16.mxu0 0
      %1687 = vmatpush2.bf16.msra.mxu0 %v1362
      %1688 = vmatprep.subr.bf16.mxu0 0
      %1689 = vmatpush2.bf16.msra.mxu0 %v1361
      %1690 = vmatprep.mubr.bf16.mxu0 %v700
      %1691 = vmatmul.mubr.bf16.gmra.mxu0 %v699
      %v1692 = vpop.f32.mrf.mxu0
      %v1693 = vadd.f32 %v1628, %v1692
      %v1694 = vpop.f32.mrf.mxu0
      %v1695 = vpop.f32.mrf.mxu0
      %v1696 = vadd.f32 %v1631, %v1695
      %v1697 = vpop.f32.mrf.mxu0
      %1698 = vmatprep.mubr.bf16.mxu0 %v716
      %1699 = vmatmul.mubr.bf16.gmra.mxu0 %v715
      %v1700 = vpop.f32.mrf.mxu0
      %v1701 = vadd.f32 %v1636, %v1700
      %v1702 = vpop.f32.mrf.mxu0
      %v1703 = vpop.f32.mrf.mxu0
      %v1704 = vadd.f32 %v1639, %v1703
      %v1705 = vpop.f32.mrf.mxu0
      %1706 = vmatprep.mubr.bf16.mxu0 %v732
      %1707 = vmatmul.mubr.bf16.gmra.mxu0 %v731
      %v1708 = vpop.f32.mrf.mxu0
      %v1709 = vadd.f32 %v1644, %v1708
      %v1710 = vpop.f32.mrf.mxu0
      %v1711 = vpop.f32.mrf.mxu0
      %v1712 = vadd.f32 %v1647, %v1711
      %v1713 = vpop.f32.mrf.mxu0
      %1714 = vmatprep.mubr.bf16.mxu0 %v748
      %1715 = vmatmul.mubr.bf16.gmra.mxu0 %v747
      %v1716 = vpop.f32.mrf.mxu0
      %v1717 = vadd.f32 %v1652, %v1716
      %v1718 = vpop.f32.mrf.mxu0
      %v1719 = vpop.f32.mrf.mxu0
      %v1720 = vadd.f32 %v1655, %v1719
      %v1721 = vpop.f32.mrf.mxu0
      %1722 = vdwg.mxu0
      %1723 = vmatprep.subr.bf16.mxu0 0
      %1724 = vmatpush1.bf16.msra.mxu0 %v1376
      %1725 = vmatprep.subr.bf16.mxu0 0
      %1726 = vmatpush1.bf16.msra.mxu0 %v1375
      %1727 = vmatprep.subr.bf16.mxu0 0
      %1728 = vmatpush1.bf16.msra.mxu0 %v1374
      %1729 = vmatprep.subr.bf16.mxu0 0
      %1730 = vmatpush1.bf16.msra.mxu0 %v1373
      %1731 = vmatprep.subr.bf16.mxu0 0
      %1732 = vmatpush1.bf16.msra.mxu0 %v1372
      %1733 = vmatprep.subr.bf16.mxu0 0
      %1734 = vmatpush1.bf16.msra.mxu0 %v1371
      %1735 = vmatprep.subr.bf16.mxu0 0
      %1736 = vmatpush1.bf16.msra.mxu0 %v1370
      %1737 = vmatprep.subr.bf16.mxu0 0
      %1738 = vmatpush1.bf16.msra.mxu0 %v1369
      %1739 = vmatprep.subr.bf16.mxu0 0
      %1740 = vmatpush2.bf16.msra.mxu0 %v1384
      %1741 = vmatprep.subr.bf16.mxu0 0
      %1742 = vmatpush2.bf16.msra.mxu0 %v1383
      %1743 = vmatprep.subr.bf16.mxu0 0
      %1744 = vmatpush2.bf16.msra.mxu0 %v1382
      %1745 = vmatprep.subr.bf16.mxu0 0
      %1746 = vmatpush2.bf16.msra.mxu0 %v1381
      %1747 = vmatprep.subr.bf16.mxu0 0
      %1748 = vmatpush2.bf16.msra.mxu0 %v1380
      %1749 = vmatprep.subr.bf16.mxu0 0
      %1750 = vmatpush2.bf16.msra.mxu0 %v1379
      %1751 = vmatprep.subr.bf16.mxu0 0
      %1752 = vmatpush2.bf16.msra.mxu0 %v1378
      %1753 = vmatprep.subr.bf16.mxu0 0
      %1754 = vmatpush2.bf16.msra.mxu0 %v1377
      %1755 = vmatprep.mubr.bf16.mxu0 %v702
      %1756 = vmatmul.mubr.bf16.gmra.mxu0 %v701
      %v1757 = vpop.f32.mrf.mxu0
      %v1758 = vadd.f32 %v1693, %v1757
      %v1759 = vpop.f32.mrf.mxu0
      %v1760 = vpop.f32.mrf.mxu0
      %v1761 = vadd.f32 %v1696, %v1760
      %v1762 = vpop.f32.mrf.mxu0
      %1763 = vmatprep.mubr.bf16.mxu0 %v718
      %1764 = vmatmul.mubr.bf16.gmra.mxu0 %v717
      %v1765 = vpop.f32.mrf.mxu0
      %v1766 = vadd.f32 %v1701, %v1765
      %v1767 = vpop.f32.mrf.mxu0
      %v1768 = vpop.f32.mrf.mxu0
      %v1769 = vadd.f32 %v1704, %v1768
      %v1770 = vpop.f32.mrf.mxu0
      %1771 = vmatprep.mubr.bf16.mxu0 %v734
      %1772 = vmatmul.mubr.bf16.gmra.mxu0 %v733
      %v1773 = vpop.f32.mrf.mxu0
      %v1774 = vadd.f32 %v1709, %v1773
      %v1775 = vpop.f32.mrf.mxu0
      %v1776 = vpop.f32.mrf.mxu0
      %v1777 = vadd.f32 %v1712, %v1776
      %v1778 = vpop.f32.mrf.mxu0
      %1779 = vmatprep.mubr.bf16.mxu0 %v750
      %1780 = vmatmul.mubr.bf16.gmra.mxu0 %v749
      %v1781 = vpop.f32.mrf.mxu0
      %v1782 = vadd.f32 %v1717, %v1781
      %v1783 = vpop.f32.mrf.mxu0
      %v1784 = vpop.f32.mrf.mxu0
      %v1785 = vadd.f32 %v1720, %v1784
      %v1786 = vpop.f32.mrf.mxu0
      %1787 = vdwg.mxu0
      %1788 = vmatprep.subr.bf16.mxu0 0
      %1789 = vmatpush1.bf16.msra.mxu0 %v1392
      %1790 = vmatprep.subr.bf16.mxu0 0
      %1791 = vmatpush1.bf16.msra.mxu0 %v1391
      %1792 = vmatprep.subr.bf16.mxu0 0
      %1793 = vmatpush1.bf16.msra.mxu0 %v1390
      %1794 = vmatprep.subr.bf16.mxu0 0
      %1795 = vmatpush1.bf16.msra.mxu0 %v1389
      %1796 = vmatprep.subr.bf16.mxu0 0
      %1797 = vmatpush1.bf16.msra.mxu0 %v1388
      %1798 = vmatprep.subr.bf16.mxu0 0
      %1799 = vmatpush1.bf16.msra.mxu0 %v1387
      %1800 = vmatprep.subr.bf16.mxu0 0
      %1801 = vmatpush1.bf16.msra.mxu0 %v1386
      %1802 = vmatprep.subr.bf16.mxu0 0
      %1803 = vmatpush1.bf16.msra.mxu0 %v1385
      %1804 = vmatprep.subr.bf16.mxu0 0
      %1805 = vmatpush2.bf16.msra.mxu0 %v1400
      %1806 = vmatprep.subr.bf16.mxu0 0
      %1807 = vmatpush2.bf16.msra.mxu0 %v1399
      %1808 = vmatprep.subr.bf16.mxu0 0
      %1809 = vmatpush2.bf16.msra.mxu0 %v1398
      %1810 = vmatprep.subr.bf16.mxu0 0
      %1811 = vmatpush2.bf16.msra.mxu0 %v1397
      %1812 = vmatprep.subr.bf16.mxu0 0
      %1813 = vmatpush2.bf16.msra.mxu0 %v1396
      %1814 = vmatprep.subr.bf16.mxu0 0
      %1815 = vmatpush2.bf16.msra.mxu0 %v1395
      %1816 = vmatprep.subr.bf16.mxu0 0
      %1817 = vmatpush2.bf16.msra.mxu0 %v1394
      %1818 = vmatprep.subr.bf16.mxu0 0
      %1819 = vmatpush2.bf16.msra.mxu0 %v1393
      %1820 = vmatprep.mubr.bf16.mxu0 %v704
      %1821 = vmatmul.mubr.bf16.gmra.mxu0 %v703
      %v1822 = vpop.f32.mrf.mxu0
      %v1823 = vadd.f32 %v1758, %v1822
      %v1824 = vpop.f32.mrf.mxu0
      %v1825 = vpop.f32.mrf.mxu0
      %v1826 = vadd.f32 %v1761, %v1825
      %v1827 = vpop.f32.mrf.mxu0
      %1828 = vmatprep.mubr.bf16.mxu0 %v720
      %1829 = vmatmul.mubr.bf16.gmra.mxu0 %v719
      %v1830 = vpop.f32.mrf.mxu0
      %v1831 = vadd.f32 %v1766, %v1830
      %v1832 = vpop.f32.mrf.mxu0
      %v1833 = vpop.f32.mrf.mxu0
      %v1834 = vadd.f32 %v1769, %v1833
      %v1835 = vpop.f32.mrf.mxu0
      %1836 = vmatprep.mubr.bf16.mxu0 %v736
      %1837 = vmatmul.mubr.bf16.gmra.mxu0 %v735
      %v1838 = vpop.f32.mrf.mxu0
      %v1839 = vadd.f32 %v1774, %v1838
      %v1840 = vpop.f32.mrf.mxu0
      %v1841 = vpop.f32.mrf.mxu0
      %v1842 = vadd.f32 %v1777, %v1841
      %v1843 = vpop.f32.mrf.mxu0
      %1844 = vmatprep.mubr.bf16.mxu0 %v752
      %1845 = vmatmul.mubr.bf16.gmra.mxu0 %v751
      %v1846 = vpop.f32.mrf.mxu0
      %v1847 = vadd.f32 %v1782, %v1846
      %v1848 = vpop.f32.mrf.mxu0
      %v1849 = vpop.f32.mrf.mxu0
      %v1850 = vadd.f32 %v1785, %v1849
      %v1851 = vpop.f32.mrf.mxu0
      %1852 = vdwg.mxu0
      %1853 = vmatprep.subr.bf16.mxu0 0
      %1854 = vmatpush1.bf16.msra.mxu0 %v1408
      %1855 = vmatprep.subr.bf16.mxu0 0
      %1856 = vmatpush1.bf16.msra.mxu0 %v1407
      %1857 = vmatprep.subr.bf16.mxu0 0
      %1858 = vmatpush1.bf16.msra.mxu0 %v1406
      %1859 = vmatprep.subr.bf16.mxu0 0
      %1860 = vmatpush1.bf16.msra.mxu0 %v1405
      %1861 = vmatprep.subr.bf16.mxu0 0
      %1862 = vmatpush1.bf16.msra.mxu0 %v1404
      %1863 = vmatprep.subr.bf16.mxu0 0
      %1864 = vmatpush1.bf16.msra.mxu0 %v1403
      %1865 = vmatprep.subr.bf16.mxu0 0
      %1866 = vmatpush1.bf16.msra.mxu0 %v1402
      %1867 = vmatprep.subr.bf16.mxu0 0
      %1868 = vmatpush1.bf16.msra.mxu0 %v1401
      %1869 = vmatprep.subr.bf16.mxu0 0
      %1870 = vmatpush2.bf16.msra.mxu0 %v1416
      %1871 = vmatprep.subr.bf16.mxu0 0
      %1872 = vmatpush2.bf16.msra.mxu0 %v1415
      %1873 = vmatprep.subr.bf16.mxu0 0
      %1874 = vmatpush2.bf16.msra.mxu0 %v1414
      %1875 = vmatprep.subr.bf16.mxu0 0
      %1876 = vmatpush2.bf16.msra.mxu0 %v1413
      %1877 = vmatprep.subr.bf16.mxu0 0
      %1878 = vmatpush2.bf16.msra.mxu0 %v1412
      %1879 = vmatprep.subr.bf16.mxu0 0
      %1880 = vmatpush2.bf16.msra.mxu0 %v1411
      %1881 = vmatprep.subr.bf16.mxu0 0
      %1882 = vmatpush2.bf16.msra.mxu0 %v1410
      %1883 = vmatprep.subr.bf16.mxu0 0
      %1884 = vmatpush2.bf16.msra.mxu0 %v1409
      %1885 = vmatprep.mubr.bf16.mxu0 %v706
      %1886 = vmatmul.mubr.bf16.gmra.mxu0 %v705
      %v1887 = vpop.f32.mrf.mxu0
      %v1888 = vadd.f32 %v1823, %v1887
      %v1889 = vpop.f32.mrf.mxu0
      %v1890 = vpop.f32.mrf.mxu0
      %v1891 = vadd.f32 %v1826, %v1890
      %v1892 = vpop.f32.mrf.mxu0
      %1893 = vmatprep.mubr.bf16.mxu0 %v722
      %1894 = vmatmul.mubr.bf16.gmra.mxu0 %v721
      %v1895 = vpop.f32.mrf.mxu0
      %v1896 = vadd.f32 %v1831, %v1895
      %v1897 = vpop.f32.mrf.mxu0
      %v1898 = vpop.f32.mrf.mxu0
      %v1899 = vadd.f32 %v1834, %v1898
      %v1900 = vpop.f32.mrf.mxu0
      %1901 = vmatprep.mubr.bf16.mxu0 %v738
      %1902 = vmatmul.mubr.bf16.gmra.mxu0 %v737
      %v1903 = vpop.f32.mrf.mxu0
      %v1904 = vadd.f32 %v1839, %v1903
      %v1905 = vpop.f32.mrf.mxu0
      %v1906 = vpop.f32.mrf.mxu0
      %v1907 = vadd.f32 %v1842, %v1906
      %v1908 = vpop.f32.mrf.mxu0
      %1909 = vmatprep.mubr.bf16.mxu0 %v754
      %1910 = vmatmul.mubr.bf16.gmra.mxu0 %v753
      %v1911 = vpop.f32.mrf.mxu0
      %v1912 = vadd.f32 %v1847, %v1911
      %v1913 = vpop.f32.mrf.mxu0
      %v1914 = vpop.f32.mrf.mxu0
      %v1915 = vadd.f32 %v1850, %v1914
      %v1916 = vpop.f32.mrf.mxu0
      %1917 = vdwg.mxu0
      %1918 = vmatprep.subr.bf16.mxu0 0
      %1919 = vmatpush1.bf16.msra.mxu0 %v1424
      %1920 = vmatprep.subr.bf16.mxu0 0
      %1921 = vmatpush1.bf16.msra.mxu0 %v1423
      %1922 = vmatprep.subr.bf16.mxu0 0
      %1923 = vmatpush1.bf16.msra.mxu0 %v1422
      %1924 = vmatprep.subr.bf16.mxu0 0
      %1925 = vmatpush1.bf16.msra.mxu0 %v1421
      %1926 = vmatprep.subr.bf16.mxu0 0
      %1927 = vmatpush1.bf16.msra.mxu0 %v1420
      %1928 = vmatprep.subr.bf16.mxu0 0
      %1929 = vmatpush1.bf16.msra.mxu0 %v1419
      %1930 = vmatprep.subr.bf16.mxu0 0
      %1931 = vmatpush1.bf16.msra.mxu0 %v1418
      %1932 = vmatprep.subr.bf16.mxu0 0
      %1933 = vmatpush1.bf16.msra.mxu0 %v1417
      %1934 = vmatprep.subr.bf16.mxu0 0
      %1935 = vmatpush2.bf16.msra.mxu0 %v1432
      %1936 = vmatprep.subr.bf16.mxu0 0
      %1937 = vmatpush2.bf16.msra.mxu0 %v1431
      %1938 = vmatprep.subr.bf16.mxu0 0
      %1939 = vmatpush2.bf16.msra.mxu0 %v1430
      %1940 = vmatprep.subr.bf16.mxu0 0
      %1941 = vmatpush2.bf16.msra.mxu0 %v1429
      %1942 = vmatprep.subr.bf16.mxu0 0
      %1943 = vmatpush2.bf16.msra.mxu0 %v1428
      %1944 = vmatprep.subr.bf16.mxu0 0
      %1945 = vmatpush2.bf16.msra.mxu0 %v1427
      %1946 = vmatprep.subr.bf16.mxu0 0
      %1947 = vmatpush2.bf16.msra.mxu0 %v1426
      %1948 = vmatprep.subr.bf16.mxu0 0
      %1949 = vmatpush2.bf16.msra.mxu0 %v1425
      %1950 = vmatprep.mubr.bf16.mxu0 %v708
      %1951 = vmatmul.mubr.bf16.gmra.mxu0 %v707
      %v1952 = vpop.f32.mrf.mxu0
      %v1953 = vadd.f32 %v1888, %v1952
      %v1954 = vpop.f32.mrf.mxu0
      %v1955 = vpop.f32.mrf.mxu0
      %v1956 = vadd.f32 %v1891, %v1955
      %v1957 = vpop.f32.mrf.mxu0
      %1958 = vmatprep.mubr.bf16.mxu0 %v724
      %1959 = vmatmul.mubr.bf16.gmra.mxu0 %v723
      %v1960 = vpop.f32.mrf.mxu0
      %v1961 = vadd.f32 %v1896, %v1960
      %v1962 = vpop.f32.mrf.mxu0
      %v1963 = vpop.f32.mrf.mxu0
      %v1964 = vadd.f32 %v1899, %v1963
      %v1965 = vpop.f32.mrf.mxu0
      %1966 = vmatprep.mubr.bf16.mxu0 %v740
      %1967 = vmatmul.mubr.bf16.gmra.mxu0 %v739
      %v1968 = vpop.f32.mrf.mxu0
      %v1969 = vadd.f32 %v1904, %v1968
      %v1970 = vpop.f32.mrf.mxu0
      %v1971 = vpop.f32.mrf.mxu0
      %v1972 = vadd.f32 %v1907, %v1971
      %v1973 = vpop.f32.mrf.mxu0
      %1974 = vmatprep.mubr.bf16.mxu0 %v756
      %1975 = vmatmul.mubr.bf16.gmra.mxu0 %v755
      %v1976 = vpop.f32.mrf.mxu0
      %v1977 = vadd.f32 %v1912, %v1976
      %v1978 = vpop.f32.mrf.mxu0
      %v1979 = vpop.f32.mrf.mxu0
      %v1980 = vadd.f32 %v1915, %v1979
      %v1981 = vpop.f32.mrf.mxu0
      %1982 = vdwg.mxu0
      %1983 = vmatprep.subr.bf16.mxu0 0
      %1984 = vmatpush1.bf16.msra.mxu0 %v1440
      %1985 = vmatprep.subr.bf16.mxu0 0
      %1986 = vmatpush1.bf16.msra.mxu0 %v1439
      %1987 = vmatprep.subr.bf16.mxu0 0
      %1988 = vmatpush1.bf16.msra.mxu0 %v1438
      %1989 = vmatprep.subr.bf16.mxu0 0
      %1990 = vmatpush1.bf16.msra.mxu0 %v1437
      %1991 = vmatprep.subr.bf16.mxu0 0
      %1992 = vmatpush1.bf16.msra.mxu0 %v1436
      %1993 = vmatprep.subr.bf16.mxu0 0
      %1994 = vmatpush1.bf16.msra.mxu0 %v1435
      %1995 = vmatprep.subr.bf16.mxu0 0
      %1996 = vmatpush1.bf16.msra.mxu0 %v1434
      %1997 = vmatprep.subr.bf16.mxu0 0
      %1998 = vmatpush1.bf16.msra.mxu0 %v1433
      %1999 = vmatprep.subr.bf16.mxu0 0
      %2000 = vmatpush2.bf16.msra.mxu0 %v1448
      %2001 = vmatprep.subr.bf16.mxu0 0
      %2002 = vmatpush2.bf16.msra.mxu0 %v1447
      %2003 = vmatprep.subr.bf16.mxu0 0
      %2004 = vmatpush2.bf16.msra.mxu0 %v1446
      %2005 = vmatprep.subr.bf16.mxu0 0
      %2006 = vmatpush2.bf16.msra.mxu0 %v1445
      %2007 = vmatprep.subr.bf16.mxu0 0
      %2008 = vmatpush2.bf16.msra.mxu0 %v1444
      %2009 = vmatprep.subr.bf16.mxu0 0
      %2010 = vmatpush2.bf16.msra.mxu0 %v1443
      %2011 = vmatprep.subr.bf16.mxu0 0
      %2012 = vmatpush2.bf16.msra.mxu0 %v1442
      %2013 = vmatprep.subr.bf16.mxu0 0
      %2014 = vmatpush2.bf16.msra.mxu0 %v1441
      %2015 = vmatprep.mubr.bf16.mxu0 %v710
      %2016 = vmatmul.mubr.bf16.gmra.mxu0 %v709
      %v2017 = vpop.f32.mrf.mxu0
      %v2018 = vadd.f32 %v1953, %v2017
      %v2019 = vpop.f32.mrf.mxu0
      %v2020 = vpop.f32.mrf.mxu0
      %v2021 = vadd.f32 %v1956, %v2020
      %v2022 = vpop.f32.mrf.mxu0
      %2023 = vmatprep.mubr.bf16.mxu0 %v726
      %2024 = vmatmul.mubr.bf16.gmra.mxu0 %v725
      %v2025 = vpop.f32.mrf.mxu0
      %v2026 = vadd.f32 %v1961, %v2025
      %v2027 = vpop.f32.mrf.mxu0
      %v2028 = vpop.f32.mrf.mxu0
      %v2029 = vadd.f32 %v1964, %v2028
      %v2030 = vpop.f32.mrf.mxu0
      %2031 = vmatprep.mubr.bf16.mxu0 %v742
      %2032 = vmatmul.mubr.bf16.gmra.mxu0 %v741
      %v2033 = vpop.f32.mrf.mxu0
      %v2034 = vadd.f32 %v1969, %v2033
      %v2035 = vpop.f32.mrf.mxu0
      %v2036 = vpop.f32.mrf.mxu0
      %v2037 = vadd.f32 %v1972, %v2036
      %v2038 = vpop.f32.mrf.mxu0
      %2039 = vmatprep.mubr.bf16.mxu0 %v758
      %2040 = vmatmul.mubr.bf16.gmra.mxu0 %v757
      %v2041 = vpop.f32.mrf.mxu0
      %v2042 = vadd.f32 %v1977, %v2041
      %v2043 = vpop.f32.mrf.mxu0
      %v2044 = vpop.f32.mrf.mxu0
      %v2045 = vadd.f32 %v1980, %v2044
      %v2046 = vpop.f32.mrf.mxu0
      %2047 = vdwg.mxu0
      %2048 = vmatprep.subr.bf16.mxu0 0
      %2049 = vmatpush1.bf16.msra.mxu0 %v1456
      %2050 = vmatprep.subr.bf16.mxu0 0
      %2051 = vmatpush1.bf16.msra.mxu0 %v1455
      %2052 = vmatprep.subr.bf16.mxu0 0
      %2053 = vmatpush1.bf16.msra.mxu0 %v1454
      %2054 = vmatprep.subr.bf16.mxu0 0
      %2055 = vmatpush1.bf16.msra.mxu0 %v1453
      %2056 = vmatprep.subr.bf16.mxu0 0
      %2057 = vmatpush1.bf16.msra.mxu0 %v1452
      %2058 = vmatprep.subr.bf16.mxu0 0
      %2059 = vmatpush1.bf16.msra.mxu0 %v1451
      %2060 = vmatprep.subr.bf16.mxu0 0
      %2061 = vmatpush1.bf16.msra.mxu0 %v1450
      %2062 = vmatprep.subr.bf16.mxu0 0
      %2063 = vmatpush1.bf16.msra.mxu0 %v1449
      %2064 = vmatprep.subr.bf16.mxu0 0
      %2065 = vmatpush2.bf16.msra.mxu0 %v1464
      %2066 = vmatprep.subr.bf16.mxu0 0
      %2067 = vmatpush2.bf16.msra.mxu0 %v1463
      %2068 = vmatprep.subr.bf16.mxu0 0
      %2069 = vmatpush2.bf16.msra.mxu0 %v1462
      %2070 = vmatprep.subr.bf16.mxu0 0
      %2071 = vmatpush2.bf16.msra.mxu0 %v1461
      %2072 = vmatprep.subr.bf16.mxu0 0
      %2073 = vmatpush2.bf16.msra.mxu0 %v1460
      %2074 = vmatprep.subr.bf16.mxu0 0
      %2075 = vmatpush2.bf16.msra.mxu0 %v1459
      %2076 = vmatprep.subr.bf16.mxu0 0
      %2077 = vmatpush2.bf16.msra.mxu0 %v1458
      %2078 = vmatprep.subr.bf16.mxu0 0
      %2079 = vmatpush2.bf16.msra.mxu0 %v1457
      %2080 = vmatprep.mubr.bf16.mxu0 %v712
      %2081 = vmatmul.mubr.bf16.gmra.mxu0 %v711
      %v2082 = vpop.f32.mrf.mxu0
      %v2083 = vadd.f32 %v2018, %v2082
      %v2084 = vpop.f32.mrf.mxu0
      %v2085 = vpop.f32.mrf.mxu0
      %v2086 = vadd.f32 %v2021, %v2085
      %v2087 = vpop.f32.mrf.mxu0
      %2088 = vmatprep.mubr.bf16.mxu0 %v728
      %2089 = vmatmul.mubr.bf16.gmra.mxu0 %v727
      %v2090 = vpop.f32.mrf.mxu0
      %v2091 = vadd.f32 %v2026, %v2090
      %v2092 = vpop.f32.mrf.mxu0
      %v2093 = vpop.f32.mrf.mxu0
      %v2094 = vadd.f32 %v2029, %v2093
      %v2095 = vpop.f32.mrf.mxu0
      %2096 = vmatprep.mubr.bf16.mxu0 %v744
      %2097 = vmatmul.mubr.bf16.gmra.mxu0 %v743
      %v2098 = vpop.f32.mrf.mxu0
      %v2099 = vadd.f32 %v2034, %v2098
      %v2100 = vpop.f32.mrf.mxu0
      %v2101 = vpop.f32.mrf.mxu0
      %v2102 = vadd.f32 %v2037, %v2101
      %v2103 = vpop.f32.mrf.mxu0
      %2104 = vmatprep.mubr.bf16.mxu0 %v760
      %2105 = vmatmul.mubr.bf16.gmra.mxu0 %v759
      %v2106 = vpop.f32.mrf.mxu0
      %v2107 = vadd.f32 %v2042, %v2106
      %v2108 = vpop.f32.mrf.mxu0
      %v2109 = vpop.f32.mrf.mxu0
      %v2110 = vadd.f32 %v2045, %v2109
      %v2111 = vpop.f32.mrf.mxu0
      %2112 = vdwg.mxu0
      %v2113 = vmax.f32 %v2083, 0.0
      %v2114 = vmax.f32 %v2086, 0.0
      %v2115 = vmax.f32 %v2091, 0.0
      %v2116 = vmax.f32 %v2094, 0.0
      %v2117 = vmax.f32 %v2099, 0.0
      %v2118 = vmax.f32 %v2102, 0.0
      %v2119 = vmax.f32 %v2107, 0.0
      %v2120 = vmax.f32 %v2110, 0.0
      %v2121 = vpack.c.bf16 %v2114, %v2113
      %v2122 = vpack.c.bf16 %v2116, %v2115
      %v2123 = vpack.c.bf16 %v2118, %v2117
      %v2124 = vpack.c.bf16 %v2120, %v2119
      %v2129 = vunpack.c.l.b16 %v2121
      %v2130 = vunpack.c.h.b16 %v2121
      %v2131 = vunpack.c.l.b16 %v2122
      %v2132 = vunpack.c.h.b16 %v2122
      %v2133 = vunpack.c.l.b16 %v2123
      %v2134 = vunpack.c.h.b16 %v2123
      %v2135 = vunpack.c.l.b16 %v2124
      %v2136 = vunpack.c.h.b16 %v2124
      %v2137 = vpack.c.b16 %v2129, %v2129
      %v2138 = vpack.c.b16 %v2130, %v2130
      %v2139 = vpack.c.b16 %v2131, %v2131
      %v2140 = vpack.c.b16 %v2132, %v2132
      %v2141 = vpack.c.b16 %v2133, %v2133
      %v2142 = vpack.c.b16 %v2134, %v2134
      %v2143 = vpack.c.b16 %v2135, %v2135
      %v2144 = vpack.c.b16 %v2136, %v2136
      %vm2153 = vcmask 519168
      %2154 = vst.msk [vmem:[%s175] sm:$0xf] %vm2153, %v2137
      %2155 = vst.msk [vmem:[%s175 + $0x4] sm:$0xf] %vm2153, %v2138
      %2156 = vst.msk [vmem:[%s175 + $0x8] sm:$0xf] %vm2153, %v2139
      %2157 = vst.msk [vmem:[%s175 + $0xc] sm:$0xf] %vm2153, %v2140
      %2158 = vst.msk [vmem:[%s175 + $0x10] sm:$0xf] %vm2153, %v2141
      %2159 = vst.msk [vmem:[%s175 + $0x14] sm:$0xf] %vm2153, %v2142
      %2160 = vst.msk [vmem:[%s175 + $0x18] sm:$0xf] %vm2153, %v2143
      %2161 = vst.msk [vmem:[%s175 + $0x1c] sm:$0xf] %vm2153, %v2144
      %s2162 = smul.u32 8, %s14
      %p2163 = scmp.lt.s32.totalorder %s2162, 15
      %s2164 = scalar_select %p2163, %s2162, 15
      %s2165 = smul.addr %s2164, 4
      %s2166 = scalar_lea.vmem %s3, %s2165
      // Predicated region
      $region33: #{_lambda_.2} parent=31 // pred_check
        %p2167 = pneg %p100
      $region34: #{_lambda_.2} parent=31 // pred_check_branch
        %2169 = sbr.rel (%p2167) target = $region36
      $region35: #{_lambda_.2} parent=31 // pred_region
        %s2170 = smul.u32 8, %s14
      $region36: #{_lambda_.2} parent=31 // pred_fallthru
        _
    $region32: #{_lambda_.2} parent=5 // pred_fallthru
      _
    %p2171 = scmp.le.s32.totalorder 2, %s9
    // Predicated region
    $region37: #{_lambda_.2} parent=5 // pred_check
      %p2172 = pneg %p2171
    $region38: #{_lambda_.2} parent=5 // pred_check_branch
      %2174 = sbr.rel (%p2172) target = $region40
    $region39: #{_lambda_.2} parent=5 // pred_region
      %s2175 = ssub.s32 %s9, 2
      // Predicated region
      $region41: #{_lambda_.2} parent=39 // pred_check
        %p2176 = pneg %p106
      $region42: #{_lambda_.2} parent=39 // pred_check_branch
        %2178 = sbr.rel (%p2176) target = $region44
      $region43: #{_lambda_.2} parent=39 // pred_region
        %s2179 = smul.u32 8, %s15
        %p2180 = scmp.lt.s32.totalorder %s2179, 15
        %s2181 = scalar_select %p2180, %s2179, 15
        %s2182 = smul.addr %s2181, 4
        %s2183 = scalar_lea.vmem %s3, %s2182
      $region44: #{_lambda_.2} parent=39 // pred_fallthru
        _
    $region40: #{_lambda_.2} parent=5 // pred_fallthru
      _
  $region6: #{_lambda_.2} parent=0 // loop_footer
    %s13 = sadd.s32 1, %s9
  $region7: #{_lambda_.2} parent=0 // loop_footer_branch
    %8 = sbr.rel target = $region3
  $region8: #{_lambda_.2} parent=0 // loop_exit
    _

// kernel: _lambda_.3
$region0: #{_lambda_.3}
  #allocation0 [shape = 'u32[]', space=smem, size = 0x4, offset = 0x4, fixed_abs, tag = 'smem constant byte address 0x4 - core index']
  #allocation1 [shape = 'u32[144,128]{1,0:T(1,128)}', space=vmem, size = 0x12000, scoped, tag = 'internal scratch']
  %s0 = inlined_call_operand.vmem [shape: bf16[9,2,1024], index: 0, kind: input, shape index: {}]
  %s1 = inlined_call_operand.vmem [shape: bf16[1024,64], index: 1, kind: input, shape index: {}]
  %s2 = inlined_call_operand.vmem [shape: f32[1,64], index: 2, kind: input, shape index: {}]
  %s3 = inlined_call_operand.vmem [shape: f32[9,64,64], index: 3, kind: input, shape index: {}]
  %s4 = inlined_call_operand.vmem [shape: f32[1,64], index: 4, kind: input, shape index: {}]
  %s5 = inlined_call_operand.vmem [shape: f32[64,64], index: 5, kind: input, shape index: {}]
  %s6 = inlined_call_operand.vmem [shape: f32[1,64], index: 6, kind: input, shape index: {}]
  %s7 = inlined_call_operand.vmem [shape: f32[64,128], index: 7, kind: input, shape index: {}]
  %s8 = inlined_call_operand.vmem [shape: f32[1,128], index: 8, kind: input, shape index: {}]
  %s9 = inlined_call_operand.hbm [shape: f32[2,128], index: 9, kind: output, shape index: {}]
  %s10 = sld [smem:[#allocation0]]
  $region46: #{_lambda_.3} parent=0
    _
  %s12 = ssub.s32 1, %s10
  %s13 = scalar_select 0, %s12, %s10
  $region1: #{_lambda_.3} parent=0
    #allocation2 [shape = 'u8[1024]{0}', space=vmem, size = 0x400, scoped, tag = 'output window, operand 0, single buffered']
    #allocation3 [shape = 's32[1]{0}', space=sflag, size = 0x4, scoped, tag = 'scoped memory for _lambda_.3']
    %14 = vsyncpa [#allocation3], 0
    // Predicated region
    $region2: #{_lambda_.3} parent=1 // pred_check
      _
    $region3: #{_lambda_.3} parent=1 // pred_check_branch
      %16 = sbr.rel (0) target = $region5
    $region4: #{_lambda_.3} parent=1 // pred_region
      _
    $region5: #{_lambda_.3} parent=1 // pred_fallthru
      _
    // Predicated region
    $region6: #{_lambda_.3} parent=1 // pred_check
      _
    $region7: #{_lambda_.3} parent=1 // pred_check_branch
      %18 = sbr.rel (0) target = $region9
    $region8: #{_lambda_.3} parent=1 // pred_region
      _
    $region9: #{_lambda_.3} parent=1 // pred_fallthru
      _
    // Predicated region
    $region10: #{_lambda_.3} parent=1 // pred_check
      _
    $region11: #{_lambda_.3} parent=1 // pred_check_branch
      %20 = sbr.rel (0) target = $region13
    $region12: #{_lambda_.3} parent=1 // pred_region
      _
    $region13: #{_lambda_.3} parent=1 // pred_fallthru
      _
    // Predicated region
    $region14: #{_lambda_.3} parent=1 // pred_check
      _
    $region15: #{_lambda_.3} parent=1 // pred_check_branch
      %22 = sbr.rel (0) target = $region17
    $region16: #{_lambda_.3} parent=1 // pred_region
      _
    $region17: #{_lambda_.3} parent=1 // pred_fallthru
      _
    // Predicated region
    $region18: #{_lambda_.3} parent=1 // pred_check
      _
    $region19: #{_lambda_.3} parent=1 // pred_check_branch
      %24 = sbr.rel (0) target = $region21
    $region20: #{_lambda_.3} parent=1 // pred_region
      _
    $region21: #{_lambda_.3} parent=1 // pred_fallthru
      _
    // Predicated region
    $region22: #{_lambda_.3} parent=1 // pred_check
      _
    $region23: #{_lambda_.3} parent=1 // pred_check_branch
      %26 = sbr.rel (0) target = $region25
    $region24: #{_lambda_.3} parent=1 // pred_region
      _
    $region25: #{_lambda_.3} parent=1 // pred_fallthru
      _
    // Predicated region
    $region26: #{_lambda_.3} parent=1 // pred_check
      _
    $region27: #{_lambda_.3} parent=1 // pred_check_branch
      %28 = sbr.rel (0) target = $region29
    $region28: #{_lambda_.3} parent=1 // pred_region
      _
    $region29: #{_lambda_.3} parent=1 // pred_fallthru
      _
    // Predicated region
    $region30: #{_lambda_.3} parent=1 // pred_check
      _
    $region31: #{_lambda_.3} parent=1 // pred_check_branch
      %30 = sbr.rel (0) target = $region33
    $region32: #{_lambda_.3} parent=1 // pred_region
      _
    $region33: #{_lambda_.3} parent=1 // pred_fallthru
      _
    // Predicated region
    $region34: #{_lambda_.3} parent=1 // pred_check
      _
    $region35: #{_lambda_.3} parent=1 // pred_check_branch
      %32 = sbr.rel (0) target = $region37
    $region36: #{_lambda_.3} parent=1 // pred_region
      _
    $region37: #{_lambda_.3} parent=1 // pred_fallthru
      _
    %v34 = vld [vmem:[%s0] sm:$0xff]
    %v35 = vld [vmem:[%s1] sm:$0xf]
    %v36 = vld [vmem:[%s1 + $0x4] sm:$0xf]
    %v37 = vld [vmem:[%s1 + $0x8] sm:$0xf]
    %v38 = vld [vmem:[%s1 + $0xc] sm:$0xf]
    %v39 = vld [vmem:[%s1 + $0x10] sm:$0xf]
    %v40 = vld [vmem:[%s1 + $0x14] sm:$0xf]
    %v41 = vld [vmem:[%s1 + $0x18] sm:$0xf]
    %v42 = vld [vmem:[%s1 + $0x1c] sm:$0xf]
    %v43 = vld [vmem:[%s1 + $0x20] sm:$0xf]
    %v44 = vld [vmem:[%s1 + $0x24] sm:$0xf]
    %v45 = vld [vmem:[%s1 + $0x28] sm:$0xf]
    %v46 = vld [vmem:[%s1 + $0x2c] sm:$0xf]
    %v47 = vld [vmem:[%s1 + $0x30] sm:$0xf]
    %v48 = vld [vmem:[%s1 + $0x34] sm:$0xf]
    %v49 = vld [vmem:[%s1 + $0x38] sm:$0xf]
    %v50 = vld [vmem:[%s1 + $0x3c] sm:$0xf]
    %v51 = vld [vmem:[%s1 + $0x40] sm:$0xf]
    %v52 = vld [vmem:[%s1 + $0x44] sm:$0xf]
    %v53 = vld [vmem:[%s1 + $0x48] sm:$0xf]
    %v54 = vld [vmem:[%s1 + $0x4c] sm:$0xf]
    %v55 = vld [vmem:[%s1 + $0x50] sm:$0xf]
    %v56 = vld [vmem:[%s1 + $0x54] sm:$0xf]
    %v57 = vld [vmem:[%s1 + $0x58] sm:$0xf]
    %v58 = vld [vmem:[%s1 + $0x5c] sm:$0xf]
    %v59 = vld [vmem:[%s1 + $0x60] sm:$0xf]
    %v60 = vld [vmem:[%s1 + $0x64] sm:$0xf]
    %v61 = vld [vmem:[%s1 + $0x68] sm:$0xf]
    %v62 = vld [vmem:[%s1 + $0x6c] sm:$0xf]
    %v63 = vld [vmem:[%s1 + $0x70] sm:$0xf]
    %v64 = vld [vmem:[%s1 + $0x74] sm:$0xf]
    %v65 = vld [vmem:[%s1 + $0x78] sm:$0xf]
    %v66 = vld [vmem:[%s1 + $0x7c] sm:$0xf]
    %v67 = vld [vmem:[%s1 + $0x80] sm:$0xf]
    %v68 = vld [vmem:[%s1 + $0x84] sm:$0xf]
    %v69 = vld [vmem:[%s1 + $0x88] sm:$0xf]
    %v70 = vld [vmem:[%s1 + $0x8c] sm:$0xf]
    %v71 = vld [vmem:[%s1 + $0x90] sm:$0xf]
    %v72 = vld [vmem:[%s1 + $0x94] sm:$0xf]
    %v73 = vld [vmem:[%s1 + $0x98] sm:$0xf]
    %v74 = vld [vmem:[%s1 + $0x9c] sm:$0xf]
    %v75 = vld [vmem:[%s1 + $0xa0] sm:$0xf]
    %v76 = vld [vmem:[%s1 + $0xa4] sm:$0xf]
    %v77 = vld [vmem:[%s1 + $0xa8] sm:$0xf]
    %v78 = vld [vmem:[%s1 + $0xac] sm:$0xf]
    %v79 = vld [vmem:[%s1 + $0xb0] sm:$0xf]
    %v80 = vld [vmem:[%s1 + $0xb4] sm:$0xf]
    %v81 = vld [vmem:[%s1 + $0xb8] sm:$0xf]
    %v82 = vld [vmem:[%s1 + $0xbc] sm:$0xf]
    %v83 = vld [vmem:[%s1 + $0xc0] sm:$0xf]
    %v84 = vld [vmem:[%s1 + $0xc4] sm:$0xf]
    %v85 = vld [vmem:[%s1 + $0xc8] sm:$0xf]
    %v86 = vld [vmem:[%s1 + $0xcc] sm:$0xf]
    %v87 = vld [vmem:[%s1 + $0xd0] sm:$0xf]
    %v88 = vld [vmem:[%s1 + $0xd4] sm:$0xf]
    %v89 = vld [vmem:[%s1 + $0xd8] sm:$0xf]
    %v90 = vld [vmem:[%s1 + $0xdc] sm:$0xf]
    %v91 = vld [vmem:[%s1 + $0xe0] sm:$0xf]
    %v92 = vld [vmem:[%s1 + $0xe4] sm:$0xf]
    %v93 = vld [vmem:[%s1 + $0xe8] sm:$0xf]
    %v94 = vld [vmem:[%s1 + $0xec] sm:$0xf]
    %v95 = vld [vmem:[%s1 + $0xf0] sm:$0xf]
    %v96 = vld [vmem:[%s1 + $0xf4] sm:$0xf]
    %v97 = vld [vmem:[%s1 + $0xf8] sm:$0xf]
    %v98 = vld [vmem:[%s1 + $0xfc] sm:$0xf]
    %v99 = vld [vmem:[%s1 + $0x100] sm:$0xf]
    %v100 = vld [vmem:[%s1 + $0x104] sm:$0xf]
    %v101 = vld [vmem:[%s1 + $0x108] sm:$0xf]
    %v102 = vld [vmem:[%s1 + $0x10c] sm:$0xf]
    %v103 = vld [vmem:[%s1 + $0x110] sm:$0xf]
    %v104 = vld [vmem:[%s1 + $0x114] sm:$0xf]
    %v105 = vld [vmem:[%s1 + $0x118] sm:$0xf]
    %v106 = vld [vmem:[%s1 + $0x11c] sm:$0xf]
    %v107 = vld [vmem:[%s1 + $0x120] sm:$0xf]
    %v108 = vld [vmem:[%s1 + $0x124] sm:$0xf]
    %v109 = vld [vmem:[%s1 + $0x128] sm:$0xf]
    %v110 = vld [vmem:[%s1 + $0x12c] sm:$0xf]
    %v111 = vld [vmem:[%s1 + $0x130] sm:$0xf]
    %v112 = vld [vmem:[%s1 + $0x134] sm:$0xf]
    %v113 = vld [vmem:[%s1 + $0x138] sm:$0xf]
    %v114 = vld [vmem:[%s1 + $0x13c] sm:$0xf]
    %v115 = vld [vmem:[%s1 + $0x140] sm:$0xf]
    %v116 = vld [vmem:[%s1 + $0x144] sm:$0xf]
    %v117 = vld [vmem:[%s1 + $0x148] sm:$0xf]
    %v118 = vld [vmem:[%s1 + $0x14c] sm:$0xf]
    %v119 = vld [vmem:[%s1 + $0x150] sm:$0xf]
    %v120 = vld [vmem:[%s1 + $0x154] sm:$0xf]
    %v121 = vld [vmem:[%s1 + $0x158] sm:$0xf]
    %v122 = vld [vmem:[%s1 + $0x15c] sm:$0xf]
    %v123 = vld [vmem:[%s1 + $0x160] sm:$0xf]
    %v124 = vld [vmem:[%s1 + $0x164] sm:$0xf]
    %v125 = vld [vmem:[%s1 + $0x168] sm:$0xf]
    %v126 = vld [vmem:[%s1 + $0x16c] sm:$0xf]
    %v127 = vld [vmem:[%s1 + $0x170] sm:$0xf]
    %v128 = vld [vmem:[%s1 + $0x174] sm:$0xf]
    %v129 = vld [vmem:[%s1 + $0x178] sm:$0xf]
    %v130 = vld [vmem:[%s1 + $0x17c] sm:$0xf]
    %v131 = vld [vmem:[%s1 + $0x180] sm:$0xf]
    %v132 = vld [vmem:[%s1 + $0x184] sm:$0xf]
    %v133 = vld [vmem:[%s1 + $0x188] sm:$0xf]
    %v134 = vld [vmem:[%s1 + $0x18c] sm:$0xf]
    %v135 = vld [vmem:[%s1 + $0x190] sm:$0xf]
    %v136 = vld [vmem:[%s1 + $0x194] sm:$0xf]
    %v137 = vld [vmem:[%s1 + $0x198] sm:$0xf]
    %v138 = vld [vmem:[%s1 + $0x19c] sm:$0xf]
    %v139 = vld [vmem:[%s1 + $0x1a0] sm:$0xf]
    %v140 = vld [vmem:[%s1 + $0x1a4] sm:$0xf]
    %v141 = vld [vmem:[%s1 + $0x1a8] sm:$0xf]
    %v142 = vld [vmem:[%s1 + $0x1ac] sm:$0xf]
    %v143 = vld [vmem:[%s1 + $0x1b0] sm:$0xf]
    %v144 = vld [vmem:[%s1 + $0x1b4] sm:$0xf]
    %v145 = vld [vmem:[%s1 + $0x1b8] sm:$0xf]
    %v146 = vld [vmem:[%s1 + $0x1bc] sm:$0xf]
    %v147 = vld [vmem:[%s1 + $0x1c0] sm:$0xf]
    %v148 = vld [vmem:[%s1 + $0x1c4] sm:$0xf]
    %v149 = vld [vmem:[%s1 + $0x1c8] sm:$0xf]
    %v150 = vld [vmem:[%s1 + $0x1cc] sm:$0xf]
    %v151 = vld [vmem:[%s1 + $0x1d0] sm:$0xf]
    %v152 = vld [vmem:[%s1 + $0x1d4] sm:$0xf]
    %v153 = vld [vmem:[%s1 + $0x1d8] sm:$0xf]
    %v154 = vld [vmem:[%s1 + $0x1dc] sm:$0xf]
    %v155 = vld [vmem:[%s1 + $0x1e0] sm:$0xf]
    %v156 = vld [vmem:[%s1 + $0x1e4] sm:$0xf]
    %v157 = vld [vmem:[%s1 + $0x1e8] sm:$0xf]
    %v158 = vld [vmem:[%s1 + $0x1ec] sm:$0xf]
    %v159 = vld [vmem:[%s1 + $0x1f0] sm:$0xf]
    %v160 = vld [vmem:[%s1 + $0x1f4] sm:$0xf]
    %v161 = vld [vmem:[%s1 + $0x1f8] sm:$0xf]
    %v162 = vld [vmem:[%s1 + $0x1fc] sm:$0xf]
    %v163 = vld [vmem:[%s2] sm:$0x1]
    %v165 = vlaneseq
    %v166 = vshrl.u32 %v165, 7
    %v167 = vsub.s32 0, %v166
    %v168 = vrot.slane %v163, %v167
    %v171 = vcombine.high %v34, %v34
    %v173 = vunpack.c.l.s4 1966171168
    %v174 = vunpack.c.0.s8 %v173
    %v175 = vlaneseq
    %v176 = vshrl.u32 %v175, 7
    %v177 = vsub.s32 %v174, %v176
    %v178 = vrot.slane %v34, %v177
    %v180 = vunpack.c.l.s4 1966171168
    %v181 = vunpack.c.0.s8 %v180
    %v182 = vlaneseq
    %v183 = vshrl.u32 %v182, 7
    %v184 = vsub.s32 %v181, %v183
    %v185 = vrot.slane %v171, %v184
    %v186 = vcombine.high %v178, %v178
    %v187 = vcombine.high %v185, %v185
    %v189 = vunpack.c.l.s4 1966171168
    %v190 = vunpack.c.0.s8 %v189
    %v191 = vlaneseq
    %v192 = vshrl.u32 %v191, 7
    %v193 = vsub.s32 %v190, %v192
    %v194 = vrot.slane %v178, %v193
    %v196 = vunpack.c.l.s4 1966171168
    %v197 = vunpack.c.0.s8 %v196
    %v198 = vlaneseq
    %v199 = vshrl.u32 %v198, 7
    %v200 = vsub.s32 %v197, %v199
    %v201 = vrot.slane %v185, %v200
    %v203 = vunpack.c.l.s4 1966171168
    %v204 = vunpack.c.0.s8 %v203
    %v205 = vlaneseq
    %v206 = vshrl.u32 %v205, 7
    %v207 = vsub.s32 %v204, %v206
    %v208 = vrot.slane %v186, %v207
    %v210 = vunpack.c.l.s4 1966171168
    %v211 = vunpack.c.0.s8 %v210
    %v212 = vlaneseq
    %v213 = vshrl.u32 %v212, 7
    %v214 = vsub.s32 %v211, %v213
    %v215 = vrot.slane %v187, %v214
    %v216 = vcombine.high %v194, %v194
    %v217 = vcombine.high %v201, %v201
    %v218 = vcombine.high %v208, %v208
    %v219 = vcombine.high %v215, %v215
    %v356 = vunpack.c.l.b16 %v35
    %v357 = vunpack.c.l.b16 %v36
    %v358 = vunpack.c.l.b16 %v37
    %v359 = vunpack.c.l.b16 %v38
    %v360 = vunpack.c.l.b16 %v39
    %v361 = vunpack.c.l.b16 %v40
    %v362 = vunpack.c.l.b16 %v41
    %v363 = vunpack.c.l.b16 %v42
    %v364 = vunpack.c.l.b16 %v43
    %v365 = vunpack.c.l.b16 %v44
    %v366 = vunpack.c.l.b16 %v45
    %v367 = vunpack.c.l.b16 %v46
    %v368 = vunpack.c.l.b16 %v47
    %v369 = vunpack.c.l.b16 %v48
    %v370 = vunpack.c.l.b16 %v49
    %v371 = vunpack.c.l.b16 %v50
    %v372 = vunpack.c.l.b16 %v51
    %v373 = vunpack.c.l.b16 %v52
    %v374 = vunpack.c.l.b16 %v53
    %v375 = vunpack.c.l.b16 %v54
    %v376 = vunpack.c.l.b16 %v55
    %v377 = vunpack.c.l.b16 %v56
    %v378 = vunpack.c.l.b16 %v57
    %v379 = vunpack.c.l.b16 %v58
    %v380 = vunpack.c.l.b16 %v59
    %v381 = vunpack.c.l.b16 %v60
    %v382 = vunpack.c.l.b16 %v61
    %v383 = vunpack.c.l.b16 %v62
    %v384 = vunpack.c.l.b16 %v63
    %v385 = vunpack.c.l.b16 %v64
    %v386 = vunpack.c.l.b16 %v65
    %v387 = vunpack.c.l.b16 %v66
    %v388 = vunpack.c.l.b16 %v67
    %v389 = vunpack.c.l.b16 %v68
    %v390 = vunpack.c.l.b16 %v69
    %v391 = vunpack.c.l.b16 %v70
    %v392 = vunpack.c.l.b16 %v71
    %v393 = vunpack.c.l.b16 %v72
    %v394 = vunpack.c.l.b16 %v73
    %v395 = vunpack.c.l.b16 %v74
    %v396 = vunpack.c.l.b16 %v75
    %v397 = vunpack.c.l.b16 %v76
    %v398 = vunpack.c.l.b16 %v77
    %v399 = vunpack.c.l.b16 %v78
    %v400 = vunpack.c.l.b16 %v79
    %v401 = vunpack.c.l.b16 %v80
    %v402 = vunpack.c.l.b16 %v81
    %v403 = vunpack.c.l.b16 %v82
    %v404 = vunpack.c.l.b16 %v83
    %v405 = vunpack.c.l.b16 %v84
    %v406 = vunpack.c.l.b16 %v85
    %v407 = vunpack.c.l.b16 %v86
    %v408 = vunpack.c.l.b16 %v87
    %v409 = vunpack.c.l.b16 %v88
    %v410 = vunpack.c.l.b16 %v89
    %v411 = vunpack.c.l.b16 %v90
    %v412 = vunpack.c.l.b16 %v91
    %v413 = vunpack.c.l.b16 %v92
    %v414 = vunpack.c.l.b16 %v93
    %v415 = vunpack.c.l.b16 %v94
    %v416 = vunpack.c.l.b16 %v95
    %v417 = vunpack.c.l.b16 %v96
    %v418 = vunpack.c.l.b16 %v97
    %v419 = vunpack.c.l.b16 %v98
    %v420 = vunpack.c.l.b16 %v99
    %v421 = vunpack.c.l.b16 %v100
    %v422 = vunpack.c.l.b16 %v101
    %v423 = vunpack.c.l.b16 %v102
    %v424 = vunpack.c.l.b16 %v103
    %v425 = vunpack.c.l.b16 %v104
    %v426 = vunpack.c.l.b16 %v105
    %v427 = vunpack.c.l.b16 %v106
    %v428 = vunpack.c.l.b16 %v107
    %v429 = vunpack.c.l.b16 %v108
    %v430 = vunpack.c.l.b16 %v109
    %v431 = vunpack.c.l.b16 %v110
    %v432 = vunpack.c.l.b16 %v111
    %v433 = vunpack.c.l.b16 %v112
    %v434 = vunpack.c.l.b16 %v113
    %v435 = vunpack.c.l.b16 %v114
    %v436 = vunpack.c.l.b16 %v115
    %v437 = vunpack.c.l.b16 %v116
    %v438 = vunpack.c.l.b16 %v117
    %v439 = vunpack.c.l.b16 %v118
    %v440 = vunpack.c.l.b16 %v119
    %v441 = vunpack.c.l.b16 %v120
    %v442 = vunpack.c.l.b16 %v121
    %v443 = vunpack.c.l.b16 %v122
    %v444 = vunpack.c.l.b16 %v123
    %v445 = vunpack.c.l.b16 %v124
    %v446 = vunpack.c.l.b16 %v125
    %v447 = vunpack.c.l.b16 %v126
    %v448 = vunpack.c.l.b16 %v127
    %v449 = vunpack.c.l.b16 %v128
    %v450 = vunpack.c.l.b16 %v129
    %v451 = vunpack.c.l.b16 %v130
    %v452 = vunpack.c.l.b16 %v131
    %v453 = vunpack.c.l.b16 %v132
    %v454 = vunpack.c.l.b16 %v133
    %v455 = vunpack.c.l.b16 %v134
    %v456 = vunpack.c.l.b16 %v135
    %v457 = vunpack.c.l.b16 %v136
    %v458 = vunpack.c.l.b16 %v137
    %v459 = vunpack.c.l.b16 %v138
    %v460 = vunpack.c.l.b16 %v139
    %v461 = vunpack.c.l.b16 %v140
    %v462 = vunpack.c.l.b16 %v141
    %v463 = vunpack.c.l.b16 %v142
    %v464 = vunpack.c.l.b16 %v143
    %v465 = vunpack.c.l.b16 %v144
    %v466 = vunpack.c.l.b16 %v145
    %v467 = vunpack.c.l.b16 %v146
    %v468 = vunpack.c.l.b16 %v147
    %v469 = vunpack.c.l.b16 %v148
    %v470 = vunpack.c.l.b16 %v149
    %v471 = vunpack.c.l.b16 %v150
    %v472 = vunpack.c.l.b16 %v151
    %v473 = vunpack.c.l.b16 %v152
    %v474 = vunpack.c.l.b16 %v153
    %v475 = vunpack.c.l.b16 %v154
    %v476 = vunpack.c.l.b16 %v155
    %v477 = vunpack.c.l.b16 %v156
    %v478 = vunpack.c.l.b16 %v157
    %v479 = vunpack.c.l.b16 %v158
    %v480 = vunpack.c.l.b16 %v159
    %v481 = vunpack.c.l.b16 %v160
    %v482 = vunpack.c.l.b16 %v161
    %v483 = vunpack.c.l.b16 %v162
    %v484 = vpack.c.b16 %v357, %v356
    %v485 = vpack.c.b16 %v359, %v358
    %v486 = vpack.c.b16 %v361, %v360
    %v487 = vpack.c.b16 %v363, %v362
    %v488 = vpack.c.b16 %v365, %v364
    %v489 = vpack.c.b16 %v367, %v366
    %v490 = vpack.c.b16 %v369, %v368
    %v491 = vpack.c.b16 %v371, %v370
    %v492 = vpack.c.b16 %v373, %v372
    %v493 = vpack.c.b16 %v375, %v374
    %v494 = vpack.c.b16 %v377, %v376
    %v495 = vpack.c.b16 %v379, %v378
    %v496 = vpack.c.b16 %v381, %v380
    %v497 = vpack.c.b16 %v383, %v382
    %v498 = vpack.c.b16 %v385, %v384
    %v499 = vpack.c.b16 %v387, %v386
    %v500 = vpack.c.b16 %v389, %v388
    %v501 = vpack.c.b16 %v391, %v390
    %v502 = vpack.c.b16 %v393, %v392
    %v503 = vpack.c.b16 %v395, %v394
    %v504 = vpack.c.b16 %v397, %v396
    %v505 = vpack.c.b16 %v399, %v398
    %v506 = vpack.c.b16 %v401, %v400
    %v507 = vpack.c.b16 %v403, %v402
    %v508 = vpack.c.b16 %v405, %v404
    %v509 = vpack.c.b16 %v407, %v406
    %v510 = vpack.c.b16 %v409, %v408
    %v511 = vpack.c.b16 %v411, %v410
    %v512 = vpack.c.b16 %v413, %v412
    %v513 = vpack.c.b16 %v415, %v414
    %v514 = vpack.c.b16 %v417, %v416
    %v515 = vpack.c.b16 %v419, %v418
    %v516 = vpack.c.b16 %v421, %v420
    %v517 = vpack.c.b16 %v423, %v422
    %v518 = vpack.c.b16 %v425, %v424
    %v519 = vpack.c.b16 %v427, %v426
    %v520 = vpack.c.b16 %v429, %v428
    %v521 = vpack.c.b16 %v431, %v430
    %v522 = vpack.c.b16 %v433, %v432
    %v523 = vpack.c.b16 %v435, %v434
    %v524 = vpack.c.b16 %v437, %v436
    %v525 = vpack.c.b16 %v439, %v438
    %v526 = vpack.c.b16 %v441, %v440
    %v527 = vpack.c.b16 %v443, %v442
    %v528 = vpack.c.b16 %v445, %v444
    %v529 = vpack.c.b16 %v447, %v446
    %v530 = vpack.c.b16 %v449, %v448
    %v531 = vpack.c.b16 %v451, %v450
    %v532 = vpack.c.b16 %v453, %v452
    %v533 = vpack.c.b16 %v455, %v454
    %v534 = vpack.c.b16 %v457, %v456
    %v535 = vpack.c.b16 %v459, %v458
    %v536 = vpack.c.b16 %v461, %v460
    %v537 = vpack.c.b16 %v463, %v462
    %v538 = vpack.c.b16 %v465, %v464
    %v539 = vpack.c.b16 %v467, %v466
    %v540 = vpack.c.b16 %v469, %v468
    %v541 = vpack.c.b16 %v471, %v470
    %v542 = vpack.c.b16 %v473, %v472
    %v543 = vpack.c.b16 %v475, %v474
    %v544 = vpack.c.b16 %v477, %v476
    %v545 = vpack.c.b16 %v479, %v478
    %v546 = vpack.c.b16 %v481, %v480
    %v547 = vpack.c.b16 %v483, %v482
    %612 = vmatprep.subr.bf16.mxu0 0
    %613 = vmatpush1.bf16.msra.mxu0 %v491
    %614 = vmatprep.subr.bf16.mxu0 0
    %615 = vmatpush1.bf16.msra.mxu0 %v490
    %616 = vmatprep.subr.bf16.mxu0 0
    %617 = vmatpush1.bf16.msra.mxu0 %v489
    %618 = vmatprep.subr.bf16.mxu0 0
    %619 = vmatpush1.bf16.msra.mxu0 %v488
    %620 = vmatprep.subr.bf16.mxu0 0
    %621 = vmatpush1.bf16.msra.mxu0 %v487
    %622 = vmatprep.subr.bf16.mxu0 0
    %623 = vmatpush1.bf16.msra.mxu0 %v486
    %624 = vmatprep.subr.bf16.mxu0 0
    %625 = vmatpush1.bf16.msra.mxu0 %v485
    %626 = vmatprep.subr.bf16.mxu0 0
    %627 = vmatpush1.bf16.msra.mxu0 %v484
    %628 = vmatprep.subr.bf16.mxu0 0
    %629 = vmatpush2.bf16.msra.mxu0 %v499
    %630 = vmatprep.subr.bf16.mxu0 0
    %631 = vmatpush2.bf16.msra.mxu0 %v498
    %632 = vmatprep.subr.bf16.mxu0 0
    %633 = vmatpush2.bf16.msra.mxu0 %v497
    %634 = vmatprep.subr.bf16.mxu0 0
    %635 = vmatpush2.bf16.msra.mxu0 %v496
    %636 = vmatprep.subr.bf16.mxu0 0
    %637 = vmatpush2.bf16.msra.mxu0 %v495
    %638 = vmatprep.subr.bf16.mxu0 0
    %639 = vmatpush2.bf16.msra.mxu0 %v494
    %640 = vmatprep.subr.bf16.mxu0 0
    %641 = vmatpush2.bf16.msra.mxu0 %v493
    %642 = vmatprep.subr.bf16.mxu0 0
    %643 = vmatpush2.bf16.msra.mxu0 %v492
    %644 = vmatprep.mubr.bf16.mxu0 %v208
    %645 = vmatmul.mubr.bf16.gmra.mxu0 %v194
    %v646 = vpop.f32.mrf.mxu0
    %v647 = vadd.f32 %v168, %v646
    %v648 = vpop.f32.mrf.mxu0
    %v649 = vpop.f32.mrf.mxu0
    %v650 = vpop.f32.mrf.mxu0
    %651 = vdwg.mxu0
    %652 = vmatprep.subr.bf16.mxu0 0
    %653 = vmatpush1.bf16.msra.mxu0 %v507
    %654 = vmatprep.subr.bf16.mxu0 0
    %655 = vmatpush1.bf16.msra.mxu0 %v506
    %656 = vmatprep.subr.bf16.mxu0 0
    %657 = vmatpush1.bf16.msra.mxu0 %v505
    %658 = vmatprep.subr.bf16.mxu0 0
    %659 = vmatpush1.bf16.msra.mxu0 %v504
    %660 = vmatprep.subr.bf16.mxu0 0
    %661 = vmatpush1.bf16.msra.mxu0 %v503
    %662 = vmatprep.subr.bf16.mxu0 0
    %663 = vmatpush1.bf16.msra.mxu0 %v502
    %664 = vmatprep.subr.bf16.mxu0 0
    %665 = vmatpush1.bf16.msra.mxu0 %v501
    %666 = vmatprep.subr.bf16.mxu0 0
    %667 = vmatpush1.bf16.msra.mxu0 %v500
    %668 = vmatprep.subr.bf16.mxu0 0
    %669 = vmatpush2.bf16.msra.mxu0 %v515
    %670 = vmatprep.subr.bf16.mxu0 0
    %671 = vmatpush2.bf16.msra.mxu0 %v514
    %672 = vmatprep.subr.bf16.mxu0 0
    %673 = vmatpush2.bf16.msra.mxu0 %v513
    %674 = vmatprep.subr.bf16.mxu0 0
    %675 = vmatpush2.bf16.msra.mxu0 %v512
    %676 = vmatprep.subr.bf16.mxu0 0
    %677 = vmatpush2.bf16.msra.mxu0 %v511
    %678 = vmatprep.subr.bf16.mxu0 0
    %679 = vmatpush2.bf16.msra.mxu0 %v510
    %680 = vmatprep.subr.bf16.mxu0 0
    %681 = vmatpush2.bf16.msra.mxu0 %v509
    %682 = vmatprep.subr.bf16.mxu0 0
    %683 = vmatpush2.bf16.msra.mxu0 %v508
    %684 = vmatprep.mubr.bf16.mxu0 %v218
    %685 = vmatmul.mubr.bf16.gmra.mxu0 %v216
    %v686 = vpop.f32.mrf.mxu0
    %v687 = vadd.f32 %v647, %v686
    %v688 = vpop.f32.mrf.mxu0
    %v689 = vpop.f32.mrf.mxu0
    %v690 = vpop.f32.mrf.mxu0
    %691 = vdwg.mxu0
    %692 = vmatprep.subr.bf16.mxu0 0
    %693 = vmatpush1.bf16.msra.mxu0 %v523
    %694 = vmatprep.subr.bf16.mxu0 0
    %695 = vmatpush1.bf16.msra.mxu0 %v522
    %696 = vmatprep.subr.bf16.mxu0 0
    %697 = vmatpush1.bf16.msra.mxu0 %v521
    %698 = vmatprep.subr.bf16.mxu0 0
    %699 = vmatpush1.bf16.msra.mxu0 %v520
    %700 = vmatprep.subr.bf16.mxu0 0
    %701 = vmatpush1.bf16.msra.mxu0 %v519
    %702 = vmatprep.subr.bf16.mxu0 0
    %703 = vmatpush1.bf16.msra.mxu0 %v518
    %704 = vmatprep.subr.bf16.mxu0 0
    %705 = vmatpush1.bf16.msra.mxu0 %v517
    %706 = vmatprep.subr.bf16.mxu0 0
    %707 = vmatpush1.bf16.msra.mxu0 %v516
    %708 = vmatprep.subr.bf16.mxu0 0
    %709 = vmatpush2.bf16.msra.mxu0 %v531
    %710 = vmatprep.subr.bf16.mxu0 0
    %711 = vmatpush2.bf16.msra.mxu0 %v530
    %712 = vmatprep.subr.bf16.mxu0 0
    %713 = vmatpush2.bf16.msra.mxu0 %v529
    %714 = vmatprep.subr.bf16.mxu0 0
    %715 = vmatpush2.bf16.msra.mxu0 %v528
    %716 = vmatprep.subr.bf16.mxu0 0
    %717 = vmatpush2.bf16.msra.mxu0 %v527
    %718 = vmatprep.subr.bf16.mxu0 0
    %719 = vmatpush2.bf16.msra.mxu0 %v526
    %720 = vmatprep.subr.bf16.mxu0 0
    %721 = vmatpush2.bf16.msra.mxu0 %v525
    %722 = vmatprep.subr.bf16.mxu0 0
    %723 = vmatpush2.bf16.msra.mxu0 %v524
    %724 = vmatprep.mubr.bf16.mxu0 %v215
    %725 = vmatmul.mubr.bf16.gmra.mxu0 %v201
    %v726 = vpop.f32.mrf.mxu0
    %v727 = vadd.f32 %v687, %v726
    %v728 = vpop.f32.mrf.mxu0
    %v729 = vpop.f32.mrf.mxu0
    %v730 = vpop.f32.mrf.mxu0
    %731 = vdwg.mxu0
    %732 = vmatprep.subr.bf16.mxu0 0
    %733 = vmatpush1.bf16.msra.mxu0 %v539
    %734 = vmatprep.subr.bf16.mxu0 0
    %735 = vmatpush1.bf16.msra.mxu0 %v538
    %736 = vmatprep.subr.bf16.mxu0 0
    %737 = vmatpush1.bf16.msra.mxu0 %v537
    %738 = vmatprep.subr.bf16.mxu0 0
    %739 = vmatpush1.bf16.msra.mxu0 %v536
    %740 = vmatprep.subr.bf16.mxu0 0
    %741 = vmatpush1.bf16.msra.mxu0 %v535
    %742 = vmatprep.subr.bf16.mxu0 0
    %743 = vmatpush1.bf16.msra.mxu0 %v534
    %744 = vmatprep.subr.bf16.mxu0 0
    %745 = vmatpush1.bf16.msra.mxu0 %v533
    %746 = vmatprep.subr.bf16.mxu0 0
    %747 = vmatpush1.bf16.msra.mxu0 %v532
    %748 = vmatprep.subr.bf16.mxu0 0
    %749 = vmatpush2.bf16.msra.mxu0 %v547
    %750 = vmatprep.subr.bf16.mxu0 0
    %751 = vmatpush2.bf16.msra.mxu0 %v546
    %752 = vmatprep.subr.bf16.mxu0 0
    %753 = vmatpush2.bf16.msra.mxu0 %v545
    %754 = vmatprep.subr.bf16.mxu0 0
    %755 = vmatpush2.bf16.msra.mxu0 %v544
    %756 = vmatprep.subr.bf16.mxu0 0
    %757 = vmatpush2.bf16.msra.mxu0 %v543
    %758 = vmatprep.subr.bf16.mxu0 0
    %759 = vmatpush2.bf16.msra.mxu0 %v542
    %760 = vmatprep.subr.bf16.mxu0 0
    %761 = vmatpush2.bf16.msra.mxu0 %v541
    %762 = vmatprep.subr.bf16.mxu0 0
    %763 = vmatpush2.bf16.msra.mxu0 %v540
    %764 = vmatprep.mubr.bf16.mxu0 %v219
    %765 = vmatmul.mubr.bf16.gmra.mxu0 %v217
    %v766 = vpop.f32.mrf.mxu0
    %v767 = vadd.f32 %v727, %v766
    %v768 = vpop.f32.mrf.mxu0
    %v769 = vpop.f32.mrf.mxu0
    %v770 = vpop.f32.mrf.mxu0
    %771 = vdwg.mxu0
    %v772 = vmax.f32 %v767, 0.0
    %v773 = vld [vmem:[%s3] sm:$0xff]
    %v774 = vld [vmem:[%s3 + $0x8] sm:$0xff]
    %v775 = vld [vmem:[%s3 + $0x10] sm:$0xff]
    %v776 = vld [vmem:[%s3 + $0x18] sm:$0xff]
    %v777 = vld [vmem:[%s3 + $0x20] sm:$0xff]
    %v778 = vld [vmem:[%s3 + $0x28] sm:$0xff]
    %v779 = vld [vmem:[%s3 + $0x30] sm:$0xff]
    %v780 = vld [vmem:[%s3 + $0x38] sm:$0xff]
    %s781 = scalar_lea.vmem %s0, 8
    %v782 = vld [vmem:[%s781] sm:$0xff]
    %v784 = vcombine.high %v782, %v782
    %v786 = vunpack.c.l.s4 1966171168
    %v787 = vunpack.c.0.s8 %v786
    %v788 = vlaneseq
    %v789 = vshrl.u32 %v788, 7
    %v790 = vsub.s32 %v787, %v789
    %v791 = vrot.slane %v782, %v790
    %v793 = vunpack.c.l.s4 1966171168
    %v794 = vunpack.c.0.s8 %v793
    %v795 = vlaneseq
    %v796 = vshrl.u32 %v795, 7
    %v797 = vsub.s32 %v794, %v796
    %v798 = vrot.slane %v784, %v797
    %v799 = vcombine.high %v791, %v791
    %v800 = vcombine.high %v798, %v798
    %v802 = vunpack.c.l.s4 1966171168
    %v803 = vunpack.c.0.s8 %v802
    %v804 = vlaneseq
    %v805 = vshrl.u32 %v804, 7
    %v806 = vsub.s32 %v803, %v805
    %v807 = vrot.slane %v791, %v806
    %v809 = vunpack.c.l.s4 1966171168
    %v810 = vunpack.c.0.s8 %v809
    %v811 = vlaneseq
    %v812 = vshrl.u32 %v811, 7
    %v813 = vsub.s32 %v810, %v812
    %v814 = vrot.slane %v798, %v813
    %v816 = vunpack.c.l.s4 1966171168
    %v817 = vunpack.c.0.s8 %v816
    %v818 = vlaneseq
    %v819 = vshrl.u32 %v818, 7
    %v820 = vsub.s32 %v817, %v819
    %v821 = vrot.slane %v799, %v820
    %v823 = vunpack.c.l.s4 1966171168
    %v824 = vunpack.c.0.s8 %v823
    %v825 = vlaneseq
    %v826 = vshrl.u32 %v825, 7
    %v827 = vsub.s32 %v824, %v826
    %v828 = vrot.slane %v800, %v827
    %v829 = vcombine.high %v807, %v807
    %v830 = vcombine.high %v814, %v814
    %v831 = vcombine.high %v821, %v821
    %v832 = vcombine.high %v828, %v828
    %841 = vmatprep.subr.bf16.mxu0 0
    %842 = vmatpush1.bf16.msra.mxu0 %v491
    %843 = vmatprep.subr.bf16.mxu0 0
    %844 = vmatpush1.bf16.msra.mxu0 %v490
    %845 = vmatprep.subr.bf16.mxu0 0
    %846 = vmatpush1.bf16.msra.mxu0 %v489
    %847 = vmatprep.subr.bf16.mxu0 0
    %848 = vmatpush1.bf16.msra.mxu0 %v488
    %849 = vmatprep.subr.bf16.mxu0 0
    %850 = vmatpush1.bf16.msra.mxu0 %v487
    %851 = vmatprep.subr.bf16.mxu0 0
    %852 = vmatpush1.bf16.msra.mxu0 %v486
    %853 = vmatprep.subr.bf16.mxu0 0
    %854 = vmatpush1.bf16.msra.mxu0 %v485
    %855 = vmatprep.subr.bf16.mxu0 0
    %856 = vmatpush1.bf16.msra.mxu0 %v484
    %857 = vmatprep.subr.bf16.mxu0 0
    %858 = vmatpush2.bf16.msra.mxu0 %v499
    %859 = vmatprep.subr.bf16.mxu0 0
    %860 = vmatpush2.bf16.msra.mxu0 %v498
    %861 = vmatprep.subr.bf16.mxu0 0
    %862 = vmatpush2.bf16.msra.mxu0 %v497
    %863 = vmatprep.subr.bf16.mxu0 0
    %864 = vmatpush2.bf16.msra.mxu0 %v496
    %865 = vmatprep.subr.bf16.mxu0 0
    %866 = vmatpush2.bf16.msra.mxu0 %v495
    %867 = vmatprep.subr.bf16.mxu0 0
    %868 = vmatpush2.bf16.msra.mxu0 %v494
    %869 = vmatprep.subr.bf16.mxu0 0
    %870 = vmatpush2.bf16.msra.mxu0 %v493
    %871 = vmatprep.subr.bf16.mxu0 0
    %872 = vmatpush2.bf16.msra.mxu0 %v492
    %873 = vmatprep.mubr.bf16.mxu0 %v821
    %874 = vmatmul.mubr.bf16.gmra.mxu0 %v807
    %v875 = vpop.f32.mrf.mxu0
    %v876 = vadd.f32 %v168, %v875
    %v877 = vpop.f32.mrf.mxu0
    %v878 = vpop.f32.mrf.mxu0
    %v879 = vpop.f32.mrf.mxu0
    %880 = vdwg.mxu0
    %881 = vmatprep.subr.bf16.mxu0 0
    %882 = vmatpush1.bf16.msra.mxu0 %v507
    %883 = vmatprep.subr.bf16.mxu0 0
    %884 = vmatpush1.bf16.msra.mxu0 %v506
    %885 = vmatprep.subr.bf16.mxu0 0
    %886 = vmatpush1.bf16.msra.mxu0 %v505
    %887 = vmatprep.subr.bf16.mxu0 0
    %888 = vmatpush1.bf16.msra.mxu0 %v504
    %889 = vmatprep.subr.bf16.mxu0 0
    %890 = vmatpush1.bf16.msra.mxu0 %v503
    %891 = vmatprep.subr.bf16.mxu0 0
    %892 = vmatpush1.bf16.msra.mxu0 %v502
    %893 = vmatprep.subr.bf16.mxu0 0
    %894 = vmatpush1.bf16.msra.mxu0 %v501
    %895 = vmatprep.subr.bf16.mxu0 0
    %896 = vmatpush1.bf16.msra.mxu0 %v500
    %897 = vmatprep.subr.bf16.mxu0 0
    %898 = vmatpush2.bf16.msra.mxu0 %v515
    %899 = vmatprep.subr.bf16.mxu0 0
    %900 = vmatpush2.bf16.msra.mxu0 %v514
    %901 = vmatprep.subr.bf16.mxu0 0
    %902 = vmatpush2.bf16.msra.mxu0 %v513
    %903 = vmatprep.subr.bf16.mxu0 0
    %904 = vmatpush2.bf16.msra.mxu0 %v512
    %905 = vmatprep.subr.bf16.mxu0 0
    %906 = vmatpush2.bf16.msra.mxu0 %v511
    %907 = vmatprep.subr.bf16.mxu0 0
    %908 = vmatpush2.bf16.msra.mxu0 %v510
    %909 = vmatprep.subr.bf16.mxu0 0
    %910 = vmatpush2.bf16.msra.mxu0 %v509
    %911 = vmatprep.subr.bf16.mxu0 0
    %912 = vmatpush2.bf16.msra.mxu0 %v508
    %913 = vmatprep.mubr.bf16.mxu0 %v831
    %914 = vmatmul.mubr.bf16.gmra.mxu0 %v829
    %v915 = vpop.f32.mrf.mxu0
    %v916 = vadd.f32 %v876, %v915
    %v917 = vpop.f32.mrf.mxu0
    %v918 = vpop.f32.mrf.mxu0
    %v919 = vpop.f32.mrf.mxu0
    %920 = vdwg.mxu0
    %921 = vmatprep.subr.bf16.mxu0 0
    %922 = vmatpush1.bf16.msra.mxu0 %v523
    %923 = vmatprep.subr.bf16.mxu0 0
    %924 = vmatpush1.bf16.msra.mxu0 %v522
    %925 = vmatprep.subr.bf16.mxu0 0
    %926 = vmatpush1.bf16.msra.mxu0 %v521
    %927 = vmatprep.subr.bf16.mxu0 0
    %928 = vmatpush1.bf16.msra.mxu0 %v520
    %929 = vmatprep.subr.bf16.mxu0 0
    %930 = vmatpush1.bf16.msra.mxu0 %v519
    %931 = vmatprep.subr.bf16.mxu0 0
    %932 = vmatpush1.bf16.msra.mxu0 %v518
    %933 = vmatprep.subr.bf16.mxu0 0
    %934 = vmatpush1.bf16.msra.mxu0 %v517
    %935 = vmatprep.subr.bf16.mxu0 0
    %936 = vmatpush1.bf16.msra.mxu0 %v516
    %937 = vmatprep.subr.bf16.mxu0 0
    %938 = vmatpush2.bf16.msra.mxu0 %v531
    %939 = vmatprep.subr.bf16.mxu0 0
    %940 = vmatpush2.bf16.msra.mxu0 %v530
    %941 = vmatprep.subr.bf16.mxu0 0
    %942 = vmatpush2.bf16.msra.mxu0 %v529
    %943 = vmatprep.subr.bf16.mxu0 0
    %944 = vmatpush2.bf16.msra.mxu0 %v528
    %945 = vmatprep.subr.bf16.mxu0 0
    %946 = vmatpush2.bf16.msra.mxu0 %v527
    %947 = vmatprep.subr.bf16.mxu0 0
    %948 = vmatpush2.bf16.msra.mxu0 %v526
    %949 = vmatprep.subr.bf16.mxu0 0
    %950 = vmatpush2.bf16.msra.mxu0 %v525
    %951 = vmatprep.subr.bf16.mxu0 0
    %952 = vmatpush2.bf16.msra.mxu0 %v524
    %953 = vmatprep.mubr.bf16.mxu0 %v828
    %954 = vmatmul.mubr.bf16.gmra.mxu0 %v814
    %v955 = vpop.f32.mrf.mxu0
    %v956 = vadd.f32 %v916, %v955
    %v957 = vpop.f32.mrf.mxu0
    %v958 = vpop.f32.mrf.mxu0
    %v959 = vpop.f32.mrf.mxu0
    %960 = vdwg.mxu0
    %961 = vmatprep.subr.bf16.mxu0 0
    %962 = vmatpush1.bf16.msra.mxu0 %v539
    %963 = vmatprep.subr.bf16.mxu0 0
    %964 = vmatpush1.bf16.msra.mxu0 %v538
    %965 = vmatprep.subr.bf16.mxu0 0
    %966 = vmatpush1.bf16.msra.mxu0 %v537
    %967 = vmatprep.subr.bf16.mxu0 0
    %968 = vmatpush1.bf16.msra.mxu0 %v536
    %969 = vmatprep.subr.bf16.mxu0 0
    %970 = vmatpush1.bf16.msra.mxu0 %v535
    %971 = vmatprep.subr.bf16.mxu0 0
    %972 = vmatpush1.bf16.msra.mxu0 %v534
    %973 = vmatprep.subr.bf16.mxu0 0
    %974 = vmatpush1.bf16.msra.mxu0 %v533
    %975 = vmatprep.subr.bf16.mxu0 0
    %976 = vmatpush1.bf16.msra.mxu0 %v532
    %977 = vmatprep.subr.bf16.mxu0 0
    %978 = vmatpush2.bf16.msra.mxu0 %v547
    %979 = vmatprep.subr.bf16.mxu0 0
    %980 = vmatpush2.bf16.msra.mxu0 %v546
    %981 = vmatprep.subr.bf16.mxu0 0
    %982 = vmatpush2.bf16.msra.mxu0 %v545
    %983 = vmatprep.subr.bf16.mxu0 0
    %984 = vmatpush2.bf16.msra.mxu0 %v544
    %985 = vmatprep.subr.bf16.mxu0 0
    %986 = vmatpush2.bf16.msra.mxu0 %v543
    %987 = vmatprep.subr.bf16.mxu0 0
    %988 = vmatpush2.bf16.msra.mxu0 %v542
    %989 = vmatprep.subr.bf16.mxu0 0
    %990 = vmatpush2.bf16.msra.mxu0 %v541
    %991 = vmatprep.subr.bf16.mxu0 0
    %992 = vmatpush2.bf16.msra.mxu0 %v540
    %993 = vmatprep.mubr.bf16.mxu0 %v832
    %994 = vmatmul.mubr.bf16.gmra.mxu0 %v830
    %v995 = vpop.f32.mrf.mxu0
    %v996 = vadd.f32 %v956, %v995
    %v997 = vpop.f32.mrf.mxu0
    %v998 = vpop.f32.mrf.mxu0
    %v999 = vpop.f32.mrf.mxu0
    %1000 = vdwg.mxu0
    %v1001 = vmax.f32 %v996, 0.0
    %s1002 = scalar_lea.vmem %s3, 64
    %v1003 = vld [vmem:[%s1002] sm:$0xff]
    %v1004 = vld [vmem:[%s1002 + $0x8] sm:$0xff]
    %v1005 = vld [vmem:[%s1002 + $0x10] sm:$0xff]
    %v1006 = vld [vmem:[%s1002 + $0x18] sm:$0xff]
    %v1007 = vld [vmem:[%s1002 + $0x20] sm:$0xff]
    %v1008 = vld [vmem:[%s1002 + $0x28] sm:$0xff]
    %v1009 = vld [vmem:[%s1002 + $0x30] sm:$0xff]
    %v1010 = vld [vmem:[%s1002 + $0x38] sm:$0xff]
    %vm1011 = vcmask 523264
    %v1013 = vsel %vm1011, %v1001, 0
    %1015 = vmatprep.subr.mxu0 0.0
    %1016 = vmatpush1.msra.mxu0 0.0
    %1017 = vmatprep.subr.mxu0 0.0
    %1018 = vmatpush1.msra.mxu0 0.0
    %1019 = vmatprep.subr.mxu0 0.0
    %1020 = vmatpush1.msra.mxu0 0.0
    %1021 = vmatprep.subr.mxu0 0.0
    %1022 = vmatpush1.msra.mxu0 0.0
    %1023 = vmatprep.subr.mxu0 0.0
    %1024 = vmatpush1.msra.mxu0 0.0
    %1025 = vmatprep.subr.mxu0 0.0
    %1026 = vmatpush1.msra.mxu0 0.0
    %1027 = vmatprep.subr.mxu0 0.0
    %1028 = vmatpush1.msra.mxu0 0.0
    %1029 = vmatprep.subr.mxu0 0.0
    %1030 = vmatpush1.msra.mxu0 0.0
    %1031 = vmatprep.subr.mxu0 0.0
    %1032 = vmatpush1.msra.mxu0 %v1010
    %1033 = vmatprep.subr.mxu0 0.0
    %1034 = vmatpush1.msra.mxu0 %v1009
    %1035 = vmatprep.subr.mxu0 0.0
    %1036 = vmatpush1.msra.mxu0 %v1008
    %1037 = vmatprep.subr.mxu0 0.0
    %1038 = vmatpush1.msra.mxu0 %v1007
    %1039 = vmatprep.subr.mxu0 0.0
    %1040 = vmatpush1.msra.mxu0 %v1006
    %1041 = vmatprep.subr.mxu0 0.0
    %1042 = vmatpush1.msra.mxu0 %v1005
    %1043 = vmatprep.subr.mxu0 0.0
    %1044 = vmatpush1.msra.mxu0 %v1004
    %1045 = vmatprep.subr.mxu0 0.0
    %1046 = vmatpush1.msra.mxu0 %v1003
    %1047 = vmatprep.subr.mxu0 0.0
    %1048 = vmatpush2.msra.mxu0 0.0
    %1049 = vmatprep.subr.mxu0 0.0
    %1050 = vmatpush2.msra.mxu0 0.0
    %1051 = vmatprep.subr.mxu0 0.0
    %1052 = vmatpush2.msra.mxu0 0.0
    %1053 = vmatprep.subr.mxu0 0.0
    %1054 = vmatpush2.msra.mxu0 0.0
    %1055 = vmatprep.subr.mxu0 0.0
    %1056 = vmatpush2.msra.mxu0 0.0
    %1057 = vmatprep.subr.mxu0 0.0
    %1058 = vmatpush2.msra.mxu0 0.0
    %1059 = vmatprep.subr.mxu0 0.0
    %1060 = vmatpush2.msra.mxu0 0.0
    %1061 = vmatprep.subr.mxu0 0.0
    %1062 = vmatpush2.msra.mxu0 0.0
    %1063 = vmatprep.subr.mxu0 0.0
    %1064 = vmatpush2.msra.mxu0 0.0
    %1065 = vmatprep.subr.mxu0 0.0
    %1066 = vmatpush2.msra.mxu0 0.0
    %1067 = vmatprep.subr.mxu0 0.0
    %1068 = vmatpush2.msra.mxu0 0.0
    %1069 = vmatprep.subr.mxu0 0.0
    %1070 = vmatpush2.msra.mxu0 0.0
    %1071 = vmatprep.subr.mxu0 0.0
    %1072 = vmatpush2.msra.mxu0 0.0
    %1073 = vmatprep.subr.mxu0 0.0
    %1074 = vmatpush2.msra.mxu0 0.0
    %1075 = vmatprep.subr.mxu0 0.0
    %1076 = vmatpush2.msra.mxu0 0.0
    %1077 = vmatprep.subr.mxu0 0.0
    %1078 = vmatpush2.msra.mxu0 0.0
    %1079 = vmatprep.mubr.f32.mxu0 0.0
    %1080 = vmatmul.mubr.f32.gmra.mxu0 %v1013
    %v1081 = vpop.f32.mrf.mxu0
    %v1082 = vadd.f32 0.0, %v1081
    %v1083 = vpop.f32.mrf.mxu0
    %1084 = vdwg.mxu0
    %v1086 = vsel %vm1011, %v772, 0
    %1088 = vmatprep.subr.mxu0 0.0
    %1089 = vmatpush1.msra.mxu0 0.0
    %1090 = vmatprep.subr.mxu0 0.0
    %1091 = vmatpush1.msra.mxu0 0.0
    %1092 = vmatprep.subr.mxu0 0.0
    %1093 = vmatpush1.msra.mxu0 0.0
    %1094 = vmatprep.subr.mxu0 0.0
    %1095 = vmatpush1.msra.mxu0 0.0
    %1096 = vmatprep.subr.mxu0 0.0
    %1097 = vmatpush1.msra.mxu0 0.0
    %1098 = vmatprep.subr.mxu0 0.0
    %1099 = vmatpush1.msra.mxu0 0.0
    %1100 = vmatprep.subr.mxu0 0.0
    %1101 = vmatpush1.msra.mxu0 0.0
    %1102 = vmatprep.subr.mxu0 0.0
    %1103 = vmatpush1.msra.mxu0 0.0
    %1104 = vmatprep.subr.mxu0 0.0
    %1105 = vmatpush1.msra.mxu0 %v780
    %1106 = vmatprep.subr.mxu0 0.0
    %1107 = vmatpush1.msra.mxu0 %v779
    %1108 = vmatprep.subr.mxu0 0.0
    %1109 = vmatpush1.msra.mxu0 %v778
    %1110 = vmatprep.subr.mxu0 0.0
    %1111 = vmatpush1.msra.mxu0 %v777
    %1112 = vmatprep.subr.mxu0 0.0
    %1113 = vmatpush1.msra.mxu0 %v776
    %1114 = vmatprep.subr.mxu0 0.0
    %1115 = vmatpush1.msra.mxu0 %v775
    %1116 = vmatprep.subr.mxu0 0.0
    %1117 = vmatpush1.msra.mxu0 %v774
    %1118 = vmatprep.subr.mxu0 0.0
    %1119 = vmatpush1.msra.mxu0 %v773
    %1120 = vmatprep.subr.mxu0 0.0
    %1121 = vmatpush2.msra.mxu0 0.0
    %1122 = vmatprep.subr.mxu0 0.0
    %1123 = vmatpush2.msra.mxu0 0.0
    %1124 = vmatprep.subr.mxu0 0.0
    %1125 = vmatpush2.msra.mxu0 0.0
    %1126 = vmatprep.subr.mxu0 0.0
    %1127 = vmatpush2.msra.mxu0 0.0
    %1128 = vmatprep.subr.mxu0 0.0
    %1129 = vmatpush2.msra.mxu0 0.0
    %1130 = vmatprep.subr.mxu0 0.0
    %1131 = vmatpush2.msra.mxu0 0.0
    %1132 = vmatprep.subr.mxu0 0.0
    %1133 = vmatpush2.msra.mxu0 0.0
    %1134 = vmatprep.subr.mxu0 0.0
    %1135 = vmatpush2.msra.mxu0 0.0
    %1136 = vmatprep.subr.mxu0 0.0
    %1137 = vmatpush2.msra.mxu0 0.0
    %1138 = vmatprep.subr.mxu0 0.0
    %1139 = vmatpush2.msra.mxu0 0.0
    %1140 = vmatprep.subr.mxu0 0.0
    %1141 = vmatpush2.msra.mxu0 0.0
    %1142 = vmatprep.subr.mxu0 0.0
    %1143 = vmatpush2.msra.mxu0 0.0
    %1144 = vmatprep.subr.mxu0 0.0
    %1145 = vmatpush2.msra.mxu0 0.0
    %1146 = vmatprep.subr.mxu0 0.0
    %1147 = vmatpush2.msra.mxu0 0.0
    %1148 = vmatprep.subr.mxu0 0.0
    %1149 = vmatpush2.msra.mxu0 0.0
    %1150 = vmatprep.subr.mxu0 0.0
    %1151 = vmatpush2.msra.mxu0 0.0
    %1152 = vmatprep.mubr.f32.mxu0 0.0
    %1153 = vmatmul.mubr.f32.gmra.mxu0 %v1086
    %v1154 = vpop.f32.mrf.mxu0
    %v1155 = vadd.f32 %v1082, %v1154
    %v1156 = vpop.f32.mrf.mxu0
    %1157 = vdwg.mxu0
    %s1158 = scalar_lea.vmem %s0, 16
    %v1159 = vld [vmem:[%s1158] sm:$0xff]
    %v1161 = vcombine.high %v1159, %v1159
    %v1163 = vunpack.c.l.s4 1966171168
    %v1164 = vunpack.c.0.s8 %v1163
    %v1165 = vlaneseq
    %v1166 = vshrl.u32 %v1165, 7
    %v1167 = vsub.s32 %v1164, %v1166
    %v1168 = vrot.slane %v1159, %v1167
    %v1170 = vunpack.c.l.s4 1966171168
    %v1171 = vunpack.c.0.s8 %v1170
    %v1172 = vlaneseq
    %v1173 = vshrl.u32 %v1172, 7
    %v1174 = vsub.s32 %v1171, %v1173
    %v1175 = vrot.slane %v1161, %v1174
    %v1176 = vcombine.high %v1168, %v1168
    %v1177 = vcombine.high %v1175, %v1175
    %v1179 = vunpack.c.l.s4 1966171168
    %v1180 = vunpack.c.0.s8 %v1179
    %v1181 = vlaneseq
    %v1182 = vshrl.u32 %v1181, 7
    %v1183 = vsub.s32 %v1180, %v1182
    %v1184 = vrot.slane %v1168, %v1183
    %v1186 = vunpack.c.l.s4 1966171168
    %v1187 = vunpack.c.0.s8 %v1186
    %v1188 = vlaneseq
    %v1189 = vshrl.u32 %v1188, 7
    %v1190 = vsub.s32 %v1187, %v1189
    %v1191 = vrot.slane %v1175, %v1190
    %v1193 = vunpack.c.l.s4 1966171168
    %v1194 = vunpack.c.0.s8 %v1193
    %v1195 = vlaneseq
    %v1196 = vshrl.u32 %v1195, 7
    %v1197 = vsub.s32 %v1194, %v1196
    %v1198 = vrot.slane %v1176, %v1197
    %v1200 = vunpack.c.l.s4 1966171168
    %v1201 = vunpack.c.0.s8 %v1200
    %v1202 = vlaneseq
    %v1203 = vshrl.u32 %v1202, 7
    %v1204 = vsub.s32 %v1201, %v1203
    %v1205 = vrot.slane %v1177, %v1204
    %v1206 = vcombine.high %v1184, %v1184
    %v1207 = vcombine.high %v1191, %v1191
    %v1208 = vcombine.high %v1198, %v1198
    %v1209 = vcombine.high %v1205, %v1205
    %1218 = vmatprep.subr.bf16.mxu0 0
    %1219 = vmatpush1.bf16.msra.mxu0 %v491
    %1220 = vmatprep.subr.bf16.mxu0 0
    %1221 = vmatpush1.bf16.msra.mxu0 %v490
    %1222 = vmatprep.subr.bf16.mxu0 0
    %1223 = vmatpush1.bf16.msra.mxu0 %v489
    %1224 = vmatprep.subr.bf16.mxu0 0
    %1225 = vmatpush1.bf16.msra.mxu0 %v488
    %1226 = vmatprep.subr.bf16.mxu0 0
    %1227 = vmatpush1.bf16.msra.mxu0 %v487
    %1228 = vmatprep.subr.bf16.mxu0 0
    %1229 = vmatpush1.bf16.msra.mxu0 %v486
    %1230 = vmatprep.subr.bf16.mxu0 0
    %1231 = vmatpush1.bf16.msra.mxu0 %v485
    %1232 = vmatprep.subr.bf16.mxu0 0
    %1233 = vmatpush1.bf16.msra.mxu0 %v484
    %1234 = vmatprep.subr.bf16.mxu0 0
    %1235 = vmatpush2.bf16.msra.mxu0 %v499
    %1236 = vmatprep.subr.bf16.mxu0 0
    %1237 = vmatpush2.bf16.msra.mxu0 %v498
    %1238 = vmatprep.subr.bf16.mxu0 0
    %1239 = vmatpush2.bf16.msra.mxu0 %v497
    %1240 = vmatprep.subr.bf16.mxu0 0
    %1241 = vmatpush2.bf16.msra.mxu0 %v496
    %1242 = vmatprep.subr.bf16.mxu0 0
    %1243 = vmatpush2.bf16.msra.mxu0 %v495
    %1244 = vmatprep.subr.bf16.mxu0 0
    %1245 = vmatpush2.bf16.msra.mxu0 %v494
    %1246 = vmatprep.subr.bf16.mxu0 0
    %1247 = vmatpush2.bf16.msra.mxu0 %v493
    %1248 = vmatprep.subr.bf16.mxu0 0
    %1249 = vmatpush2.bf16.msra.mxu0 %v492
    %1250 = vmatprep.mubr.bf16.mxu0 %v1198
    %1251 = vmatmul.mubr.bf16.gmra.mxu0 %v1184
    %v1252 = vpop.f32.mrf.mxu0
    %v1253 = vadd.f32 %v168, %v1252
    %v1254 = vpop.f32.mrf.mxu0
    %v1255 = vpop.f32.mrf.mxu0
    %v1256 = vpop.f32.mrf.mxu0
    %1257 = vdwg.mxu0
    %1258 = vmatprep.subr.bf16.mxu0 0
    %1259 = vmatpush1.bf16.msra.mxu0 %v507
    %1260 = vmatprep.subr.bf16.mxu0 0
    %1261 = vmatpush1.bf16.msra.mxu0 %v506
    %1262 = vmatprep.subr.bf16.mxu0 0
    %1263 = vmatpush1.bf16.msra.mxu0 %v505
    %1264 = vmatprep.subr.bf16.mxu0 0
    %1265 = vmatpush1.bf16.msra.mxu0 %v504
    %1266 = vmatprep.subr.bf16.mxu0 0
    %1267 = vmatpush1.bf16.msra.mxu0 %v503
    %1268 = vmatprep.subr.bf16.mxu0 0
    %1269 = vmatpush1.bf16.msra.mxu0 %v502
    %1270 = vmatprep.subr.bf16.mxu0 0
    %1271 = vmatpush1.bf16.msra.mxu0 %v501
    %1272 = vmatprep.subr.bf16.mxu0 0
    %1273 = vmatpush1.bf16.msra.mxu0 %v500
    %1274 = vmatprep.subr.bf16.mxu0 0
    %1275 = vmatpush2.bf16.msra.mxu0 %v515
    %1276 = vmatprep.subr.bf16.mxu0 0
    %1277 = vmatpush2.bf16.msra.mxu0 %v514
    %1278 = vmatprep.subr.bf16.mxu0 0
    %1279 = vmatpush2.bf16.msra.mxu0 %v513
    %1280 = vmatprep.subr.bf16.mxu0 0
    %1281 = vmatpush2.bf16.msra.mxu0 %v512
    %1282 = vmatprep.subr.bf16.mxu0 0
    %1283 = vmatpush2.bf16.msra.mxu0 %v511
    %1284 = vmatprep.subr.bf16.mxu0 0
    %1285 = vmatpush2.bf16.msra.mxu0 %v510
    %1286 = vmatprep.subr.bf16.mxu0 0
    %1287 = vmatpush2.bf16.msra.mxu0 %v509
    %1288 = vmatprep.subr.bf16.mxu0 0
    %1289 = vmatpush2.bf16.msra.mxu0 %v508
    %1290 = vmatprep.mubr.bf16.mxu0 %v1208
    %1291 = vmatmul.mubr.bf16.gmra.mxu0 %v1206
    %v1292 = vpop.f32.mrf.mxu0
    %v1293 = vadd.f32 %v1253, %v1292
    %v1294 = vpop.f32.mrf.mxu0
    %v1295 = vpop.f32.mrf.mxu0
    %v1296 = vpop.f32.mrf.mxu0
    %1297 = vdwg.mxu0
    %1298 = vmatprep.subr.bf16.mxu0 0
    %1299 = vmatpush1.bf16.msra.mxu0 %v523
    %1300 = vmatprep.subr.bf16.mxu0 0
    %1301 = vmatpush1.bf16.msra.mxu0 %v522
    %1302 = vmatprep.subr.bf16.mxu0 0
    %1303 = vmatpush1.bf16.msra.mxu0 %v521
    %1304 = vmatprep.subr.bf16.mxu0 0
    %1305 = vmatpush1.bf16.msra.mxu0 %v520
    %1306 = vmatprep.subr.bf16.mxu0 0
    %1307 = vmatpush1.bf16.msra.mxu0 %v519
    %1308 = vmatprep.subr.bf16.mxu0 0
    %1309 = vmatpush1.bf16.msra.mxu0 %v518
    %1310 = vmatprep.subr.bf16.mxu0 0
    %1311 = vmatpush1.bf16.msra.mxu0 %v517
    %1312 = vmatprep.subr.bf16.mxu0 0
    %1313 = vmatpush1.bf16.msra.mxu0 %v516
    %1314 = vmatprep.subr.bf16.mxu0 0
    %1315 = vmatpush2.bf16.msra.mxu0 %v531
    %1316 = vmatprep.subr.bf16.mxu0 0
    %1317 = vmatpush2.bf16.msra.mxu0 %v530
    %1318 = vmatprep.subr.bf16.mxu0 0
    %1319 = vmatpush2.bf16.msra.mxu0 %v529
    %1320 = vmatprep.subr.bf16.mxu0 0
    %1321 = vmatpush2.bf16.msra.mxu0 %v528
    %1322 = vmatprep.subr.bf16.mxu0 0
    %1323 = vmatpush2.bf16.msra.mxu0 %v527
    %1324 = vmatprep.subr.bf16.mxu0 0
    %1325 = vmatpush2.bf16.msra.mxu0 %v526
    %1326 = vmatprep.subr.bf16.mxu0 0
    %1327 = vmatpush2.bf16.msra.mxu0 %v525
    %1328 = vmatprep.subr.bf16.mxu0 0
    %1329 = vmatpush2.bf16.msra.mxu0 %v524
    %1330 = vmatprep.mubr.bf16.mxu0 %v1205
    %1331 = vmatmul.mubr.bf16.gmra.mxu0 %v1191
    %v1332 = vpop.f32.mrf.mxu0
    %v1333 = vadd.f32 %v1293, %v1332
    %v1334 = vpop.f32.mrf.mxu0
    %v1335 = vpop.f32.mrf.mxu0
    %v1336 = vpop.f32.mrf.mxu0
    %1337 = vdwg.mxu0
    %1338 = vmatprep.subr.bf16.mxu0 0
    %1339 = vmatpush1.bf16.msra.mxu0 %v539
    %1340 = vmatprep.subr.bf16.mxu0 0
    %1341 = vmatpush1.bf16.msra.mxu0 %v538
    %1342 = vmatprep.subr.bf16.mxu0 0
    %1343 = vmatpush1.bf16.msra.mxu0 %v537
    %1344 = vmatprep.subr.bf16.mxu0 0
    %1345 = vmatpush1.bf16.msra.mxu0 %v536
    %1346 = vmatprep.subr.bf16.mxu0 0
    %1347 = vmatpush1.bf16.msra.mxu0 %v535
    %1348 = vmatprep.subr.bf16.mxu0 0
    %1349 = vmatpush1.bf16.msra.mxu0 %v534
    %1350 = vmatprep.subr.bf16.mxu0 0
    %1351 = vmatpush1.bf16.msra.mxu0 %v533
    %1352 = vmatprep.subr.bf16.mxu0 0
    %1353 = vmatpush1.bf16.msra.mxu0 %v532
    %1354 = vmatprep.subr.bf16.mxu0 0
    %1355 = vmatpush2.bf16.msra.mxu0 %v547
    %1356 = vmatprep.subr.bf16.mxu0 0
    %1357 = vmatpush2.bf16.msra.mxu0 %v546
    %1358 = vmatprep.subr.bf16.mxu0 0
    %1359 = vmatpush2.bf16.msra.mxu0 %v545
    %1360 = vmatprep.subr.bf16.mxu0 0
    %1361 = vmatpush2.bf16.msra.mxu0 %v544
    %1362 = vmatprep.subr.bf16.mxu0 0
    %1363 = vmatpush2.bf16.msra.mxu0 %v543
    %1364 = vmatprep.subr.bf16.mxu0 0
    %1365 = vmatpush2.bf16.msra.mxu0 %v542
    %1366 = vmatprep.subr.bf16.mxu0 0
    %1367 = vmatpush2.bf16.msra.mxu0 %v541
    %1368 = vmatprep.subr.bf16.mxu0 0
    %1369 = vmatpush2.bf16.msra.mxu0 %v540
    %1370 = vmatprep.mubr.bf16.mxu0 %v1209
    %1371 = vmatmul.mubr.bf16.gmra.mxu0 %v1207
    %v1372 = vpop.f32.mrf.mxu0
    %v1373 = vadd.f32 %v1333, %v1372
    %v1374 = vpop.f32.mrf.mxu0
    %v1375 = vpop.f32.mrf.mxu0
    %v1376 = vpop.f32.mrf.mxu0
    %1377 = vdwg.mxu0
    %v1378 = vmax.f32 %v1373, 0.0
    %s1379 = scalar_lea.vmem %s3, 128
    %v1380 = vld [vmem:[%s1379] sm:$0xff]
    %v1381 = vld [vmem:[%s1379 + $0x8] sm:$0xff]
    %v1382 = vld [vmem:[%s1379 + $0x10] sm:$0xff]
    %v1383 = vld [vmem:[%s1379 + $0x18] sm:$0xff]
    %v1384 = vld [vmem:[%s1379 + $0x20] sm:$0xff]
    %v1385 = vld [vmem:[%s1379 + $0x28] sm:$0xff]
    %v1386 = vld [vmem:[%s1379 + $0x30] sm:$0xff]
    %v1387 = vld [vmem:[%s1379 + $0x38] sm:$0xff]
    %v1389 = vsel %vm1011, %v1378, 0
    %1391 = vmatprep.subr.mxu0 0.0
    %1392 = vmatpush1.msra.mxu0 0.0
    %1393 = vmatprep.subr.mxu0 0.0
    %1394 = vmatpush1.msra.mxu0 0.0
    %1395 = vmatprep.subr.mxu0 0.0
    %1396 = vmatpush1.msra.mxu0 0.0
    %1397 = vmatprep.subr.mxu0 0.0
    %1398 = vmatpush1.msra.mxu0 0.0
    %1399 = vmatprep.subr.mxu0 0.0
    %1400 = vmatpush1.msra.mxu0 0.0
    %1401 = vmatprep.subr.mxu0 0.0
    %1402 = vmatpush1.msra.mxu0 0.0
    %1403 = vmatprep.subr.mxu0 0.0
    %1404 = vmatpush1.msra.mxu0 0.0
    %1405 = vmatprep.subr.mxu0 0.0
    %1406 = vmatpush1.msra.mxu0 0.0
    %1407 = vmatprep.subr.mxu0 0.0
    %1408 = vmatpush1.msra.mxu0 %v1387
    %1409 = vmatprep.subr.mxu0 0.0
    %1410 = vmatpush1.msra.mxu0 %v1386
    %1411 = vmatprep.subr.mxu0 0.0
    %1412 = vmatpush1.msra.mxu0 %v1385
    %1413 = vmatprep.subr.mxu0 0.0
    %1414 = vmatpush1.msra.mxu0 %v1384
    %1415 = vmatprep.subr.mxu0 0.0
    %1416 = vmatpush1.msra.mxu0 %v1383
    %1417 = vmatprep.subr.mxu0 0.0
    %1418 = vmatpush1.msra.mxu0 %v1382
    %1419 = vmatprep.subr.mxu0 0.0
    %1420 = vmatpush1.msra.mxu0 %v1381
    %1421 = vmatprep.subr.mxu0 0.0
    %1422 = vmatpush1.msra.mxu0 %v1380
    %1423 = vmatprep.subr.mxu0 0.0
    %1424 = vmatpush2.msra.mxu0 0.0
    %1425 = vmatprep.subr.mxu0 0.0
    %1426 = vmatpush2.msra.mxu0 0.0
    %1427 = vmatprep.subr.mxu0 0.0
    %1428 = vmatpush2.msra.mxu0 0.0
    %1429 = vmatprep.subr.mxu0 0.0
    %1430 = vmatpush2.msra.mxu0 0.0
    %1431 = vmatprep.subr.mxu0 0.0
    %1432 = vmatpush2.msra.mxu0 0.0
    %1433 = vmatprep.subr.mxu0 0.0
    %1434 = vmatpush2.msra.mxu0 0.0
    %1435 = vmatprep.subr.mxu0 0.0
    %1436 = vmatpush2.msra.mxu0 0.0
    %1437 = vmatprep.subr.mxu0 0.0
    %1438 = vmatpush2.msra.mxu0 0.0
    %1439 = vmatprep.subr.mxu0 0.0
    %1440 = vmatpush2.msra.mxu0 0.0
    %1441 = vmatprep.subr.mxu0 0.0
    %1442 = vmatpush2.msra.mxu0 0.0
    %1443 = vmatprep.subr.mxu0 0.0
    %1444 = vmatpush2.msra.mxu0 0.0
    %1445 = vmatprep.subr.mxu0 0.0
    %1446 = vmatpush2.msra.mxu0 0.0
    %1447 = vmatprep.subr.mxu0 0.0
    %1448 = vmatpush2.msra.mxu0 0.0
    %1449 = vmatprep.subr.mxu0 0.0
    %1450 = vmatpush2.msra.mxu0 0.0
    %1451 = vmatprep.subr.mxu0 0.0
    %1452 = vmatpush2.msra.mxu0 0.0
    %1453 = vmatprep.subr.mxu0 0.0
    %1454 = vmatpush2.msra.mxu0 0.0
    %1455 = vmatprep.mubr.f32.mxu0 0.0
    %1456 = vmatmul.mubr.f32.gmra.mxu0 %v1389
    %v1457 = vpop.f32.mrf.mxu0
    %v1458 = vadd.f32 0.0, %v1457
    %v1459 = vpop.f32.mrf.mxu0
    %1460 = vdwg.mxu0
    %v1461 = vadd.f32 %v1155, %v1458
    %s1462 = scalar_lea.vmem %s0, 24
    %v1463 = vld [vmem:[%s1462] sm:$0xff]
    %v1465 = vcombine.high %v1463, %v1463
    %v1467 = vunpack.c.l.s4 1966171168
    %v1468 = vunpack.c.0.s8 %v1467
    %v1469 = vlaneseq
    %v1470 = vshrl.u32 %v1469, 7
    %v1471 = vsub.s32 %v1468, %v1470
    %v1472 = vrot.slane %v1463, %v1471
    %v1474 = vunpack.c.l.s4 1966171168
    %v1475 = vunpack.c.0.s8 %v1474
    %v1476 = vlaneseq
    %v1477 = vshrl.u32 %v1476, 7
    %v1478 = vsub.s32 %v1475, %v1477
    %v1479 = vrot.slane %v1465, %v1478
    %v1480 = vcombine.high %v1472, %v1472
    %v1481 = vcombine.high %v1479, %v1479
    %v1483 = vunpack.c.l.s4 1966171168
    %v1484 = vunpack.c.0.s8 %v1483
    %v1485 = vlaneseq
    %v1486 = vshrl.u32 %v1485, 7
    %v1487 = vsub.s32 %v1484, %v1486
    %v1488 = vrot.slane %v1472, %v1487
    %v1490 = vunpack.c.l.s4 1966171168
    %v1491 = vunpack.c.0.s8 %v1490
    %v1492 = vlaneseq
    %v1493 = vshrl.u32 %v1492, 7
    %v1494 = vsub.s32 %v1491, %v1493
    %v1495 = vrot.slane %v1479, %v1494
    %v1497 = vunpack.c.l.s4 1966171168
    %v1498 = vunpack.c.0.s8 %v1497
    %v1499 = vlaneseq
    %v1500 = vshrl.u32 %v1499, 7
    %v1501 = vsub.s32 %v1498, %v1500
    %v1502 = vrot.slane %v1480, %v1501
    %v1504 = vunpack.c.l.s4 1966171168
    %v1505 = vunpack.c.0.s8 %v1504
    %v1506 = vlaneseq
    %v1507 = vshrl.u32 %v1506, 7
    %v1508 = vsub.s32 %v1505, %v1507
    %v1509 = vrot.slane %v1481, %v1508
    %v1510 = vcombine.high %v1488, %v1488
    %v1511 = vcombine.high %v1495, %v1495
    %v1512 = vcombine.high %v1502, %v1502
    %v1513 = vcombine.high %v1509, %v1509
    %1522 = vmatprep.subr.bf16.mxu0 0
    %1523 = vmatpush1.bf16.msra.mxu0 %v491
    %1524 = vmatprep.subr.bf16.mxu0 0
    %1525 = vmatpush1.bf16.msra.mxu0 %v490
    %1526 = vmatprep.subr.bf16.mxu0 0
    %1527 = vmatpush1.bf16.msra.mxu0 %v489
    %1528 = vmatprep.subr.bf16.mxu0 0
    %1529 = vmatpush1.bf16.msra.mxu0 %v488
    %1530 = vmatprep.subr.bf16.mxu0 0
    %1531 = vmatpush1.bf16.msra.mxu0 %v487
    %1532 = vmatprep.subr.bf16.mxu0 0
    %1533 = vmatpush1.bf16.msra.mxu0 %v486
    %1534 = vmatprep.subr.bf16.mxu0 0
    %1535 = vmatpush1.bf16.msra.mxu0 %v485
    %1536 = vmatprep.subr.bf16.mxu0 0
    %1537 = vmatpush1.bf16.msra.mxu0 %v484
    %1538 = vmatprep.subr.bf16.mxu0 0
    %1539 = vmatpush2.bf16.msra.mxu0 %v499
    %1540 = vmatprep.subr.bf16.mxu0 0
    %1541 = vmatpush2.bf16.msra.mxu0 %v498
    %1542 = vmatprep.subr.bf16.mxu0 0
    %1543 = vmatpush2.bf16.msra.mxu0 %v497
    %1544 = vmatprep.subr.bf16.mxu0 0
    %1545 = vmatpush2.bf16.msra.mxu0 %v496
    %1546 = vmatprep.subr.bf16.mxu0 0
    %1547 = vmatpush2.bf16.msra.mxu0 %v495
    %1548 = vmatprep.subr.bf16.mxu0 0
    %1549 = vmatpush2.bf16.msra.mxu0 %v494
    %1550 = vmatprep.subr.bf16.mxu0 0
    %1551 = vmatpush2.bf16.msra.mxu0 %v493
    %1552 = vmatprep.subr.bf16.mxu0 0
    %1553 = vmatpush2.bf16.msra.mxu0 %v492
    %1554 = vmatprep.mubr.bf16.mxu0 %v1502
    %1555 = vmatmul.mubr.bf16.gmra.mxu0 %v1488
    %v1556 = vpop.f32.mrf.mxu0
    %v1557 = vadd.f32 %v168, %v1556
    %v1558 = vpop.f32.mrf.mxu0
    %v1559 = vpop.f32.mrf.mxu0
    %v1560 = vpop.f32.mrf.mxu0
    %1561 = vdwg.mxu0
    %1562 = vmatprep.subr.bf16.mxu0 0
    %1563 = vmatpush1.bf16.msra.mxu0 %v507
    %1564 = vmatprep.subr.bf16.mxu0 0
    %1565 = vmatpush1.bf16.msra.mxu0 %v506
    %1566 = vmatprep.subr.bf16.mxu0 0
    %1567 = vmatpush1.bf16.msra.mxu0 %v505
    %1568 = vmatprep.subr.bf16.mxu0 0
    %1569 = vmatpush1.bf16.msra.mxu0 %v504
    %1570 = vmatprep.subr.bf16.mxu0 0
    %1571 = vmatpush1.bf16.msra.mxu0 %v503
    %1572 = vmatprep.subr.bf16.mxu0 0
    %1573 = vmatpush1.bf16.msra.mxu0 %v502
    %1574 = vmatprep.subr.bf16.mxu0 0
    %1575 = vmatpush1.bf16.msra.mxu0 %v501
    %1576 = vmatprep.subr.bf16.mxu0 0
    %1577 = vmatpush1.bf16.msra.mxu0 %v500
    %1578 = vmatprep.subr.bf16.mxu0 0
    %1579 = vmatpush2.bf16.msra.mxu0 %v515
    %1580 = vmatprep.subr.bf16.mxu0 0
    %1581 = vmatpush2.bf16.msra.mxu0 %v514
    %1582 = vmatprep.subr.bf16.mxu0 0
    %1583 = vmatpush2.bf16.msra.mxu0 %v513
    %1584 = vmatprep.subr.bf16.mxu0 0
    %1585 = vmatpush2.bf16.msra.mxu0 %v512
    %1586 = vmatprep.subr.bf16.mxu0 0
    %1587 = vmatpush2.bf16.msra.mxu0 %v511
    %1588 = vmatprep.subr.bf16.mxu0 0
    %1589 = vmatpush2.bf16.msra.mxu0 %v510
    %1590 = vmatprep.subr.bf16.mxu0 0
    %1591 = vmatpush2.bf16.msra.mxu0 %v509
    %1592 = vmatprep.subr.bf16.mxu0 0
    %1593 = vmatpush2.bf16.msra.mxu0 %v508
    %1594 = vmatprep.mubr.bf16.mxu0 %v1512
    %1595 = vmatmul.mubr.bf16.gmra.mxu0 %v1510
    %v1596 = vpop.f32.mrf.mxu0
    %v1597 = vadd.f32 %v1557, %v1596
    %v1598 = vpop.f32.mrf.mxu0
    %v1599 = vpop.f32.mrf.mxu0
    %v1600 = vpop.f32.mrf.mxu0
    %1601 = vdwg.mxu0
    %1602 = vmatprep.subr.bf16.mxu0 0
    %1603 = vmatpush1.bf16.msra.mxu0 %v523
    %1604 = vmatprep.subr.bf16.mxu0 0
    %1605 = vmatpush1.bf16.msra.mxu0 %v522
    %1606 = vmatprep.subr.bf16.mxu0 0
    %1607 = vmatpush1.bf16.msra.mxu0 %v521
    %1608 = vmatprep.subr.bf16.mxu0 0
    %1609 = vmatpush1.bf16.msra.mxu0 %v520
    %1610 = vmatprep.subr.bf16.mxu0 0
    %1611 = vmatpush1.bf16.msra.mxu0 %v519
    %1612 = vmatprep.subr.bf16.mxu0 0
    %1613 = vmatpush1.bf16.msra.mxu0 %v518
    %1614 = vmatprep.subr.bf16.mxu0 0
    %1615 = vmatpush1.bf16.msra.mxu0 %v517
    %1616 = vmatprep.subr.bf16.mxu0 0
    %1617 = vmatpush1.bf16.msra.mxu0 %v516
    %1618 = vmatprep.subr.bf16.mxu0 0
    %1619 = vmatpush2.bf16.msra.mxu0 %v531
    %1620 = vmatprep.subr.bf16.mxu0 0
    %1621 = vmatpush2.bf16.msra.mxu0 %v530
    %1622 = vmatprep.subr.bf16.mxu0 0
    %1623 = vmatpush2.bf16.msra.mxu0 %v529
    %1624 = vmatprep.subr.bf16.mxu0 0
    %1625 = vmatpush2.bf16.msra.mxu0 %v528
    %1626 = vmatprep.subr.bf16.mxu0 0
    %1627 = vmatpush2.bf16.msra.mxu0 %v527
    %1628 = vmatprep.subr.bf16.mxu0 0
    %1629 = vmatpush2.bf16.msra.mxu0 %v526
    %1630 = vmatprep.subr.bf16.mxu0 0
    %1631 = vmatpush2.bf16.msra.mxu0 %v525
    %1632 = vmatprep.subr.bf16.mxu0 0
    %1633 = vmatpush2.bf16.msra.mxu0 %v524
    %1634 = vmatprep.mubr.bf16.mxu0 %v1509
    %1635 = vmatmul.mubr.bf16.gmra.mxu0 %v1495
    %v1636 = vpop.f32.mrf.mxu0
    %v1637 = vadd.f32 %v1597, %v1636
    %v1638 = vpop.f32.mrf.mxu0
    %v1639 = vpop.f32.mrf.mxu0
    %v1640 = vpop.f32.mrf.mxu0
    %1641 = vdwg.mxu0
    %1642 = vmatprep.subr.bf16.mxu0 0
    %1643 = vmatpush1.bf16.msra.mxu0 %v539
    %1644 = vmatprep.subr.bf16.mxu0 0
    %1645 = vmatpush1.bf16.msra.mxu0 %v538
    %1646 = vmatprep.subr.bf16.mxu0 0
    %1647 = vmatpush1.bf16.msra.mxu0 %v537
    %1648 = vmatprep.subr.bf16.mxu0 0
    %1649 = vmatpush1.bf16.msra.mxu0 %v536
    %1650 = vmatprep.subr.bf16.mxu0 0
    %1651 = vmatpush1.bf16.msra.mxu0 %v535
    %1652 = vmatprep.subr.bf16.mxu0 0
    %1653 = vmatpush1.bf16.msra.mxu0 %v534
    %1654 = vmatprep.subr.bf16.mxu0 0
    %1655 = vmatpush1.bf16.msra.mxu0 %v533
    %1656 = vmatprep.subr.bf16.mxu0 0
    %1657 = vmatpush1.bf16.msra.mxu0 %v532
    %1658 = vmatprep.subr.bf16.mxu0 0
    %1659 = vmatpush2.bf16.msra.mxu0 %v547
    %1660 = vmatprep.subr.bf16.mxu0 0
    %1661 = vmatpush2.bf16.msra.mxu0 %v546
    %1662 = vmatprep.subr.bf16.mxu0 0
    %1663 = vmatpush2.bf16.msra.mxu0 %v545
    %1664 = vmatprep.subr.bf16.mxu0 0
    %1665 = vmatpush2.bf16.msra.mxu0 %v544
    %1666 = vmatprep.subr.bf16.mxu0 0
    %1667 = vmatpush2.bf16.msra.mxu0 %v543
    %1668 = vmatprep.subr.bf16.mxu0 0
    %1669 = vmatpush2.bf16.msra.mxu0 %v542
    %1670 = vmatprep.subr.bf16.mxu0 0
    %1671 = vmatpush2.bf16.msra.mxu0 %v541
    %1672 = vmatprep.subr.bf16.mxu0 0
    %1673 = vmatpush2.bf16.msra.mxu0 %v540
    %1674 = vmatprep.mubr.bf16.mxu0 %v1513
    %1675 = vmatmul.mubr.bf16.gmra.mxu0 %v1511
    %v1676 = vpop.f32.mrf.mxu0
    %v1677 = vadd.f32 %v1637, %v1676
    %v1678 = vpop.f32.mrf.mxu0
    %v1679 = vpop.f32.mrf.mxu0
    %v1680 = vpop.f32.mrf.mxu0
    %1681 = vdwg.mxu0
    %v1682 = vmax.f32 %v1677, 0.0
    %s1683 = scalar_lea.vmem %s3, 192
    %v1684 = vld [vmem:[%s1683] sm:$0xff]
    %v1685 = vld [vmem:[%s1683 + $0x8] sm:$0xff]
    %v1686 = vld [vmem:[%s1683 + $0x10] sm:$0xff]
    %v1687 = vld [vmem:[%s1683 + $0x18] sm:$0xff]
    %v1688 = vld [vmem:[%s1683 + $0x20] sm:$0xff]
    %v1689 = vld [vmem:[%s1683 + $0x28] sm:$0xff]
    %v1690 = vld [vmem:[%s1683 + $0x30] sm:$0xff]
    %v1691 = vld [vmem:[%s1683 + $0x38] sm:$0xff]
    %v1693 = vsel %vm1011, %v1682, 0
    %1695 = vmatprep.subr.mxu0 0.0
    %1696 = vmatpush1.msra.mxu0 0.0
    %1697 = vmatprep.subr.mxu0 0.0
    %1698 = vmatpush1.msra.mxu0 0.0
    %1699 = vmatprep.subr.mxu0 0.0
    %1700 = vmatpush1.msra.mxu0 0.0
    %1701 = vmatprep.subr.mxu0 0.0
    %1702 = vmatpush1.msra.mxu0 0.0
    %1703 = vmatprep.subr.mxu0 0.0
    %1704 = vmatpush1.msra.mxu0 0.0
    %1705 = vmatprep.subr.mxu0 0.0
    %1706 = vmatpush1.msra.mxu0 0.0
    %1707 = vmatprep.subr.mxu0 0.0
    %1708 = vmatpush1.msra.mxu0 0.0
    %1709 = vmatprep.subr.mxu0 0.0
    %1710 = vmatpush1.msra.mxu0 0.0
    %1711 = vmatprep.subr.mxu0 0.0
    %1712 = vmatpush1.msra.mxu0 %v1691
    %1713 = vmatprep.subr.mxu0 0.0
    %1714 = vmatpush1.msra.mxu0 %v1690
    %1715 = vmatprep.subr.mxu0 0.0
    %1716 = vmatpush1.msra.mxu0 %v1689
    %1717 = vmatprep.subr.mxu0 0.0
    %1718 = vmatpush1.msra.mxu0 %v1688
    %1719 = vmatprep.subr.mxu0 0.0
    %1720 = vmatpush1.msra.mxu0 %v1687
    %1721 = vmatprep.subr.mxu0 0.0
    %1722 = vmatpush1.msra.mxu0 %v1686
    %1723 = vmatprep.subr.mxu0 0.0
    %1724 = vmatpush1.msra.mxu0 %v1685
    %1725 = vmatprep.subr.mxu0 0.0
    %1726 = vmatpush1.msra.mxu0 %v1684
    %1727 = vmatprep.subr.mxu0 0.0
    %1728 = vmatpush2.msra.mxu0 0.0
    %1729 = vmatprep.subr.mxu0 0.0
    %1730 = vmatpush2.msra.mxu0 0.0
    %1731 = vmatprep.subr.mxu0 0.0
    %1732 = vmatpush2.msra.mxu0 0.0
    %1733 = vmatprep.subr.mxu0 0.0
    %1734 = vmatpush2.msra.mxu0 0.0
    %1735 = vmatprep.subr.mxu0 0.0
    %1736 = vmatpush2.msra.mxu0 0.0
    %1737 = vmatprep.subr.mxu0 0.0
    %1738 = vmatpush2.msra.mxu0 0.0
    %1739 = vmatprep.subr.mxu0 0.0
    %1740 = vmatpush2.msra.mxu0 0.0
    %1741 = vmatprep.subr.mxu0 0.0
    %1742 = vmatpush2.msra.mxu0 0.0
    %1743 = vmatprep.subr.mxu0 0.0
    %1744 = vmatpush2.msra.mxu0 0.0
    %1745 = vmatprep.subr.mxu0 0.0
    %1746 = vmatpush2.msra.mxu0 0.0
    %1747 = vmatprep.subr.mxu0 0.0
    %1748 = vmatpush2.msra.mxu0 0.0
    %1749 = vmatprep.subr.mxu0 0.0
    %1750 = vmatpush2.msra.mxu0 0.0
    %1751 = vmatprep.subr.mxu0 0.0
    %1752 = vmatpush2.msra.mxu0 0.0
    %1753 = vmatprep.subr.mxu0 0.0
    %1754 = vmatpush2.msra.mxu0 0.0
    %1755 = vmatprep.subr.mxu0 0.0
    %1756 = vmatpush2.msra.mxu0 0.0
    %1757 = vmatprep.subr.mxu0 0.0
    %1758 = vmatpush2.msra.mxu0 0.0
    %1759 = vmatprep.mubr.f32.mxu0 0.0
    %1760 = vmatmul.mubr.f32.gmra.mxu0 %v1693
    %v1761 = vpop.f32.mrf.mxu0
    %v1762 = vadd.f32 0.0, %v1761
    %v1763 = vpop.f32.mrf.mxu0
    %1764 = vdwg.mxu0
    %v1765 = vadd.f32 %v1461, %v1762
    %s1766 = scalar_lea.vmem %s0, 32
    %v1767 = vld [vmem:[%s1766] sm:$0xff]
    %v1769 = vcombine.high %v1767, %v1767
    %v1771 = vunpack.c.l.s4 1966171168
    %v1772 = vunpack.c.0.s8 %v1771
    %v1773 = vlaneseq
    %v1774 = vshrl.u32 %v1773, 7
    %v1775 = vsub.s32 %v1772, %v1774
    %v1776 = vrot.slane %v1767, %v1775
    %v1778 = vunpack.c.l.s4 1966171168
    %v1779 = vunpack.c.0.s8 %v1778
    %v1780 = vlaneseq
    %v1781 = vshrl.u32 %v1780, 7
    %v1782 = vsub.s32 %v1779, %v1781
    %v1783 = vrot.slane %v1769, %v1782
    %v1784 = vcombine.high %v1776, %v1776
    %v1785 = vcombine.high %v1783, %v1783
    %v1787 = vunpack.c.l.s4 1966171168
    %v1788 = vunpack.c.0.s8 %v1787
    %v1789 = vlaneseq
    %v1790 = vshrl.u32 %v1789, 7
    %v1791 = vsub.s32 %v1788, %v1790
    %v1792 = vrot.slane %v1776, %v1791
    %v1794 = vunpack.c.l.s4 1966171168
    %v1795 = vunpack.c.0.s8 %v1794
    %v1796 = vlaneseq
    %v1797 = vshrl.u32 %v1796, 7
    %v1798 = vsub.s32 %v1795, %v1797
    %v1799 = vrot.slane %v1783, %v1798
    %v1801 = vunpack.c.l.s4 1966171168
    %v1802 = vunpack.c.0.s8 %v1801
    %v1803 = vlaneseq
    %v1804 = vshrl.u32 %v1803, 7
    %v1805 = vsub.s32 %v1802, %v1804
    %v1806 = vrot.slane %v1784, %v1805
    %v1808 = vunpack.c.l.s4 1966171168
    %v1809 = vunpack.c.0.s8 %v1808
    %v1810 = vlaneseq
    %v1811 = vshrl.u32 %v1810, 7
    %v1812 = vsub.s32 %v1809, %v1811
    %v1813 = vrot.slane %v1785, %v1812
    %v1814 = vcombine.high %v1792, %v1792
    %v1815 = vcombine.high %v1799, %v1799
    %v1816 = vcombine.high %v1806, %v1806
    %v1817 = vcombine.high %v1813, %v1813
    %1826 = vmatprep.subr.bf16.mxu0 0
    %1827 = vmatpush1.bf16.msra.mxu0 %v491
    %1828 = vmatprep.subr.bf16.mxu0 0
    %1829 = vmatpush1.bf16.msra.mxu0 %v490
    %1830 = vmatprep.subr.bf16.mxu0 0
    %1831 = vmatpush1.bf16.msra.mxu0 %v489
    %1832 = vmatprep.subr.bf16.mxu0 0
    %1833 = vmatpush1.bf16.msra.mxu0 %v488
    %1834 = vmatprep.subr.bf16.mxu0 0
    %1835 = vmatpush1.bf16.msra.mxu0 %v487
    %1836 = vmatprep.subr.bf16.mxu0 0
    %1837 = vmatpush1.bf16.msra.mxu0 %v486
    %1838 = vmatprep.subr.bf16.mxu0 0
    %1839 = vmatpush1.bf16.msra.mxu0 %v485
    %1840 = vmatprep.subr.bf16.mxu0 0
    %1841 = vmatpush1.bf16.msra.mxu0 %v484
    %1842 = vmatprep.subr.bf16.mxu0 0
    %1843 = vmatpush2.bf16.msra.mxu0 %v499
    %1844 = vmatprep.subr.bf16.mxu0 0
    %1845 = vmatpush2.bf16.msra.mxu0 %v498
    %1846 = vmatprep.subr.bf16.mxu0 0
    %1847 = vmatpush2.bf16.msra.mxu0 %v497
    %1848 = vmatprep.subr.bf16.mxu0 0
    %1849 = vmatpush2.bf16.msra.mxu0 %v496
    %1850 = vmatprep.subr.bf16.mxu0 0
    %1851 = vmatpush2.bf16.msra.mxu0 %v495
    %1852 = vmatprep.subr.bf16.mxu0 0
    %1853 = vmatpush2.bf16.msra.mxu0 %v494
    %1854 = vmatprep.subr.bf16.mxu0 0
    %1855 = vmatpush2.bf16.msra.mxu0 %v493
    %1856 = vmatprep.subr.bf16.mxu0 0
    %1857 = vmatpush2.bf16.msra.mxu0 %v492
    %1858 = vmatprep.mubr.bf16.mxu0 %v1806
    %1859 = vmatmul.mubr.bf16.gmra.mxu0 %v1792
    %v1860 = vpop.f32.mrf.mxu0
    %v1861 = vadd.f32 %v168, %v1860
    %v1862 = vpop.f32.mrf.mxu0
    %v1863 = vpop.f32.mrf.mxu0
    %v1864 = vpop.f32.mrf.mxu0
    %1865 = vdwg.mxu0
    %1866 = vmatprep.subr.bf16.mxu0 0
    %1867 = vmatpush1.bf16.msra.mxu0 %v507
    %1868 = vmatprep.subr.bf16.mxu0 0
    %1869 = vmatpush1.bf16.msra.mxu0 %v506
    %1870 = vmatprep.subr.bf16.mxu0 0
    %1871 = vmatpush1.bf16.msra.mxu0 %v505
    %1872 = vmatprep.subr.bf16.mxu0 0
    %1873 = vmatpush1.bf16.msra.mxu0 %v504
    %1874 = vmatprep.subr.bf16.mxu0 0
    %1875 = vmatpush1.bf16.msra.mxu0 %v503
    %1876 = vmatprep.subr.bf16.mxu0 0
    %1877 = vmatpush1.bf16.msra.mxu0 %v502
    %1878 = vmatprep.subr.bf16.mxu0 0
    %1879 = vmatpush1.bf16.msra.mxu0 %v501
    %1880 = vmatprep.subr.bf16.mxu0 0
    %1881 = vmatpush1.bf16.msra.mxu0 %v500
    %1882 = vmatprep.subr.bf16.mxu0 0
    %1883 = vmatpush2.bf16.msra.mxu0 %v515
    %1884 = vmatprep.subr.bf16.mxu0 0
    %1885 = vmatpush2.bf16.msra.mxu0 %v514
    %1886 = vmatprep.subr.bf16.mxu0 0
    %1887 = vmatpush2.bf16.msra.mxu0 %v513
    %1888 = vmatprep.subr.bf16.mxu0 0
    %1889 = vmatpush2.bf16.msra.mxu0 %v512
    %1890 = vmatprep.subr.bf16.mxu0 0
    %1891 = vmatpush2.bf16.msra.mxu0 %v511
    %1892 = vmatprep.subr.bf16.mxu0 0
    %1893 = vmatpush2.bf16.msra.mxu0 %v510
    %1894 = vmatprep.subr.bf16.mxu0 0
    %1895 = vmatpush2.bf16.msra.mxu0 %v509
    %1896 = vmatprep.subr.bf16.mxu0 0
    %1897 = vmatpush2.bf16.msra.mxu0 %v508
    %1898 = vmatprep.mubr.bf16.mxu0 %v1816
    %1899 = vmatmul.mubr.bf16.gmra.mxu0 %v1814
    %v1900 = vpop.f32.mrf.mxu0
    %v1901 = vadd.f32 %v1861, %v1900
    %v1902 = vpop.f32.mrf.mxu0
    %v1903 = vpop.f32.mrf.mxu0
    %v1904 = vpop.f32.mrf.mxu0
    %1905 = vdwg.mxu0
    %1906 = vmatprep.subr.bf16.mxu0 0
    %1907 = vmatpush1.bf16.msra.mxu0 %v523
    %1908 = vmatprep.subr.bf16.mxu0 0
    %1909 = vmatpush1.bf16.msra.mxu0 %v522
    %1910 = vmatprep.subr.bf16.mxu0 0
    %1911 = vmatpush1.bf16.msra.mxu0 %v521
    %1912 = vmatprep.subr.bf16.mxu0 0
    %1913 = vmatpush1.bf16.msra.mxu0 %v520
    %1914 = vmatprep.subr.bf16.mxu0 0
    %1915 = vmatpush1.bf16.msra.mxu0 %v519
    %1916 = vmatprep.subr.bf16.mxu0 0
    %1917 = vmatpush1.bf16.msra.mxu0 %v518
    %1918 = vmatprep.subr.bf16.mxu0 0
    %1919 = vmatpush1.bf16.msra.mxu0 %v517
    %1920 = vmatprep.subr.bf16.mxu0 0
    %1921 = vmatpush1.bf16.msra.mxu0 %v516
    %1922 = vmatprep.subr.bf16.mxu0 0
    %1923 = vmatpush2.bf16.msra.mxu0 %v531
    %1924 = vmatprep.subr.bf16.mxu0 0
    %1925 = vmatpush2.bf16.msra.mxu0 %v530
    %1926 = vmatprep.subr.bf16.mxu0 0
    %1927 = vmatpush2.bf16.msra.mxu0 %v529
    %1928 = vmatprep.subr.bf16.mxu0 0
    %1929 = vmatpush2.bf16.msra.mxu0 %v528
    %1930 = vmatprep.subr.bf16.mxu0 0
    %1931 = vmatpush2.bf16.msra.mxu0 %v527
    %1932 = vmatprep.subr.bf16.mxu0 0
    %1933 = vmatpush2.bf16.msra.mxu0 %v526
    %1934 = vmatprep.subr.bf16.mxu0 0
    %1935 = vmatpush2.bf16.msra.mxu0 %v525
    %1936 = vmatprep.subr.bf16.mxu0 0
    %1937 = vmatpush2.bf16.msra.mxu0 %v524
    %1938 = vmatprep.mubr.bf16.mxu0 %v1813
    %1939 = vmatmul.mubr.bf16.gmra.mxu0 %v1799
    %v1940 = vpop.f32.mrf.mxu0
    %v1941 = vadd.f32 %v1901, %v1940
    %v1942 = vpop.f32.mrf.mxu0
    %v1943 = vpop.f32.mrf.mxu0
    %v1944 = vpop.f32.mrf.mxu0
    %1945 = vdwg.mxu0
    %1946 = vmatprep.subr.bf16.mxu0 0
    %1947 = vmatpush1.bf16.msra.mxu0 %v539
    %1948 = vmatprep.subr.bf16.mxu0 0
    %1949 = vmatpush1.bf16.msra.mxu0 %v538
    %1950 = vmatprep.subr.bf16.mxu0 0
    %1951 = vmatpush1.bf16.msra.mxu0 %v537
    %1952 = vmatprep.subr.bf16.mxu0 0
    %1953 = vmatpush1.bf16.msra.mxu0 %v536
    %1954 = vmatprep.subr.bf16.mxu0 0
    %1955 = vmatpush1.bf16.msra.mxu0 %v535
    %1956 = vmatprep.subr.bf16.mxu0 0
    %1957 = vmatpush1.bf16.msra.mxu0 %v534
    %1958 = vmatprep.subr.bf16.mxu0 0
    %1959 = vmatpush1.bf16.msra.mxu0 %v533
    %1960 = vmatprep.subr.bf16.mxu0 0
    %1961 = vmatpush1.bf16.msra.mxu0 %v532
    %1962 = vmatprep.subr.bf16.mxu0 0
    %1963 = vmatpush2.bf16.msra.mxu0 %v547
    %1964 = vmatprep.subr.bf16.mxu0 0
    %1965 = vmatpush2.bf16.msra.mxu0 %v546
    %1966 = vmatprep.subr.bf16.mxu0 0
    %1967 = vmatpush2.bf16.msra.mxu0 %v545
    %1968 = vmatprep.subr.bf16.mxu0 0
    %1969 = vmatpush2.bf16.msra.mxu0 %v544
    %1970 = vmatprep.subr.bf16.mxu0 0
    %1971 = vmatpush2.bf16.msra.mxu0 %v543
    %1972 = vmatprep.subr.bf16.mxu0 0
    %1973 = vmatpush2.bf16.msra.mxu0 %v542
    %1974 = vmatprep.subr.bf16.mxu0 0
    %1975 = vmatpush2.bf16.msra.mxu0 %v541
    %1976 = vmatprep.subr.bf16.mxu0 0
    %1977 = vmatpush2.bf16.msra.mxu0 %v540
    %1978 = vmatprep.mubr.bf16.mxu0 %v1817
    %1979 = vmatmul.mubr.bf16.gmra.mxu0 %v1815
    %v1980 = vpop.f32.mrf.mxu0
    %v1981 = vadd.f32 %v1941, %v1980
    %v1982 = vpop.f32.mrf.mxu0
    %v1983 = vpop.f32.mrf.mxu0
    %v1984 = vpop.f32.mrf.mxu0
    %1985 = vdwg.mxu0
    %v1986 = vmax.f32 %v1981, 0.0
    %s1987 = scalar_lea.vmem %s3, 256
    %v1988 = vld [vmem:[%s1987] sm:$0xff]
    %v1989 = vld [vmem:[%s1987 + $0x8] sm:$0xff]
    %v1990 = vld [vmem:[%s1987 + $0x10] sm:$0xff]
    %v1991 = vld [vmem:[%s1987 + $0x18] sm:$0xff]
    %v1992 = vld [vmem:[%s1987 + $0x20] sm:$0xff]
    %v1993 = vld [vmem:[%s1987 + $0x28] sm:$0xff]
    %v1994 = vld [vmem:[%s1987 + $0x30] sm:$0xff]
    %v1995 = vld [vmem:[%s1987 + $0x38] sm:$0xff]
    %v1997 = vsel %vm1011, %v1986, 0
    %1999 = vmatprep.subr.mxu0 0.0
    %2000 = vmatpush1.msra.mxu0 0.0
    %2001 = vmatprep.subr.mxu0 0.0
    %2002 = vmatpush1.msra.mxu0 0.0
    %2003 = vmatprep.subr.mxu0 0.0
    %2004 = vmatpush1.msra.mxu0 0.0
    %2005 = vmatprep.subr.mxu0 0.0
    %2006 = vmatpush1.msra.mxu0 0.0
    %2007 = vmatprep.subr.mxu0 0.0
    %2008 = vmatpush1.msra.mxu0 0.0
    %2009 = vmatprep.subr.mxu0 0.0
    %2010 = vmatpush1.msra.mxu0 0.0
    %2011 = vmatprep.subr.mxu0 0.0
    %2012 = vmatpush1.msra.mxu0 0.0
    %2013 = vmatprep.subr.mxu0 0.0
    %2014 = vmatpush1.msra.mxu0 0.0
    %2015 = vmatprep.subr.mxu0 0.0
    %2016 = vmatpush1.msra.mxu0 %v1995
    %2017 = vmatprep.subr.mxu0 0.0
    %2018 = vmatpush1.msra.mxu0 %v1994
    %2019 = vmatprep.subr.mxu0 0.0
    %2020 = vmatpush1.msra.mxu0 %v1993
    %2021 = vmatprep.subr.mxu0 0.0
    %2022 = vmatpush1.msra.mxu0 %v1992
    %2023 = vmatprep.subr.mxu0 0.0
    %2024 = vmatpush1.msra.mxu0 %v1991
    %2025 = vmatprep.subr.mxu0 0.0
    %2026 = vmatpush1.msra.mxu0 %v1990
    %2027 = vmatprep.subr.mxu0 0.0
    %2028 = vmatpush1.msra.mxu0 %v1989
    %2029 = vmatprep.subr.mxu0 0.0
    %2030 = vmatpush1.msra.mxu0 %v1988
    %2031 = vmatprep.subr.mxu0 0.0
    %2032 = vmatpush2.msra.mxu0 0.0
    %2033 = vmatprep.subr.mxu0 0.0
    %2034 = vmatpush2.msra.mxu0 0.0
    %2035 = vmatprep.subr.mxu0 0.0
    %2036 = vmatpush2.msra.mxu0 0.0
    %2037 = vmatprep.subr.mxu0 0.0
    %2038 = vmatpush2.msra.mxu0 0.0
    %2039 = vmatprep.subr.mxu0 0.0
    %2040 = vmatpush2.msra.mxu0 0.0
    %2041 = vmatprep.subr.mxu0 0.0
    %2042 = vmatpush2.msra.mxu0 0.0
    %2043 = vmatprep.subr.mxu0 0.0
    %2044 = vmatpush2.msra.mxu0 0.0
    %2045 = vmatprep.subr.mxu0 0.0
    %2046 = vmatpush2.msra.mxu0 0.0
    %2047 = vmatprep.subr.mxu0 0.0
    %2048 = vmatpush2.msra.mxu0 0.0
    %2049 = vmatprep.subr.mxu0 0.0
    %2050 = vmatpush2.msra.mxu0 0.0
    %2051 = vmatprep.subr.mxu0 0.0
    %2052 = vmatpush2.msra.mxu0 0.0
    %2053 = vmatprep.subr.mxu0 0.0
    %2054 = vmatpush2.msra.mxu0 0.0
    %2055 = vmatprep.subr.mxu0 0.0
    %2056 = vmatpush2.msra.mxu0 0.0
    %2057 = vmatprep.subr.mxu0 0.0
    %2058 = vmatpush2.msra.mxu0 0.0
    %2059 = vmatprep.subr.mxu0 0.0
    %2060 = vmatpush2.msra.mxu0 0.0
    %2061 = vmatprep.subr.mxu0 0.0
    %2062 = vmatpush2.msra.mxu0 0.0
    %2063 = vmatprep.mubr.f32.mxu0 0.0
    %2064 = vmatmul.mubr.f32.gmra.mxu0 %v1997
    %v2065 = vpop.f32.mrf.mxu0
    %v2066 = vadd.f32 0.0, %v2065
    %v2067 = vpop.f32.mrf.mxu0
    %2068 = vdwg.mxu0
    %v2069 = vadd.f32 %v1765, %v2066
    %s2070 = scalar_lea.vmem %s0, 40
    %v2071 = vld [vmem:[%s2070] sm:$0xff]
    %v2073 = vcombine.high %v2071, %v2071
    %v2075 = vunpack.c.l.s4 1966171168
    %v2076 = vunpack.c.0.s8 %v2075
    %v2077 = vlaneseq
    %v2078 = vshrl.u32 %v2077, 7
    %v2079 = vsub.s32 %v2076, %v2078
    %v2080 = vrot.slane %v2071, %v2079
    %v2082 = vunpack.c.l.s4 1966171168
    %v2083 = vunpack.c.0.s8 %v2082
    %v2084 = vlaneseq
    %v2085 = vshrl.u32 %v2084, 7
    %v2086 = vsub.s32 %v2083, %v2085
    %v2087 = vrot.slane %v2073, %v2086
    %v2088 = vcombine.high %v2080, %v2080
    %v2089 = vcombine.high %v2087, %v2087
    %v2091 = vunpack.c.l.s4 1966171168
    %v2092 = vunpack.c.0.s8 %v2091
    %v2093 = vlaneseq
    %v2094 = vshrl.u32 %v2093, 7
    %v2095 = vsub.s32 %v2092, %v2094
    %v2096 = vrot.slane %v2080, %v2095
    %v2098 = vunpack.c.l.s4 1966171168
    %v2099 = vunpack.c.0.s8 %v2098
    %v2100 = vlaneseq
    %v2101 = vshrl.u32 %v2100, 7
    %v2102 = vsub.s32 %v2099, %v2101
    %v2103 = vrot.slane %v2087, %v2102
    %v2105 = vunpack.c.l.s4 1966171168
    %v2106 = vunpack.c.0.s8 %v2105
    %v2107 = vlaneseq
    %v2108 = vshrl.u32 %v2107, 7
    %v2109 = vsub.s32 %v2106, %v2108
    %v2110 = vrot.slane %v2088, %v2109
    %v2112 = vunpack.c.l.s4 1966171168
    %v2113 = vunpack.c.0.s8 %v2112
    %v2114 = vlaneseq
    %v2115 = vshrl.u32 %v2114, 7
    %v2116 = vsub.s32 %v2113, %v2115
    %v2117 = vrot.slane %v2089, %v2116
    %v2118 = vcombine.high %v2096, %v2096
    %v2119 = vcombine.high %v2103, %v2103
    %v2120 = vcombine.high %v2110, %v2110
    %v2121 = vcombine.high %v2117, %v2117
    %2130 = vmatprep.subr.bf16.mxu0 0
    %2131 = vmatpush1.bf16.msra.mxu0 %v491
    %2132 = vmatprep.subr.bf16.mxu0 0
    %2133 = vmatpush1.bf16.msra.mxu0 %v490
    %2134 = vmatprep.subr.bf16.mxu0 0
    %2135 = vmatpush1.bf16.msra.mxu0 %v489
    %2136 = vmatprep.subr.bf16.mxu0 0
    %2137 = vmatpush1.bf16.msra.mxu0 %v488
    %2138 = vmatprep.subr.bf16.mxu0 0
    %2139 = vmatpush1.bf16.msra.mxu0 %v487
    %2140 = vmatprep.subr.bf16.mxu0 0
    %2141 = vmatpush1.bf16.msra.mxu0 %v486
    %2142 = vmatprep.subr.bf16.mxu0 0
    %2143 = vmatpush1.bf16.msra.mxu0 %v485
    %2144 = vmatprep.subr.bf16.mxu0 0
    %2145 = vmatpush1.bf16.msra.mxu0 %v484
    %2146 = vmatprep.subr.bf16.mxu0 0
    %2147 = vmatpush2.bf16.msra.mxu0 %v499
    %2148 = vmatprep.subr.bf16.mxu0 0
    %2149 = vmatpush2.bf16.msra.mxu0 %v498
    %2150 = vmatprep.subr.bf16.mxu0 0
    %2151 = vmatpush2.bf16.msra.mxu0 %v497
    %2152 = vmatprep.subr.bf16.mxu0 0
    %2153 = vmatpush2.bf16.msra.mxu0 %v496
    %2154 = vmatprep.subr.bf16.mxu0 0
    %2155 = vmatpush2.bf16.msra.mxu0 %v495
    %2156 = vmatprep.subr.bf16.mxu0 0
    %2157 = vmatpush2.bf16.msra.mxu0 %v494
    %2158 = vmatprep.subr.bf16.mxu0 0
    %2159 = vmatpush2.bf16.msra.mxu0 %v493
    %2160 = vmatprep.subr.bf16.mxu0 0
    %2161 = vmatpush2.bf16.msra.mxu0 %v492
    %2162 = vmatprep.mubr.bf16.mxu0 %v2110
    %2163 = vmatmul.mubr.bf16.gmra.mxu0 %v2096
    %v2164 = vpop.f32.mrf.mxu0
    %v2165 = vadd.f32 %v168, %v2164
    %v2166 = vpop.f32.mrf.mxu0
    %v2167 = vpop.f32.mrf.mxu0
    %v2168 = vpop.f32.mrf.mxu0
    %2169 = vdwg.mxu0
    %2170 = vmatprep.subr.bf16.mxu0 0
    %2171 = vmatpush1.bf16.msra.mxu0 %v507
    %2172 = vmatprep.subr.bf16.mxu0 0
    %2173 = vmatpush1.bf16.msra.mxu0 %v506
    %2174 = vmatprep.subr.bf16.mxu0 0
    %2175 = vmatpush1.bf16.msra.mxu0 %v505
    %2176 = vmatprep.subr.bf16.mxu0 0
    %2177 = vmatpush1.bf16.msra.mxu0 %v504
    %2178 = vmatprep.subr.bf16.mxu0 0
    %2179 = vmatpush1.bf16.msra.mxu0 %v503
    %2180 = vmatprep.subr.bf16.mxu0 0
    %2181 = vmatpush1.bf16.msra.mxu0 %v502
    %2182 = vmatprep.subr.bf16.mxu0 0
    %2183 = vmatpush1.bf16.msra.mxu0 %v501
    %2184 = vmatprep.subr.bf16.mxu0 0
    %2185 = vmatpush1.bf16.msra.mxu0 %v500
    %2186 = vmatprep.subr.bf16.mxu0 0
    %2187 = vmatpush2.bf16.msra.mxu0 %v515
    %2188 = vmatprep.subr.bf16.mxu0 0
    %2189 = vmatpush2.bf16.msra.mxu0 %v514
    %2190 = vmatprep.subr.bf16.mxu0 0
    %2191 = vmatpush2.bf16.msra.mxu0 %v513
    %2192 = vmatprep.subr.bf16.mxu0 0
    %2193 = vmatpush2.bf16.msra.mxu0 %v512
    %2194 = vmatprep.subr.bf16.mxu0 0
    %2195 = vmatpush2.bf16.msra.mxu0 %v511
    %2196 = vmatprep.subr.bf16.mxu0 0
    %2197 = vmatpush2.bf16.msra.mxu0 %v510
    %2198 = vmatprep.subr.bf16.mxu0 0
    %2199 = vmatpush2.bf16.msra.mxu0 %v509
    %2200 = vmatprep.subr.bf16.mxu0 0
    %2201 = vmatpush2.bf16.msra.mxu0 %v508
    %2202 = vmatprep.mubr.bf16.mxu0 %v2120
    %2203 = vmatmul.mubr.bf16.gmra.mxu0 %v2118
    %v2204 = vpop.f32.mrf.mxu0
    %v2205 = vadd.f32 %v2165, %v2204
    %v2206 = vpop.f32.mrf.mxu0
    %v2207 = vpop.f32.mrf.mxu0
    %v2208 = vpop.f32.mrf.mxu0
    %2209 = vdwg.mxu0
    %2210 = vmatprep.subr.bf16.mxu0 0
    %2211 = vmatpush1.bf16.msra.mxu0 %v523
    %2212 = vmatprep.subr.bf16.mxu0 0
    %2213 = vmatpush1.bf16.msra.mxu0 %v522
    %2214 = vmatprep.subr.bf16.mxu0 0
    %2215 = vmatpush1.bf16.msra.mxu0 %v521
    %2216 = vmatprep.subr.bf16.mxu0 0
    %2217 = vmatpush1.bf16.msra.mxu0 %v520
    %2218 = vmatprep.subr.bf16.mxu0 0
    %2219 = vmatpush1.bf16.msra.mxu0 %v519
    %2220 = vmatprep.subr.bf16.mxu0 0
    %2221 = vmatpush1.bf16.msra.mxu0 %v518
    %2222 = vmatprep.subr.bf16.mxu0 0
    %2223 = vmatpush1.bf16.msra.mxu0 %v517
    %2224 = vmatprep.subr.bf16.mxu0 0
    %2225 = vmatpush1.bf16.msra.mxu0 %v516
    %2226 = vmatprep.subr.bf16.mxu0 0
    %2227 = vmatpush2.bf16.msra.mxu0 %v531
    %2228 = vmatprep.subr.bf16.mxu0 0
    %2229 = vmatpush2.bf16.msra.mxu0 %v530
    %2230 = vmatprep.subr.bf16.mxu0 0
    %2231 = vmatpush2.bf16.msra.mxu0 %v529
    %2232 = vmatprep.subr.bf16.mxu0 0
    %2233 = vmatpush2.bf16.msra.mxu0 %v528
    %2234 = vmatprep.subr.bf16.mxu0 0
    %2235 = vmatpush2.bf16.msra.mxu0 %v527
    %2236 = vmatprep.subr.bf16.mxu0 0
    %2237 = vmatpush2.bf16.msra.mxu0 %v526
    %2238 = vmatprep.subr.bf16.mxu0 0
    %2239 = vmatpush2.bf16.msra.mxu0 %v525
    %2240 = vmatprep.subr.bf16.mxu0 0
    %2241 = vmatpush2.bf16.msra.mxu0 %v524
    %2242 = vmatprep.mubr.bf16.mxu0 %v2117
    %2243 = vmatmul.mubr.bf16.gmra.mxu0 %v2103
    %v2244 = vpop.f32.mrf.mxu0
    %v2245 = vadd.f32 %v2205, %v2244
    %v2246 = vpop.f32.mrf.mxu0
    %v2247 = vpop.f32.mrf.mxu0
    %v2248 = vpop.f32.mrf.mxu0
    %2249 = vdwg.mxu0
    %2250 = vmatprep.subr.bf16.mxu0 0
    %2251 = vmatpush1.bf16.msra.mxu0 %v539
    %2252 = vmatprep.subr.bf16.mxu0 0
    %2253 = vmatpush1.bf16.msra.mxu0 %v538
    %2254 = vmatprep.subr.bf16.mxu0 0
    %2255 = vmatpush1.bf16.msra.mxu0 %v537
    %2256 = vmatprep.subr.bf16.mxu0 0
    %2257 = vmatpush1.bf16.msra.mxu0 %v536
    %2258 = vmatprep.subr.bf16.mxu0 0
    %2259 = vmatpush1.bf16.msra.mxu0 %v535
    %2260 = vmatprep.subr.bf16.mxu0 0
    %2261 = vmatpush1.bf16.msra.mxu0 %v534
    %2262 = vmatprep.subr.bf16.mxu0 0
    %2263 = vmatpush1.bf16.msra.mxu0 %v533
    %2264 = vmatprep.subr.bf16.mxu0 0
    %2265 = vmatpush1.bf16.msra.mxu0 %v532
    %2266 = vmatprep.subr.bf16.mxu0 0
    %2267 = vmatpush2.bf16.msra.mxu0 %v547
    %2268 = vmatprep.subr.bf16.mxu0 0
    %2269 = vmatpush2.bf16.msra.mxu0 %v546
    %2270 = vmatprep.subr.bf16.mxu0 0
    %2271 = vmatpush2.bf16.msra.mxu0 %v545
    %2272 = vmatprep.subr.bf16.mxu0 0
    %2273 = vmatpush2.bf16.msra.mxu0 %v544
    %2274 = vmatprep.subr.bf16.mxu0 0
    %2275 = vmatpush2.bf16.msra.mxu0 %v543
    %2276 = vmatprep.subr.bf16.mxu0 0
    %2277 = vmatpush2.bf16.msra.mxu0 %v542
    %2278 = vmatprep.subr.bf16.mxu0 0
    %2279 = vmatpush2.bf16.msra.mxu0 %v541
    %2280 = vmatprep.subr.bf16.mxu0 0
    %2281 = vmatpush2.bf16.msra.mxu0 %v540
    %2282 = vmatprep.mubr.bf16.mxu0 %v2121
    %2283 = vmatmul.mubr.bf16.gmra.mxu0 %v2119
    %v2284 = vpop.f32.mrf.mxu0
    %v2285 = vadd.f32 %v2245, %v2284
    %v2286 = vpop.f32.mrf.mxu0
    %v2287 = vpop.f32.mrf.mxu0
    %v2288 = vpop.f32.mrf.mxu0
    %2289 = vdwg.mxu0
    %v2290 = vmax.f32 %v2285, 0.0
    %s2291 = scalar_lea.vmem %s3, 320
    %v2292 = vld [vmem:[%s2291] sm:$0xff]
    %v2293 = vld [vmem:[%s2291 + $0x8] sm:$0xff]
    %v2294 = vld [vmem:[%s2291 + $0x10] sm:$0xff]
    %v2295 = vld [vmem:[%s2291 + $0x18] sm:$0xff]
    %v2296 = vld [vmem:[%s2291 + $0x20] sm:$0xff]
    %v2297 = vld [vmem:[%s2291 + $0x28] sm:$0xff]
    %v2298 = vld [vmem:[%s2291 + $0x30] sm:$0xff]
    %v2299 = vld [vmem:[%s2291 + $0x38] sm:$0xff]
    %v2301 = vsel %vm1011, %v2290, 0
    %2303 = vmatprep.subr.mxu0 0.0
    %2304 = vmatpush1.msra.mxu0 0.0
    %2305 = vmatprep.subr.mxu0 0.0
    %2306 = vmatpush1.msra.mxu0 0.0
    %2307 = vmatprep.subr.mxu0 0.0
    %2308 = vmatpush1.msra.mxu0 0.0
    %2309 = vmatprep.subr.mxu0 0.0
    %2310 = vmatpush1.msra.mxu0 0.0
    %2311 = vmatprep.subr.mxu0 0.0
    %2312 = vmatpush1.msra.mxu0 0.0
    %2313 = vmatprep.subr.mxu0 0.0
    %2314 = vmatpush1.msra.mxu0 0.0
    %2315 = vmatprep.subr.mxu0 0.0
    %2316 = vmatpush1.msra.mxu0 0.0
    %2317 = vmatprep.subr.mxu0 0.0
    %2318 = vmatpush1.msra.mxu0 0.0
    %2319 = vmatprep.subr.mxu0 0.0
    %2320 = vmatpush1.msra.mxu0 %v2299
    %2321 = vmatprep.subr.mxu0 0.0
    %2322 = vmatpush1.msra.mxu0 %v2298
    %2323 = vmatprep.subr.mxu0 0.0
    %2324 = vmatpush1.msra.mxu0 %v2297
    %2325 = vmatprep.subr.mxu0 0.0
    %2326 = vmatpush1.msra.mxu0 %v2296
    %2327 = vmatprep.subr.mxu0 0.0
    %2328 = vmatpush1.msra.mxu0 %v2295
    %2329 = vmatprep.subr.mxu0 0.0
    %2330 = vmatpush1.msra.mxu0 %v2294
    %2331 = vmatprep.subr.mxu0 0.0
    %2332 = vmatpush1.msra.mxu0 %v2293
    %2333 = vmatprep.subr.mxu0 0.0
    %2334 = vmatpush1.msra.mxu0 %v2292
    %2335 = vmatprep.subr.mxu0 0.0
    %2336 = vmatpush2.msra.mxu0 0.0
    %2337 = vmatprep.subr.mxu0 0.0
    %2338 = vmatpush2.msra.mxu0 0.0
    %2339 = vmatprep.subr.mxu0 0.0
    %2340 = vmatpush2.msra.mxu0 0.0
    %2341 = vmatprep.subr.mxu0 0.0
    %2342 = vmatpush2.msra.mxu0 0.0
    %2343 = vmatprep.subr.mxu0 0.0
    %2344 = vmatpush2.msra.mxu0 0.0
    %2345 = vmatprep.subr.mxu0 0.0
    %2346 = vmatpush2.msra.mxu0 0.0
    %2347 = vmatprep.subr.mxu0 0.0
    %2348 = vmatpush2.msra.mxu0 0.0
    %2349 = vmatprep.subr.mxu0 0.0
    %2350 = vmatpush2.msra.mxu0 0.0
    %2351 = vmatprep.subr.mxu0 0.0
    %2352 = vmatpush2.msra.mxu0 0.0
    %2353 = vmatprep.subr.mxu0 0.0
    %2354 = vmatpush2.msra.mxu0 0.0
    %2355 = vmatprep.subr.mxu0 0.0
    %2356 = vmatpush2.msra.mxu0 0.0
    %2357 = vmatprep.subr.mxu0 0.0
    %2358 = vmatpush2.msra.mxu0 0.0
    %2359 = vmatprep.subr.mxu0 0.0
    %2360 = vmatpush2.msra.mxu0 0.0
    %2361 = vmatprep.subr.mxu0 0.0
    %2362 = vmatpush2.msra.mxu0 0.0
    %2363 = vmatprep.subr.mxu0 0.0
    %2364 = vmatpush2.msra.mxu0 0.0
    %2365 = vmatprep.subr.mxu0 0.0
    %2366 = vmatpush2.msra.mxu0 0.0
    %2367 = vmatprep.mubr.f32.mxu0 0.0
    %2368 = vmatmul.mubr.f32.gmra.mxu0 %v2301
    %v2369 = vpop.f32.mrf.mxu0
    %v2370 = vadd.f32 0.0, %v2369
    %v2371 = vpop.f32.mrf.mxu0
    %2372 = vdwg.mxu0
    %v2373 = vadd.f32 %v2069, %v2370
    %s2374 = scalar_lea.vmem %s0, 48
    %v2375 = vld [vmem:[%s2374] sm:$0xff]
    %v2377 = vcombine.high %v2375, %v2375
    %v2379 = vunpack.c.l.s4 1966171168
    %v2380 = vunpack.c.0.s8 %v2379
    %v2381 = vlaneseq
    %v2382 = vshrl.u32 %v2381, 7
    %v2383 = vsub.s32 %v2380, %v2382
    %v2384 = vrot.slane %v2375, %v2383
    %v2386 = vunpack.c.l.s4 1966171168
    %v2387 = vunpack.c.0.s8 %v2386
    %v2388 = vlaneseq
    %v2389 = vshrl.u32 %v2388, 7
    %v2390 = vsub.s32 %v2387, %v2389
    %v2391 = vrot.slane %v2377, %v2390
    %v2392 = vcombine.high %v2384, %v2384
    %v2393 = vcombine.high %v2391, %v2391
    %v2395 = vunpack.c.l.s4 1966171168
    %v2396 = vunpack.c.0.s8 %v2395
    %v2397 = vlaneseq
    %v2398 = vshrl.u32 %v2397, 7
    %v2399 = vsub.s32 %v2396, %v2398
    %v2400 = vrot.slane %v2384, %v2399
    %v2402 = vunpack.c.l.s4 1966171168
    %v2403 = vunpack.c.0.s8 %v2402
    %v2404 = vlaneseq
    %v2405 = vshrl.u32 %v2404, 7
    %v2406 = vsub.s32 %v2403, %v2405
    %v2407 = vrot.slane %v2391, %v2406
    %v2409 = vunpack.c.l.s4 1966171168
    %v2410 = vunpack.c.0.s8 %v2409
    %v2411 = vlaneseq
    %v2412 = vshrl.u32 %v2411, 7
    %v2413 = vsub.s32 %v2410, %v2412
    %v2414 = vrot.slane %v2392, %v2413
    %v2416 = vunpack.c.l.s4 1966171168
    %v2417 = vunpack.c.0.s8 %v2416
    %v2418 = vlaneseq
    %v2419 = vshrl.u32 %v2418, 7
    %v2420 = vsub.s32 %v2417, %v2419
    %v2421 = vrot.slane %v2393, %v2420
    %v2422 = vcombine.high %v2400, %v2400
    %v2423 = vcombine.high %v2407, %v2407
    %v2424 = vcombine.high %v2414, %v2414
    %v2425 = vcombine.high %v2421, %v2421
    %2434 = vmatprep.subr.bf16.mxu0 0
    %2435 = vmatpush1.bf16.msra.mxu0 %v491
    %2436 = vmatprep.subr.bf16.mxu0 0
    %2437 = vmatpush1.bf16.msra.mxu0 %v490
    %2438 = vmatprep.subr.bf16.mxu0 0
    %2439 = vmatpush1.bf16.msra.mxu0 %v489
    %2440 = vmatprep.subr.bf16.mxu0 0
    %2441 = vmatpush1.bf16.msra.mxu0 %v488
    %2442 = vmatprep.subr.bf16.mxu0 0
    %2443 = vmatpush1.bf16.msra.mxu0 %v487
    %2444 = vmatprep.subr.bf16.mxu0 0
    %2445 = vmatpush1.bf16.msra.mxu0 %v486
    %2446 = vmatprep.subr.bf16.mxu0 0
    %2447 = vmatpush1.bf16.msra.mxu0 %v485
    %2448 = vmatprep.subr.bf16.mxu0 0
    %2449 = vmatpush1.bf16.msra.mxu0 %v484
    %2450 = vmatprep.subr.bf16.mxu0 0
    %2451 = vmatpush2.bf16.msra.mxu0 %v499
    %2452 = vmatprep.subr.bf16.mxu0 0
    %2453 = vmatpush2.bf16.msra.mxu0 %v498
    %2454 = vmatprep.subr.bf16.mxu0 0
    %2455 = vmatpush2.bf16.msra.mxu0 %v497
    %2456 = vmatprep.subr.bf16.mxu0 0
    %2457 = vmatpush2.bf16.msra.mxu0 %v496
    %2458 = vmatprep.subr.bf16.mxu0 0
    %2459 = vmatpush2.bf16.msra.mxu0 %v495
    %2460 = vmatprep.subr.bf16.mxu0 0
    %2461 = vmatpush2.bf16.msra.mxu0 %v494
    %2462 = vmatprep.subr.bf16.mxu0 0
    %2463 = vmatpush2.bf16.msra.mxu0 %v493
    %2464 = vmatprep.subr.bf16.mxu0 0
    %2465 = vmatpush2.bf16.msra.mxu0 %v492
    %2466 = vmatprep.mubr.bf16.mxu0 %v2414
    %2467 = vmatmul.mubr.bf16.gmra.mxu0 %v2400
    %v2468 = vpop.f32.mrf.mxu0
    %v2469 = vadd.f32 %v168, %v2468
    %v2470 = vpop.f32.mrf.mxu0
    %v2471 = vpop.f32.mrf.mxu0
    %v2472 = vpop.f32.mrf.mxu0
    %2473 = vdwg.mxu0
    %2474 = vmatprep.subr.bf16.mxu0 0
    %2475 = vmatpush1.bf16.msra.mxu0 %v507
    %2476 = vmatprep.subr.bf16.mxu0 0
    %2477 = vmatpush1.bf16.msra.mxu0 %v506
    %2478 = vmatprep.subr.bf16.mxu0 0
    %2479 = vmatpush1.bf16.msra.mxu0 %v505
    %2480 = vmatprep.subr.bf16.mxu0 0
    %2481 = vmatpush1.bf16.msra.mxu0 %v504
    %2482 = vmatprep.subr.bf16.mxu0 0
    %2483 = vmatpush1.bf16.msra.mxu0 %v503
    %2484 = vmatprep.subr.bf16.mxu0 0
    %2485 = vmatpush1.bf16.msra.mxu0 %v502
    %2486 = vmatprep.subr.bf16.mxu0 0
    %2487 = vmatpush1.bf16.msra.mxu0 %v501
    %2488 = vmatprep.subr.bf16.mxu0 0
    %2489 = vmatpush1.bf16.msra.mxu0 %v500
    %2490 = vmatprep.subr.bf16.mxu0 0
    %2491 = vmatpush2.bf16.msra.mxu0 %v515
    %2492 = vmatprep.subr.bf16.mxu0 0
    %2493 = vmatpush2.bf16.msra.mxu0 %v514
    %2494 = vmatprep.subr.bf16.mxu0 0
    %2495 = vmatpush2.bf16.msra.mxu0 %v513
    %2496 = vmatprep.subr.bf16.mxu0 0
    %2497 = vmatpush2.bf16.msra.mxu0 %v512
    %2498 = vmatprep.subr.bf16.mxu0 0
    %2499 = vmatpush2.bf16.msra.mxu0 %v511
    %2500 = vmatprep.subr.bf16.mxu0 0
    %2501 = vmatpush2.bf16.msra.mxu0 %v510
    %2502 = vmatprep.subr.bf16.mxu0 0
    %2503 = vmatpush2.bf16.msra.mxu0 %v509
    %2504 = vmatprep.subr.bf16.mxu0 0
    %2505 = vmatpush2.bf16.msra.mxu0 %v508
    %2506 = vmatprep.mubr.bf16.mxu0 %v2424
    %2507 = vmatmul.mubr.bf16.gmra.mxu0 %v2422
    %v2508 = vpop.f32.mrf.mxu0
    %v2509 = vadd.f32 %v2469, %v2508
    %v2510 = vpop.f32.mrf.mxu0
    %v2511 = vpop.f32.mrf.mxu0
    %v2512 = vpop.f32.mrf.mxu0
    %2513 = vdwg.mxu0
    %2514 = vmatprep.subr.bf16.mxu0 0
    %2515 = vmatpush1.bf16.msra.mxu0 %v523
    %2516 = vmatprep.subr.bf16.mxu0 0
    %2517 = vmatpush1.bf16.msra.mxu0 %v522
    %2518 = vmatprep.subr.bf16.mxu0 0
    %2519 = vmatpush1.bf16.msra.mxu0 %v521
    %2520 = vmatprep.subr.bf16.mxu0 0
    %2521 = vmatpush1.bf16.msra.mxu0 %v520
    %2522 = vmatprep.subr.bf16.mxu0 0
    %2523 = vmatpush1.bf16.msra.mxu0 %v519
    %2524 = vmatprep.subr.bf16.mxu0 0
    %2525 = vmatpush1.bf16.msra.mxu0 %v518
    %2526 = vmatprep.subr.bf16.mxu0 0
    %2527 = vmatpush1.bf16.msra.mxu0 %v517
    %2528 = vmatprep.subr.bf16.mxu0 0
    %2529 = vmatpush1.bf16.msra.mxu0 %v516
    %2530 = vmatprep.subr.bf16.mxu0 0
    %2531 = vmatpush2.bf16.msra.mxu0 %v531
    %2532 = vmatprep.subr.bf16.mxu0 0
    %2533 = vmatpush2.bf16.msra.mxu0 %v530
    %2534 = vmatprep.subr.bf16.mxu0 0
    %2535 = vmatpush2.bf16.msra.mxu0 %v529
    %2536 = vmatprep.subr.bf16.mxu0 0
    %2537 = vmatpush2.bf16.msra.mxu0 %v528
    %2538 = vmatprep.subr.bf16.mxu0 0
    %2539 = vmatpush2.bf16.msra.mxu0 %v527
    %2540 = vmatprep.subr.bf16.mxu0 0
    %2541 = vmatpush2.bf16.msra.mxu0 %v526
    %2542 = vmatprep.subr.bf16.mxu0 0
    %2543 = vmatpush2.bf16.msra.mxu0 %v525
    %2544 = vmatprep.subr.bf16.mxu0 0
    %2545 = vmatpush2.bf16.msra.mxu0 %v524
    %2546 = vmatprep.mubr.bf16.mxu0 %v2421
    %2547 = vmatmul.mubr.bf16.gmra.mxu0 %v2407
    %v2548 = vpop.f32.mrf.mxu0
    %v2549 = vadd.f32 %v2509, %v2548
    %v2550 = vpop.f32.mrf.mxu0
    %v2551 = vpop.f32.mrf.mxu0
    %v2552 = vpop.f32.mrf.mxu0
    %2553 = vdwg.mxu0
    %2554 = vmatprep.subr.bf16.mxu0 0
    %2555 = vmatpush1.bf16.msra.mxu0 %v539
    %2556 = vmatprep.subr.bf16.mxu0 0
    %2557 = vmatpush1.bf16.msra.mxu0 %v538
    %2558 = vmatprep.subr.bf16.mxu0 0
    %2559 = vmatpush1.bf16.msra.mxu0 %v537
    %2560 = vmatprep.subr.bf16.mxu0 0
    %2561 = vmatpush1.bf16.msra.mxu0 %v536
    %2562 = vmatprep.subr.bf16.mxu0 0
    %2563 = vmatpush1.bf16.msra.mxu0 %v535
    %2564 = vmatprep.subr.bf16.mxu0 0
    %2565 = vmatpush1.bf16.msra.mxu0 %v534
    %2566 = vmatprep.subr.bf16.mxu0 0
    %2567 = vmatpush1.bf16.msra.mxu0 %v533
    %2568 = vmatprep.subr.bf16.mxu0 0
    %2569 = vmatpush1.bf16.msra.mxu0 %v532
    %2570 = vmatprep.subr.bf16.mxu0 0
    %2571 = vmatpush2.bf16.msra.mxu0 %v547
    %2572 = vmatprep.subr.bf16.mxu0 0
    %2573 = vmatpush2.bf16.msra.mxu0 %v546
    %2574 = vmatprep.subr.bf16.mxu0 0
    %2575 = vmatpush2.bf16.msra.mxu0 %v545
    %2576 = vmatprep.subr.bf16.mxu0 0
    %2577 = vmatpush2.bf16.msra.mxu0 %v544
    %2578 = vmatprep.subr.bf16.mxu0 0
    %2579 = vmatpush2.bf16.msra.mxu0 %v543
    %2580 = vmatprep.subr.bf16.mxu0 0
    %2581 = vmatpush2.bf16.msra.mxu0 %v542
    %2582 = vmatprep.subr.bf16.mxu0 0
    %2583 = vmatpush2.bf16.msra.mxu0 %v541
    %2584 = vmatprep.subr.bf16.mxu0 0
    %2585 = vmatpush2.bf16.msra.mxu0 %v540
    %2586 = vmatprep.mubr.bf16.mxu0 %v2425
    %2587 = vmatmul.mubr.bf16.gmra.mxu0 %v2423
    %v2588 = vpop.f32.mrf.mxu0
    %v2589 = vadd.f32 %v2549, %v2588
    %v2590 = vpop.f32.mrf.mxu0
    %v2591 = vpop.f32.mrf.mxu0
    %v2592 = vpop.f32.mrf.mxu0
    %2593 = vdwg.mxu0
    %v2594 = vmax.f32 %v2589, 0.0
    %s2595 = scalar_lea.vmem %s3, 384
    %v2596 = vld [vmem:[%s2595] sm:$0xff]
    %v2597 = vld [vmem:[%s2595 + $0x8] sm:$0xff]
    %v2598 = vld [vmem:[%s2595 + $0x10] sm:$0xff]
    %v2599 = vld [vmem:[%s2595 + $0x18] sm:$0xff]
    %v2600 = vld [vmem:[%s2595 + $0x20] sm:$0xff]
    %v2601 = vld [vmem:[%s2595 + $0x28] sm:$0xff]
    %v2602 = vld [vmem:[%s2595 + $0x30] sm:$0xff]
    %v2603 = vld [vmem:[%s2595 + $0x38] sm:$0xff]
    %v2605 = vsel %vm1011, %v2594, 0
    %2607 = vmatprep.subr.mxu0 0.0
    %2608 = vmatpush1.msra.mxu0 0.0
    %2609 = vmatprep.subr.mxu0 0.0
    %2610 = vmatpush1.msra.mxu0 0.0
    %2611 = vmatprep.subr.mxu0 0.0
    %2612 = vmatpush1.msra.mxu0 0.0
    %2613 = vmatprep.subr.mxu0 0.0
    %2614 = vmatpush1.msra.mxu0 0.0
    %2615 = vmatprep.subr.mxu0 0.0
    %2616 = vmatpush1.msra.mxu0 0.0
    %2617 = vmatprep.subr.mxu0 0.0
    %2618 = vmatpush1.msra.mxu0 0.0
    %2619 = vmatprep.subr.mxu0 0.0
    %2620 = vmatpush1.msra.mxu0 0.0
    %2621 = vmatprep.subr.mxu0 0.0
    %2622 = vmatpush1.msra.mxu0 0.0
    %2623 = vmatprep.subr.mxu0 0.0
    %2624 = vmatpush1.msra.mxu0 %v2603
    %2625 = vmatprep.subr.mxu0 0.0
    %2626 = vmatpush1.msra.mxu0 %v2602
    %2627 = vmatprep.subr.mxu0 0.0
    %2628 = vmatpush1.msra.mxu0 %v2601
    %2629 = vmatprep.subr.mxu0 0.0
    %2630 = vmatpush1.msra.mxu0 %v2600
    %2631 = vmatprep.subr.mxu0 0.0
    %2632 = vmatpush1.msra.mxu0 %v2599
    %2633 = vmatprep.subr.mxu0 0.0
    %2634 = vmatpush1.msra.mxu0 %v2598
    %2635 = vmatprep.subr.mxu0 0.0
    %2636 = vmatpush1.msra.mxu0 %v2597
    %2637 = vmatprep.subr.mxu0 0.0
    %2638 = vmatpush1.msra.mxu0 %v2596
    %2639 = vmatprep.subr.mxu0 0.0
    %2640 = vmatpush2.msra.mxu0 0.0
    %2641 = vmatprep.subr.mxu0 0.0
    %2642 = vmatpush2.msra.mxu0 0.0
    %2643 = vmatprep.subr.mxu0 0.0
    %2644 = vmatpush2.msra.mxu0 0.0
    %2645 = vmatprep.subr.mxu0 0.0
    %2646 = vmatpush2.msra.mxu0 0.0
    %2647 = vmatprep.subr.mxu0 0.0
    %2648 = vmatpush2.msra.mxu0 0.0
    %2649 = vmatprep.subr.mxu0 0.0
    %2650 = vmatpush2.msra.mxu0 0.0
    %2651 = vmatprep.subr.mxu0 0.0
    %2652 = vmatpush2.msra.mxu0 0.0
    %2653 = vmatprep.subr.mxu0 0.0
    %2654 = vmatpush2.msra.mxu0 0.0
    %2655 = vmatprep.subr.mxu0 0.0
    %2656 = vmatpush2.msra.mxu0 0.0
    %2657 = vmatprep.subr.mxu0 0.0
    %2658 = vmatpush2.msra.mxu0 0.0
    %2659 = vmatprep.subr.mxu0 0.0
    %2660 = vmatpush2.msra.mxu0 0.0
    %2661 = vmatprep.subr.mxu0 0.0
    %2662 = vmatpush2.msra.mxu0 0.0
    %2663 = vmatprep.subr.mxu0 0.0
    %2664 = vmatpush2.msra.mxu0 0.0
    %2665 = vmatprep.subr.mxu0 0.0
    %2666 = vmatpush2.msra.mxu0 0.0
    %2667 = vmatprep.subr.mxu0 0.0
    %2668 = vmatpush2.msra.mxu0 0.0
    %2669 = vmatprep.subr.mxu0 0.0
    %2670 = vmatpush2.msra.mxu0 0.0
    %2671 = vmatprep.mubr.f32.mxu0 0.0
    %2672 = vmatmul.mubr.f32.gmra.mxu0 %v2605
    %v2673 = vpop.f32.mrf.mxu0
    %v2674 = vadd.f32 0.0, %v2673
    %v2675 = vpop.f32.mrf.mxu0
    %2676 = vdwg.mxu0
    %v2677 = vadd.f32 %v2373, %v2674
    %s2678 = scalar_lea.vmem %s0, 56
    %v2679 = vld [vmem:[%s2678] sm:$0xff]
    %v2681 = vcombine.high %v2679, %v2679
    %v2683 = vunpack.c.l.s4 1966171168
    %v2684 = vunpack.c.0.s8 %v2683
    %v2685 = vlaneseq
    %v2686 = vshrl.u32 %v2685, 7
    %v2687 = vsub.s32 %v2684, %v2686
    %v2688 = vrot.slane %v2679, %v2687
    %v2690 = vunpack.c.l.s4 1966171168
    %v2691 = vunpack.c.0.s8 %v2690
    %v2692 = vlaneseq
    %v2693 = vshrl.u32 %v2692, 7
    %v2694 = vsub.s32 %v2691, %v2693
    %v2695 = vrot.slane %v2681, %v2694
    %v2696 = vcombine.high %v2688, %v2688
    %v2697 = vcombine.high %v2695, %v2695
    %v2699 = vunpack.c.l.s4 1966171168
    %v2700 = vunpack.c.0.s8 %v2699
    %v2701 = vlaneseq
    %v2702 = vshrl.u32 %v2701, 7
    %v2703 = vsub.s32 %v2700, %v2702
    %v2704 = vrot.slane %v2688, %v2703
    %v2706 = vunpack.c.l.s4 1966171168
    %v2707 = vunpack.c.0.s8 %v2706
    %v2708 = vlaneseq
    %v2709 = vshrl.u32 %v2708, 7
    %v2710 = vsub.s32 %v2707, %v2709
    %v2711 = vrot.slane %v2695, %v2710
    %v2713 = vunpack.c.l.s4 1966171168
    %v2714 = vunpack.c.0.s8 %v2713
    %v2715 = vlaneseq
    %v2716 = vshrl.u32 %v2715, 7
    %v2717 = vsub.s32 %v2714, %v2716
    %v2718 = vrot.slane %v2696, %v2717
    %v2720 = vunpack.c.l.s4 1966171168
    %v2721 = vunpack.c.0.s8 %v2720
    %v2722 = vlaneseq
    %v2723 = vshrl.u32 %v2722, 7
    %v2724 = vsub.s32 %v2721, %v2723
    %v2725 = vrot.slane %v2697, %v2724
    %v2726 = vcombine.high %v2704, %v2704
    %v2727 = vcombine.high %v2711, %v2711
    %v2728 = vcombine.high %v2718, %v2718
    %v2729 = vcombine.high %v2725, %v2725
    %2738 = vmatprep.subr.bf16.mxu0 0
    %2739 = vmatpush1.bf16.msra.mxu0 %v491
    %2740 = vmatprep.subr.bf16.mxu0 0
    %2741 = vmatpush1.bf16.msra.mxu0 %v490
    %2742 = vmatprep.subr.bf16.mxu0 0
    %2743 = vmatpush1.bf16.msra.mxu0 %v489
    %2744 = vmatprep.subr.bf16.mxu0 0
    %2745 = vmatpush1.bf16.msra.mxu0 %v488
    %2746 = vmatprep.subr.bf16.mxu0 0
    %2747 = vmatpush1.bf16.msra.mxu0 %v487
    %2748 = vmatprep.subr.bf16.mxu0 0
    %2749 = vmatpush1.bf16.msra.mxu0 %v486
    %2750 = vmatprep.subr.bf16.mxu0 0
    %2751 = vmatpush1.bf16.msra.mxu0 %v485
    %2752 = vmatprep.subr.bf16.mxu0 0
    %2753 = vmatpush1.bf16.msra.mxu0 %v484
    %2754 = vmatprep.subr.bf16.mxu0 0
    %2755 = vmatpush2.bf16.msra.mxu0 %v499
    %2756 = vmatprep.subr.bf16.mxu0 0
    %2757 = vmatpush2.bf16.msra.mxu0 %v498
    %2758 = vmatprep.subr.bf16.mxu0 0
    %2759 = vmatpush2.bf16.msra.mxu0 %v497
    %2760 = vmatprep.subr.bf16.mxu0 0
    %2761 = vmatpush2.bf16.msra.mxu0 %v496
    %2762 = vmatprep.subr.bf16.mxu0 0
    %2763 = vmatpush2.bf16.msra.mxu0 %v495
    %2764 = vmatprep.subr.bf16.mxu0 0
    %2765 = vmatpush2.bf16.msra.mxu0 %v494
    %2766 = vmatprep.subr.bf16.mxu0 0
    %2767 = vmatpush2.bf16.msra.mxu0 %v493
    %2768 = vmatprep.subr.bf16.mxu0 0
    %2769 = vmatpush2.bf16.msra.mxu0 %v492
    %2770 = vmatprep.mubr.bf16.mxu0 %v2718
    %2771 = vmatmul.mubr.bf16.gmra.mxu0 %v2704
    %v2772 = vpop.f32.mrf.mxu0
    %v2773 = vadd.f32 %v168, %v2772
    %v2774 = vpop.f32.mrf.mxu0
    %v2775 = vpop.f32.mrf.mxu0
    %v2776 = vpop.f32.mrf.mxu0
    %2777 = vdwg.mxu0
    %2778 = vmatprep.subr.bf16.mxu0 0
    %2779 = vmatpush1.bf16.msra.mxu0 %v507
    %2780 = vmatprep.subr.bf16.mxu0 0
    %2781 = vmatpush1.bf16.msra.mxu0 %v506
    %2782 = vmatprep.subr.bf16.mxu0 0
    %2783 = vmatpush1.bf16.msra.mxu0 %v505
    %2784 = vmatprep.subr.bf16.mxu0 0
    %2785 = vmatpush1.bf16.msra.mxu0 %v504
    %2786 = vmatprep.subr.bf16.mxu0 0
    %2787 = vmatpush1.bf16.msra.mxu0 %v503
    %2788 = vmatprep.subr.bf16.mxu0 0
    %2789 = vmatpush1.bf16.msra.mxu0 %v502
    %2790 = vmatprep.subr.bf16.mxu0 0
    %2791 = vmatpush1.bf16.msra.mxu0 %v501
    %2792 = vmatprep.subr.bf16.mxu0 0
    %2793 = vmatpush1.bf16.msra.mxu0 %v500
    %2794 = vmatprep.subr.bf16.mxu0 0
    %2795 = vmatpush2.bf16.msra.mxu0 %v515
    %2796 = vmatprep.subr.bf16.mxu0 0
    %2797 = vmatpush2.bf16.msra.mxu0 %v514
    %2798 = vmatprep.subr.bf16.mxu0 0
    %2799 = vmatpush2.bf16.msra.mxu0 %v513
    %2800 = vmatprep.subr.bf16.mxu0 0
    %2801 = vmatpush2.bf16.msra.mxu0 %v512
    %2802 = vmatprep.subr.bf16.mxu0 0
    %2803 = vmatpush2.bf16.msra.mxu0 %v511
    %2804 = vmatprep.subr.bf16.mxu0 0
    %2805 = vmatpush2.bf16.msra.mxu0 %v510
    %2806 = vmatprep.subr.bf16.mxu0 0
    %2807 = vmatpush2.bf16.msra.mxu0 %v509
    %2808 = vmatprep.subr.bf16.mxu0 0
    %2809 = vmatpush2.bf16.msra.mxu0 %v508
    %2810 = vmatprep.mubr.bf16.mxu0 %v2728
    %2811 = vmatmul.mubr.bf16.gmra.mxu0 %v2726
    %v2812 = vpop.f32.mrf.mxu0
    %v2813 = vadd.f32 %v2773, %v2812
    %v2814 = vpop.f32.mrf.mxu0
    %v2815 = vpop.f32.mrf.mxu0
    %v2816 = vpop.f32.mrf.mxu0
    %2817 = vdwg.mxu0
    %2818 = vmatprep.subr.bf16.mxu0 0
    %2819 = vmatpush1.bf16.msra.mxu0 %v523
    %2820 = vmatprep.subr.bf16.mxu0 0
    %2821 = vmatpush1.bf16.msra.mxu0 %v522
    %2822 = vmatprep.subr.bf16.mxu0 0
    %2823 = vmatpush1.bf16.msra.mxu0 %v521
    %2824 = vmatprep.subr.bf16.mxu0 0
    %2825 = vmatpush1.bf16.msra.mxu0 %v520
    %2826 = vmatprep.subr.bf16.mxu0 0
    %2827 = vmatpush1.bf16.msra.mxu0 %v519
    %2828 = vmatprep.subr.bf16.mxu0 0
    %2829 = vmatpush1.bf16.msra.mxu0 %v518
    %2830 = vmatprep.subr.bf16.mxu0 0
    %2831 = vmatpush1.bf16.msra.mxu0 %v517
    %2832 = vmatprep.subr.bf16.mxu0 0
    %2833 = vmatpush1.bf16.msra.mxu0 %v516
    %2834 = vmatprep.subr.bf16.mxu0 0
    %2835 = vmatpush2.bf16.msra.mxu0 %v531
    %2836 = vmatprep.subr.bf16.mxu0 0
    %2837 = vmatpush2.bf16.msra.mxu0 %v530
    %2838 = vmatprep.subr.bf16.mxu0 0
    %2839 = vmatpush2.bf16.msra.mxu0 %v529
    %2840 = vmatprep.subr.bf16.mxu0 0
    %2841 = vmatpush2.bf16.msra.mxu0 %v528
    %2842 = vmatprep.subr.bf16.mxu0 0
    %2843 = vmatpush2.bf16.msra.mxu0 %v527
    %2844 = vmatprep.subr.bf16.mxu0 0
    %2845 = vmatpush2.bf16.msra.mxu0 %v526
    %2846 = vmatprep.subr.bf16.mxu0 0
    %2847 = vmatpush2.bf16.msra.mxu0 %v525
    %2848 = vmatprep.subr.bf16.mxu0 0
    %2849 = vmatpush2.bf16.msra.mxu0 %v524
    %2850 = vmatprep.mubr.bf16.mxu0 %v2725
    %2851 = vmatmul.mubr.bf16.gmra.mxu0 %v2711
    %v2852 = vpop.f32.mrf.mxu0
    %v2853 = vadd.f32 %v2813, %v2852
    %v2854 = vpop.f32.mrf.mxu0
    %v2855 = vpop.f32.mrf.mxu0
    %v2856 = vpop.f32.mrf.mxu0
    %2857 = vdwg.mxu0
    %2858 = vmatprep.subr.bf16.mxu0 0
    %2859 = vmatpush1.bf16.msra.mxu0 %v539
    %2860 = vmatprep.subr.bf16.mxu0 0
    %2861 = vmatpush1.bf16.msra.mxu0 %v538
    %2862 = vmatprep.subr.bf16.mxu0 0
    %2863 = vmatpush1.bf16.msra.mxu0 %v537
    %2864 = vmatprep.subr.bf16.mxu0 0
    %2865 = vmatpush1.bf16.msra.mxu0 %v536
    %2866 = vmatprep.subr.bf16.mxu0 0
    %2867 = vmatpush1.bf16.msra.mxu0 %v535
    %2868 = vmatprep.subr.bf16.mxu0 0
    %2869 = vmatpush1.bf16.msra.mxu0 %v534
    %2870 = vmatprep.subr.bf16.mxu0 0
    %2871 = vmatpush1.bf16.msra.mxu0 %v533
    %2872 = vmatprep.subr.bf16.mxu0 0
    %2873 = vmatpush1.bf16.msra.mxu0 %v532
    %2874 = vmatprep.subr.bf16.mxu0 0
    %2875 = vmatpush2.bf16.msra.mxu0 %v547
    %2876 = vmatprep.subr.bf16.mxu0 0
    %2877 = vmatpush2.bf16.msra.mxu0 %v546
    %2878 = vmatprep.subr.bf16.mxu0 0
    %2879 = vmatpush2.bf16.msra.mxu0 %v545
    %2880 = vmatprep.subr.bf16.mxu0 0
    %2881 = vmatpush2.bf16.msra.mxu0 %v544
    %2882 = vmatprep.subr.bf16.mxu0 0
    %2883 = vmatpush2.bf16.msra.mxu0 %v543
    %2884 = vmatprep.subr.bf16.mxu0 0
    %2885 = vmatpush2.bf16.msra.mxu0 %v542
    %2886 = vmatprep.subr.bf16.mxu0 0
    %2887 = vmatpush2.bf16.msra.mxu0 %v541
    %2888 = vmatprep.subr.bf16.mxu0 0
    %2889 = vmatpush2.bf16.msra.mxu0 %v540
    %2890 = vmatprep.mubr.bf16.mxu0 %v2729
    %2891 = vmatmul.mubr.bf16.gmra.mxu0 %v2727
    %v2892 = vpop.f32.mrf.mxu0
    %v2893 = vadd.f32 %v2853, %v2892
    %v2894 = vpop.f32.mrf.mxu0
    %v2895 = vpop.f32.mrf.mxu0
    %v2896 = vpop.f32.mrf.mxu0
    %2897 = vdwg.mxu0
    %v2898 = vmax.f32 %v2893, 0.0
    %s2899 = scalar_lea.vmem %s3, 448
    %v2900 = vld [vmem:[%s2899] sm:$0xff]
    %v2901 = vld [vmem:[%s2899 + $0x8] sm:$0xff]
    %v2902 = vld [vmem:[%s2899 + $0x10] sm:$0xff]
    %v2903 = vld [vmem:[%s2899 + $0x18] sm:$0xff]
    %v2904 = vld [vmem:[%s2899 + $0x20] sm:$0xff]
    %v2905 = vld [vmem:[%s2899 + $0x28] sm:$0xff]
    %v2906 = vld [vmem:[%s2899 + $0x30] sm:$0xff]
    %v2907 = vld [vmem:[%s2899 + $0x38] sm:$0xff]
    %v2909 = vsel %vm1011, %v2898, 0
    %2911 = vmatprep.subr.mxu0 0.0
    %2912 = vmatpush1.msra.mxu0 0.0
    %2913 = vmatprep.subr.mxu0 0.0
    %2914 = vmatpush1.msra.mxu0 0.0
    %2915 = vmatprep.subr.mxu0 0.0
    %2916 = vmatpush1.msra.mxu0 0.0
    %2917 = vmatprep.subr.mxu0 0.0
    %2918 = vmatpush1.msra.mxu0 0.0
    %2919 = vmatprep.subr.mxu0 0.0
    %2920 = vmatpush1.msra.mxu0 0.0
    %2921 = vmatprep.subr.mxu0 0.0
    %2922 = vmatpush1.msra.mxu0 0.0
    %2923 = vmatprep.subr.mxu0 0.0
    %2924 = vmatpush1.msra.mxu0 0.0
    %2925 = vmatprep.subr.mxu0 0.0
    %2926 = vmatpush1.msra.mxu0 0.0
    %2927 = vmatprep.subr.mxu0 0.0
    %2928 = vmatpush1.msra.mxu0 %v2907
    %2929 = vmatprep.subr.mxu0 0.0
    %2930 = vmatpush1.msra.mxu0 %v2906
    %2931 = vmatprep.subr.mxu0 0.0
    %2932 = vmatpush1.msra.mxu0 %v2905
    %2933 = vmatprep.subr.mxu0 0.0
    %2934 = vmatpush1.msra.mxu0 %v2904
    %2935 = vmatprep.subr.mxu0 0.0
    %2936 = vmatpush1.msra.mxu0 %v2903
    %2937 = vmatprep.subr.mxu0 0.0
    %2938 = vmatpush1.msra.mxu0 %v2902
    %2939 = vmatprep.subr.mxu0 0.0
    %2940 = vmatpush1.msra.mxu0 %v2901
    %2941 = vmatprep.subr.mxu0 0.0
    %2942 = vmatpush1.msra.mxu0 %v2900
    %2943 = vmatprep.subr.mxu0 0.0
    %2944 = vmatpush2.msra.mxu0 0.0
    %2945 = vmatprep.subr.mxu0 0.0
    %2946 = vmatpush2.msra.mxu0 0.0
    %2947 = vmatprep.subr.mxu0 0.0
    %2948 = vmatpush2.msra.mxu0 0.0
    %2949 = vmatprep.subr.mxu0 0.0
    %2950 = vmatpush2.msra.mxu0 0.0
    %2951 = vmatprep.subr.mxu0 0.0
    %2952 = vmatpush2.msra.mxu0 0.0
    %2953 = vmatprep.subr.mxu0 0.0
    %2954 = vmatpush2.msra.mxu0 0.0
    %2955 = vmatprep.subr.mxu0 0.0
    %2956 = vmatpush2.msra.mxu0 0.0
    %2957 = vmatprep.subr.mxu0 0.0
    %2958 = vmatpush2.msra.mxu0 0.0
    %2959 = vmatprep.subr.mxu0 0.0
    %2960 = vmatpush2.msra.mxu0 0.0
    %2961 = vmatprep.subr.mxu0 0.0
    %2962 = vmatpush2.msra.mxu0 0.0
    %2963 = vmatprep.subr.mxu0 0.0
    %2964 = vmatpush2.msra.mxu0 0.0
    %2965 = vmatprep.subr.mxu0 0.0
    %2966 = vmatpush2.msra.mxu0 0.0
    %2967 = vmatprep.subr.mxu0 0.0
    %2968 = vmatpush2.msra.mxu0 0.0
    %2969 = vmatprep.subr.mxu0 0.0
    %2970 = vmatpush2.msra.mxu0 0.0
    %2971 = vmatprep.subr.mxu0 0.0
    %2972 = vmatpush2.msra.mxu0 0.0
    %2973 = vmatprep.subr.mxu0 0.0
    %2974 = vmatpush2.msra.mxu0 0.0
    %2975 = vmatprep.mubr.f32.mxu0 0.0
    %2976 = vmatmul.mubr.f32.gmra.mxu0 %v2909
    %v2977 = vpop.f32.mrf.mxu0
    %v2978 = vadd.f32 0.0, %v2977
    %v2979 = vpop.f32.mrf.mxu0
    %2980 = vdwg.mxu0
    %v2981 = vadd.f32 %v2677, %v2978
    %s2982 = scalar_lea.vmem %s0, 64
    %v2983 = vld [vmem:[%s2982] sm:$0xff]
    %v2985 = vcombine.high %v2983, %v2983
    %v2987 = vunpack.c.l.s4 1966171168
    %v2988 = vunpack.c.0.s8 %v2987
    %v2989 = vlaneseq
    %v2990 = vshrl.u32 %v2989, 7
    %v2991 = vsub.s32 %v2988, %v2990
    %v2992 = vrot.slane %v2983, %v2991
    %v2994 = vunpack.c.l.s4 1966171168
    %v2995 = vunpack.c.0.s8 %v2994
    %v2996 = vlaneseq
    %v2997 = vshrl.u32 %v2996, 7
    %v2998 = vsub.s32 %v2995, %v2997
    %v2999 = vrot.slane %v2985, %v2998
    %v3000 = vcombine.high %v2992, %v2992
    %v3001 = vcombine.high %v2999, %v2999
    %v3003 = vunpack.c.l.s4 1966171168
    %v3004 = vunpack.c.0.s8 %v3003
    %v3005 = vlaneseq
    %v3006 = vshrl.u32 %v3005, 7
    %v3007 = vsub.s32 %v3004, %v3006
    %v3008 = vrot.slane %v2992, %v3007
    %v3010 = vunpack.c.l.s4 1966171168
    %v3011 = vunpack.c.0.s8 %v3010
    %v3012 = vlaneseq
    %v3013 = vshrl.u32 %v3012, 7
    %v3014 = vsub.s32 %v3011, %v3013
    %v3015 = vrot.slane %v2999, %v3014
    %v3017 = vunpack.c.l.s4 1966171168
    %v3018 = vunpack.c.0.s8 %v3017
    %v3019 = vlaneseq
    %v3020 = vshrl.u32 %v3019, 7
    %v3021 = vsub.s32 %v3018, %v3020
    %v3022 = vrot.slane %v3000, %v3021
    %v3024 = vunpack.c.l.s4 1966171168
    %v3025 = vunpack.c.0.s8 %v3024
    %v3026 = vlaneseq
    %v3027 = vshrl.u32 %v3026, 7
    %v3028 = vsub.s32 %v3025, %v3027
    %v3029 = vrot.slane %v3001, %v3028
    %v3030 = vcombine.high %v3008, %v3008
    %v3031 = vcombine.high %v3015, %v3015
    %v3032 = vcombine.high %v3022, %v3022
    %v3033 = vcombine.high %v3029, %v3029
    %3042 = vmatprep.subr.bf16.mxu0 0
    %3043 = vmatpush1.bf16.msra.mxu0 %v491
    %3044 = vmatprep.subr.bf16.mxu0 0
    %3045 = vmatpush1.bf16.msra.mxu0 %v490
    %3046 = vmatprep.subr.bf16.mxu0 0
    %3047 = vmatpush1.bf16.msra.mxu0 %v489
    %3048 = vmatprep.subr.bf16.mxu0 0
    %3049 = vmatpush1.bf16.msra.mxu0 %v488
    %3050 = vmatprep.subr.bf16.mxu0 0
    %3051 = vmatpush1.bf16.msra.mxu0 %v487
    %3052 = vmatprep.subr.bf16.mxu0 0
    %3053 = vmatpush1.bf16.msra.mxu0 %v486
    %3054 = vmatprep.subr.bf16.mxu0 0
    %3055 = vmatpush1.bf16.msra.mxu0 %v485
    %3056 = vmatprep.subr.bf16.mxu0 0
    %3057 = vmatpush1.bf16.msra.mxu0 %v484
    %3058 = vmatprep.subr.bf16.mxu0 0
    %3059 = vmatpush2.bf16.msra.mxu0 %v499
    %3060 = vmatprep.subr.bf16.mxu0 0
    %3061 = vmatpush2.bf16.msra.mxu0 %v498
    %3062 = vmatprep.subr.bf16.mxu0 0
    %3063 = vmatpush2.bf16.msra.mxu0 %v497
    %3064 = vmatprep.subr.bf16.mxu0 0
    %3065 = vmatpush2.bf16.msra.mxu0 %v496
    %3066 = vmatprep.subr.bf16.mxu0 0
    %3067 = vmatpush2.bf16.msra.mxu0 %v495
    %3068 = vmatprep.subr.bf16.mxu0 0
    %3069 = vmatpush2.bf16.msra.mxu0 %v494
    %3070 = vmatprep.subr.bf16.mxu0 0
    %3071 = vmatpush2.bf16.msra.mxu0 %v493
    %3072 = vmatprep.subr.bf16.mxu0 0
    %3073 = vmatpush2.bf16.msra.mxu0 %v492
    %3074 = vmatprep.mubr.bf16.mxu0 %v3022
    %3075 = vmatmul.mubr.bf16.gmra.mxu0 %v3008
    %v3076 = vpop.f32.mrf.mxu0
    %v3077 = vadd.f32 %v168, %v3076
    %v3078 = vpop.f32.mrf.mxu0
    %v3079 = vpop.f32.mrf.mxu0
    %v3080 = vpop.f32.mrf.mxu0
    %3081 = vdwg.mxu0
    %3082 = vmatprep.subr.bf16.mxu0 0
    %3083 = vmatpush1.bf16.msra.mxu0 %v507
    %3084 = vmatprep.subr.bf16.mxu0 0
    %3085 = vmatpush1.bf16.msra.mxu0 %v506
    %3086 = vmatprep.subr.bf16.mxu0 0
    %3087 = vmatpush1.bf16.msra.mxu0 %v505
    %3088 = vmatprep.subr.bf16.mxu0 0
    %3089 = vmatpush1.bf16.msra.mxu0 %v504
    %3090 = vmatprep.subr.bf16.mxu0 0
    %3091 = vmatpush1.bf16.msra.mxu0 %v503
    %3092 = vmatprep.subr.bf16.mxu0 0
    %3093 = vmatpush1.bf16.msra.mxu0 %v502
    %3094 = vmatprep.subr.bf16.mxu0 0
    %3095 = vmatpush1.bf16.msra.mxu0 %v501
    %3096 = vmatprep.subr.bf16.mxu0 0
    %3097 = vmatpush1.bf16.msra.mxu0 %v500
    %3098 = vmatprep.subr.bf16.mxu0 0
    %3099 = vmatpush2.bf16.msra.mxu0 %v515
    %3100 = vmatprep.subr.bf16.mxu0 0
    %3101 = vmatpush2.bf16.msra.mxu0 %v514
    %3102 = vmatprep.subr.bf16.mxu0 0
    %3103 = vmatpush2.bf16.msra.mxu0 %v513
    %3104 = vmatprep.subr.bf16.mxu0 0
    %3105 = vmatpush2.bf16.msra.mxu0 %v512
    %3106 = vmatprep.subr.bf16.mxu0 0
    %3107 = vmatpush2.bf16.msra.mxu0 %v511
    %3108 = vmatprep.subr.bf16.mxu0 0
    %3109 = vmatpush2.bf16.msra.mxu0 %v510
    %3110 = vmatprep.subr.bf16.mxu0 0
    %3111 = vmatpush2.bf16.msra.mxu0 %v509
    %3112 = vmatprep.subr.bf16.mxu0 0
    %3113 = vmatpush2.bf16.msra.mxu0 %v508
    %3114 = vmatprep.mubr.bf16.mxu0 %v3032
    %3115 = vmatmul.mubr.bf16.gmra.mxu0 %v3030
    %v3116 = vpop.f32.mrf.mxu0
    %v3117 = vadd.f32 %v3077, %v3116
    %v3118 = vpop.f32.mrf.mxu0
    %v3119 = vpop.f32.mrf.mxu0
    %v3120 = vpop.f32.mrf.mxu0
    %3121 = vdwg.mxu0
    %3122 = vmatprep.subr.bf16.mxu0 0
    %3123 = vmatpush1.bf16.msra.mxu0 %v523
    %3124 = vmatprep.subr.bf16.mxu0 0
    %3125 = vmatpush1.bf16.msra.mxu0 %v522
    %3126 = vmatprep.subr.bf16.mxu0 0
    %3127 = vmatpush1.bf16.msra.mxu0 %v521
    %3128 = vmatprep.subr.bf16.mxu0 0
    %3129 = vmatpush1.bf16.msra.mxu0 %v520
    %3130 = vmatprep.subr.bf16.mxu0 0
    %3131 = vmatpush1.bf16.msra.mxu0 %v519
    %3132 = vmatprep.subr.bf16.mxu0 0
    %3133 = vmatpush1.bf16.msra.mxu0 %v518
    %3134 = vmatprep.subr.bf16.mxu0 0
    %3135 = vmatpush1.bf16.msra.mxu0 %v517
    %3136 = vmatprep.subr.bf16.mxu0 0
    %3137 = vmatpush1.bf16.msra.mxu0 %v516
    %3138 = vmatprep.subr.bf16.mxu0 0
    %3139 = vmatpush2.bf16.msra.mxu0 %v531
    %3140 = vmatprep.subr.bf16.mxu0 0
    %3141 = vmatpush2.bf16.msra.mxu0 %v530
    %3142 = vmatprep.subr.bf16.mxu0 0
    %3143 = vmatpush2.bf16.msra.mxu0 %v529
    %3144 = vmatprep.subr.bf16.mxu0 0
    %3145 = vmatpush2.bf16.msra.mxu0 %v528
    %3146 = vmatprep.subr.bf16.mxu0 0
    %3147 = vmatpush2.bf16.msra.mxu0 %v527
    %3148 = vmatprep.subr.bf16.mxu0 0
    %3149 = vmatpush2.bf16.msra.mxu0 %v526
    %3150 = vmatprep.subr.bf16.mxu0 0
    %3151 = vmatpush2.bf16.msra.mxu0 %v525
    %3152 = vmatprep.subr.bf16.mxu0 0
    %3153 = vmatpush2.bf16.msra.mxu0 %v524
    %3154 = vmatprep.mubr.bf16.mxu0 %v3029
    %3155 = vmatmul.mubr.bf16.gmra.mxu0 %v3015
    %v3156 = vpop.f32.mrf.mxu0
    %v3157 = vadd.f32 %v3117, %v3156
    %v3158 = vpop.f32.mrf.mxu0
    %v3159 = vpop.f32.mrf.mxu0
    %v3160 = vpop.f32.mrf.mxu0
    %3161 = vdwg.mxu0
    %3162 = vmatprep.subr.bf16.mxu0 0
    %3163 = vmatpush1.bf16.msra.mxu0 %v539
    %3164 = vmatprep.subr.bf16.mxu0 0
    %3165 = vmatpush1.bf16.msra.mxu0 %v538
    %3166 = vmatprep.subr.bf16.mxu0 0
    %3167 = vmatpush1.bf16.msra.mxu0 %v537
    %3168 = vmatprep.subr.bf16.mxu0 0
    %3169 = vmatpush1.bf16.msra.mxu0 %v536
    %3170 = vmatprep.subr.bf16.mxu0 0
    %3171 = vmatpush1.bf16.msra.mxu0 %v535
    %3172 = vmatprep.subr.bf16.mxu0 0
    %3173 = vmatpush1.bf16.msra.mxu0 %v534
    %3174 = vmatprep.subr.bf16.mxu0 0
    %3175 = vmatpush1.bf16.msra.mxu0 %v533
    %3176 = vmatprep.subr.bf16.mxu0 0
    %3177 = vmatpush1.bf16.msra.mxu0 %v532
    %3178 = vmatprep.subr.bf16.mxu0 0
    %3179 = vmatpush2.bf16.msra.mxu0 %v547
    %3180 = vmatprep.subr.bf16.mxu0 0
    %3181 = vmatpush2.bf16.msra.mxu0 %v546
    %3182 = vmatprep.subr.bf16.mxu0 0
    %3183 = vmatpush2.bf16.msra.mxu0 %v545
    %3184 = vmatprep.subr.bf16.mxu0 0
    %3185 = vmatpush2.bf16.msra.mxu0 %v544
    %3186 = vmatprep.subr.bf16.mxu0 0
    %3187 = vmatpush2.bf16.msra.mxu0 %v543
    %3188 = vmatprep.subr.bf16.mxu0 0
    %3189 = vmatpush2.bf16.msra.mxu0 %v542
    %3190 = vmatprep.subr.bf16.mxu0 0
    %3191 = vmatpush2.bf16.msra.mxu0 %v541
    %3192 = vmatprep.subr.bf16.mxu0 0
    %3193 = vmatpush2.bf16.msra.mxu0 %v540
    %3194 = vmatprep.mubr.bf16.mxu0 %v3033
    %3195 = vmatmul.mubr.bf16.gmra.mxu0 %v3031
    %v3196 = vpop.f32.mrf.mxu0
    %v3197 = vadd.f32 %v3157, %v3196
    %v3198 = vpop.f32.mrf.mxu0
    %v3199 = vpop.f32.mrf.mxu0
    %v3200 = vpop.f32.mrf.mxu0
    %3201 = vdwg.mxu0
    %v3202 = vmax.f32 %v3197, 0.0
    %s3203 = scalar_lea.vmem %s3, 512
    %v3204 = vld [vmem:[%s3203] sm:$0xff]
    %v3205 = vld [vmem:[%s3203 + $0x8] sm:$0xff]
    %v3206 = vld [vmem:[%s3203 + $0x10] sm:$0xff]
    %v3207 = vld [vmem:[%s3203 + $0x18] sm:$0xff]
    %v3208 = vld [vmem:[%s3203 + $0x20] sm:$0xff]
    %v3209 = vld [vmem:[%s3203 + $0x28] sm:$0xff]
    %v3210 = vld [vmem:[%s3203 + $0x30] sm:$0xff]
    %v3211 = vld [vmem:[%s3203 + $0x38] sm:$0xff]
    %v3213 = vsel %vm1011, %v3202, 0
    %3215 = vmatprep.subr.mxu0 0.0
    %3216 = vmatpush1.msra.mxu0 0.0
    %3217 = vmatprep.subr.mxu0 0.0
    %3218 = vmatpush1.msra.mxu0 0.0
    %3219 = vmatprep.subr.mxu0 0.0
    %3220 = vmatpush1.msra.mxu0 0.0
    %3221 = vmatprep.subr.mxu0 0.0
    %3222 = vmatpush1.msra.mxu0 0.0
    %3223 = vmatprep.subr.mxu0 0.0
    %3224 = vmatpush1.msra.mxu0 0.0
    %3225 = vmatprep.subr.mxu0 0.0
    %3226 = vmatpush1.msra.mxu0 0.0
    %3227 = vmatprep.subr.mxu0 0.0
    %3228 = vmatpush1.msra.mxu0 0.0
    %3229 = vmatprep.subr.mxu0 0.0
    %3230 = vmatpush1.msra.mxu0 0.0
    %3231 = vmatprep.subr.mxu0 0.0
    %3232 = vmatpush1.msra.mxu0 %v3211
    %3233 = vmatprep.subr.mxu0 0.0
    %3234 = vmatpush1.msra.mxu0 %v3210
    %3235 = vmatprep.subr.mxu0 0.0
    %3236 = vmatpush1.msra.mxu0 %v3209
    %3237 = vmatprep.subr.mxu0 0.0
    %3238 = vmatpush1.msra.mxu0 %v3208
    %3239 = vmatprep.subr.mxu0 0.0
    %3240 = vmatpush1.msra.mxu0 %v3207
    %3241 = vmatprep.subr.mxu0 0.0
    %3242 = vmatpush1.msra.mxu0 %v3206
    %3243 = vmatprep.subr.mxu0 0.0
    %3244 = vmatpush1.msra.mxu0 %v3205
    %3245 = vmatprep.subr.mxu0 0.0
    %3246 = vmatpush1.msra.mxu0 %v3204
    %3247 = vmatprep.subr.mxu0 0.0
    %3248 = vmatpush2.msra.mxu0 0.0
    %3249 = vmatprep.subr.mxu0 0.0
    %3250 = vmatpush2.msra.mxu0 0.0
    %3251 = vmatprep.subr.mxu0 0.0
    %3252 = vmatpush2.msra.mxu0 0.0
    %3253 = vmatprep.subr.mxu0 0.0
    %3254 = vmatpush2.msra.mxu0 0.0
    %3255 = vmatprep.subr.mxu0 0.0
    %3256 = vmatpush2.msra.mxu0 0.0
    %3257 = vmatprep.subr.mxu0 0.0
    %3258 = vmatpush2.msra.mxu0 0.0
    %3259 = vmatprep.subr.mxu0 0.0
    %3260 = vmatpush2.msra.mxu0 0.0
    %3261 = vmatprep.subr.mxu0 0.0
    %3262 = vmatpush2.msra.mxu0 0.0
    %3263 = vmatprep.subr.mxu0 0.0
    %3264 = vmatpush2.msra.mxu0 0.0
    %3265 = vmatprep.subr.mxu0 0.0
    %3266 = vmatpush2.msra.mxu0 0.0
    %3267 = vmatprep.subr.mxu0 0.0
    %3268 = vmatpush2.msra.mxu0 0.0
    %3269 = vmatprep.subr.mxu0 0.0
    %3270 = vmatpush2.msra.mxu0 0.0
    %3271 = vmatprep.subr.mxu0 0.0
    %3272 = vmatpush2.msra.mxu0 0.0
    %3273 = vmatprep.subr.mxu0 0.0
    %3274 = vmatpush2.msra.mxu0 0.0
    %3275 = vmatprep.subr.mxu0 0.0
    %3276 = vmatpush2.msra.mxu0 0.0
    %3277 = vmatprep.subr.mxu0 0.0
    %3278 = vmatpush2.msra.mxu0 0.0
    %3279 = vmatprep.mubr.f32.mxu0 0.0
    %3280 = vmatmul.mubr.f32.gmra.mxu0 %v3213
    %v3281 = vpop.f32.mrf.mxu0
    %v3282 = vadd.f32 0.0, %v3281
    %v3283 = vpop.f32.mrf.mxu0
    %3284 = vdwg.mxu0
    %v3285 = vadd.f32 %v2981, %v3282
    %v3286 = vld [vmem:[%s4] sm:$0x1]
    %v3288 = vlaneseq
    %v3289 = vshrl.u32 %v3288, 7
    %v3290 = vsub.s32 0, %v3289
    %v3291 = vrot.slane %v3286, %v3290
    %v3293 = vadd.f32 %v3285, %v3291
    %v3294 = vmax.f32 %v3293, 0.0
    %v3295 = vld [vmem:[%s5] sm:$0xff]
    %v3296 = vld [vmem:[%s5 + $0x8] sm:$0xff]
    %v3297 = vld [vmem:[%s5 + $0x10] sm:$0xff]
    %v3298 = vld [vmem:[%s5 + $0x18] sm:$0xff]
    %v3299 = vld [vmem:[%s5 + $0x20] sm:$0xff]
    %v3300 = vld [vmem:[%s5 + $0x28] sm:$0xff]
    %v3301 = vld [vmem:[%s5 + $0x30] sm:$0xff]
    %v3302 = vld [vmem:[%s5 + $0x38] sm:$0xff]
    %v3303 = vld [vmem:[%s6] sm:$0x1]
    %v3305 = vlaneseq
    %v3306 = vshrl.u32 %v3305, 7
    %v3307 = vsub.s32 0, %v3306
    %v3308 = vrot.slane %v3303, %v3307
    %v3311 = vsel %vm1011, %v3294, 0
    %3313 = vmatprep.subr.mxu0 0.0
    %3314 = vmatpush1.msra.mxu0 0.0
    %3315 = vmatprep.subr.mxu0 0.0
    %3316 = vmatpush1.msra.mxu0 0.0
    %3317 = vmatprep.subr.mxu0 0.0
    %3318 = vmatpush1.msra.mxu0 0.0
    %3319 = vmatprep.subr.mxu0 0.0
    %3320 = vmatpush1.msra.mxu0 0.0
    %3321 = vmatprep.subr.mxu0 0.0
    %3322 = vmatpush1.msra.mxu0 0.0
    %3323 = vmatprep.subr.mxu0 0.0
    %3324 = vmatpush1.msra.mxu0 0.0
    %3325 = vmatprep.subr.mxu0 0.0
    %3326 = vmatpush1.msra.mxu0 0.0
    %3327 = vmatprep.subr.mxu0 0.0
    %3328 = vmatpush1.msra.mxu0 0.0
    %3329 = vmatprep.subr.mxu0 0.0
    %3330 = vmatpush1.msra.mxu0 %v3302
    %3331 = vmatprep.subr.mxu0 0.0
    %3332 = vmatpush1.msra.mxu0 %v3301
    %3333 = vmatprep.subr.mxu0 0.0
    %3334 = vmatpush1.msra.mxu0 %v3300
    %3335 = vmatprep.subr.mxu0 0.0
    %3336 = vmatpush1.msra.mxu0 %v3299
    %3337 = vmatprep.subr.mxu0 0.0
    %3338 = vmatpush1.msra.mxu0 %v3298
    %3339 = vmatprep.subr.mxu0 0.0
    %3340 = vmatpush1.msra.mxu0 %v3297
    %3341 = vmatprep.subr.mxu0 0.0
    %3342 = vmatpush1.msra.mxu0 %v3296
    %3343 = vmatprep.subr.mxu0 0.0
    %3344 = vmatpush1.msra.mxu0 %v3295
    %3345 = vmatprep.subr.mxu0 0.0
    %3346 = vmatpush2.msra.mxu0 0.0
    %3347 = vmatprep.subr.mxu0 0.0
    %3348 = vmatpush2.msra.mxu0 0.0
    %3349 = vmatprep.subr.mxu0 0.0
    %3350 = vmatpush2.msra.mxu0 0.0
    %3351 = vmatprep.subr.mxu0 0.0
    %3352 = vmatpush2.msra.mxu0 0.0
    %3353 = vmatprep.subr.mxu0 0.0
    %3354 = vmatpush2.msra.mxu0 0.0
    %3355 = vmatprep.subr.mxu0 0.0
    %3356 = vmatpush2.msra.mxu0 0.0
    %3357 = vmatprep.subr.mxu0 0.0
    %3358 = vmatpush2.msra.mxu0 0.0
    %3359 = vmatprep.subr.mxu0 0.0
    %3360 = vmatpush2.msra.mxu0 0.0
    %3361 = vmatprep.subr.mxu0 0.0
    %3362 = vmatpush2.msra.mxu0 0.0
    %3363 = vmatprep.subr.mxu0 0.0
    %3364 = vmatpush2.msra.mxu0 0.0
    %3365 = vmatprep.subr.mxu0 0.0
    %3366 = vmatpush2.msra.mxu0 0.0
    %3367 = vmatprep.subr.mxu0 0.0
    %3368 = vmatpush2.msra.mxu0 0.0
    %3369 = vmatprep.subr.mxu0 0.0
    %3370 = vmatpush2.msra.mxu0 0.0
    %3371 = vmatprep.subr.mxu0 0.0
    %3372 = vmatpush2.msra.mxu0 0.0
    %3373 = vmatprep.subr.mxu0 0.0
    %3374 = vmatpush2.msra.mxu0 0.0
    %3375 = vmatprep.subr.mxu0 0.0
    %3376 = vmatpush2.msra.mxu0 0.0
    %3377 = vmatprep.mubr.f32.mxu0 0.0
    %3378 = vmatmul.mubr.f32.gmra.mxu0 %v3311
    %v3379 = vpop.f32.mrf.mxu0
    %v3380 = vadd.f32 %v3308, %v3379
    %v3381 = vpop.f32.mrf.mxu0
    %3382 = vdwg.mxu0
    %v3383 = vmax.f32 %v3380, 0.0
    %v3384 = vld [vmem:[%s7] sm:$0xff]
    %v3385 = vld [vmem:[%s7 + $0x8] sm:$0xff]
    %v3386 = vld [vmem:[%s7 + $0x10] sm:$0xff]
    %v3387 = vld [vmem:[%s7 + $0x18] sm:$0xff]
    %v3388 = vld [vmem:[%s7 + $0x20] sm:$0xff]
    %v3389 = vld [vmem:[%s7 + $0x28] sm:$0xff]
    %v3390 = vld [vmem:[%s7 + $0x30] sm:$0xff]
    %v3391 = vld [vmem:[%s7 + $0x38] sm:$0xff]
    %v3392 = vld [vmem:[%s8] sm:$0x1]
    %v3394 = vlaneseq
    %v3395 = vshrl.u32 %v3394, 7
    %v3396 = vsub.s32 0, %v3395
    %v3397 = vrot.slane %v3392, %v3396
    %v3400 = vsel %vm1011, %v3383, 0
    %3402 = vmatprep.subr.mxu0 0.0
    %3403 = vmatpush1.msra.mxu0 0.0
    %3404 = vmatprep.subr.mxu0 0.0
    %3405 = vmatpush1.msra.mxu0 0.0
    %3406 = vmatprep.subr.mxu0 0.0
    %3407 = vmatpush1.msra.mxu0 0.0
    %3408 = vmatprep.subr.mxu0 0.0
    %3409 = vmatpush1.msra.mxu0 0.0
    %3410 = vmatprep.subr.mxu0 0.0
    %3411 = vmatpush1.msra.mxu0 0.0
    %3412 = vmatprep.subr.mxu0 0.0
    %3413 = vmatpush1.msra.mxu0 0.0
    %3414 = vmatprep.subr.mxu0 0.0
    %3415 = vmatpush1.msra.mxu0 0.0
    %3416 = vmatprep.subr.mxu0 0.0
    %3417 = vmatpush1.msra.mxu0 0.0
    %3418 = vmatprep.subr.mxu0 0.0
    %3419 = vmatpush1.msra.mxu0 %v3391
    %3420 = vmatprep.subr.mxu0 0.0
    %3421 = vmatpush1.msra.mxu0 %v3390
    %3422 = vmatprep.subr.mxu0 0.0
    %3423 = vmatpush1.msra.mxu0 %v3389
    %3424 = vmatprep.subr.mxu0 0.0
    %3425 = vmatpush1.msra.mxu0 %v3388
    %3426 = vmatprep.subr.mxu0 0.0
    %3427 = vmatpush1.msra.mxu0 %v3387
    %3428 = vmatprep.subr.mxu0 0.0
    %3429 = vmatpush1.msra.mxu0 %v3386
    %3430 = vmatprep.subr.mxu0 0.0
    %3431 = vmatpush1.msra.mxu0 %v3385
    %3432 = vmatprep.subr.mxu0 0.0
    %3433 = vmatpush1.msra.mxu0 %v3384
    %3434 = vmatprep.subr.mxu0 0.0
    %3435 = vmatpush2.msra.mxu0 0.0
    %3436 = vmatprep.subr.mxu0 0.0
    %3437 = vmatpush2.msra.mxu0 0.0
    %3438 = vmatprep.subr.mxu0 0.0
    %3439 = vmatpush2.msra.mxu0 0.0
    %3440 = vmatprep.subr.mxu0 0.0
    %3441 = vmatpush2.msra.mxu0 0.0
    %3442 = vmatprep.subr.mxu0 0.0
    %3443 = vmatpush2.msra.mxu0 0.0
    %3444 = vmatprep.subr.mxu0 0.0
    %3445 = vmatpush2.msra.mxu0 0.0
    %3446 = vmatprep.subr.mxu0 0.0
    %3447 = vmatpush2.msra.mxu0 0.0
    %3448 = vmatprep.subr.mxu0 0.0
    %3449 = vmatpush2.msra.mxu0 0.0
    %3450 = vmatprep.subr.mxu0 0.0
    %3451 = vmatpush2.msra.mxu0 0.0
    %3452 = vmatprep.subr.mxu0 0.0
    %3453 = vmatpush2.msra.mxu0 0.0
    %3454 = vmatprep.subr.mxu0 0.0
    %3455 = vmatpush2.msra.mxu0 0.0
    %3456 = vmatprep.subr.mxu0 0.0
    %3457 = vmatpush2.msra.mxu0 0.0
    %3458 = vmatprep.subr.mxu0 0.0
    %3459 = vmatpush2.msra.mxu0 0.0
    %3460 = vmatprep.subr.mxu0 0.0
    %3461 = vmatpush2.msra.mxu0 0.0
    %3462 = vmatprep.subr.mxu0 0.0
    %3463 = vmatpush2.msra.mxu0 0.0
    %3464 = vmatprep.subr.mxu0 0.0
    %3465 = vmatpush2.msra.mxu0 0.0
    %3466 = vmatprep.mubr.f32.mxu0 0.0
    %3467 = vmatmul.mubr.f32.gmra.mxu0 %v3400
    %v3468 = vpop.f32.mrf.mxu0
    %v3469 = vadd.f32 %v3397, %v3468
    %v3470 = vpop.f32.mrf.mxu0
    %3471 = vdwg.mxu0
    %3472 = vst [vmem:[#allocation2] sm:$0x3] %v3469
    // Predicated region
    $region38: #{_lambda_.3} parent=1 // pred_check
      _
    $region39: #{_lambda_.3} parent=1 // pred_check_branch
      %3474 = sbr.rel (0) target = $region41
    $region40: #{_lambda_.3} parent=1 // pred_region
      %s3476 = ssub.s32 32, 32
      %3477 = vsyncadd [#allocation3], %s3476
      %s3479 = sshll.u32 [#allocation2], 4
      %s3480 = int_to_ptr.vmem [resolvable:$true] %s3479
      %3482 = dma.vmem_to_hbm [thread:$0]  %s3480, 32, %s9, [#allocation3]
    $region41: #{_lambda_.3} parent=1 // pred_fallthru
      _
    // Predicated region
    $region42: #{_lambda_.3} parent=1 // pred_check
      _
    $region43: #{_lambda_.3} parent=1 // pred_check_branch
      %3484 = sbr.rel (0) target = $region45
    $region44: #{_lambda_.3} parent=1 // pred_region
      %3485 = dma.done [#allocation3], 32
    $region45: #{_lambda_.3} parent=1 // pred_fallthru
      _
    %3486 = vsyncpa [#allocation3], 1

</llo_original>
